<compile_context>
chip_gen: v7x
topology: tpu7x:2x2x1
jax: 0.10.0
libtpu: 0.0.40
codegen_flags: <defaults>
</compile_context>

<pallas_src>
import jax
import jax.numpy as jnp
from jax.experimental import pallas as pl
from jax.experimental.pallas import tpu as pltpu

# ----------------------------- small config ---------------------------------
B = 2            # batch
S = 16           # padded sequence length
BS = B * S       # all batches folded into the matmul M dimension (32 rows)
D = 256          # hidden size
H = 2            # attention heads
HD = D // H      # head dim = 128 (same as the real GTE-Qwen2-7B head_dim)
F_FFN = 512      # MLP intermediate size
V = 128          # vocab size
L = 2            # number of decoder layers
EPS = 1e-6       # RMSNorm eps
NEG_INF = -1e9


# --------------------------- in-kernel helpers -------------------------------
def _rmsnorm(x, w):
    # x: (BS, D) f32, w: (1, D) f32
    var = jnp.mean(x * x, axis=-1, keepdims=True)
    return x * jax.lax.rsqrt(var + EPS) * w


# --------------------- fully-fused forward kernel (grid = (L,)) --------------
def gte_fused_kernel(lens_ref,                       # scalar prefetch (SMEM), (B,)
                     x_ref, cos_ref, sin_ref, lnf_ref,
                     ln1_ref, wqkv_ref, bqkv_ref, wo_ref,
                     ln2_ref, wgu_ref, wd_ref,
                     out_ref,                        # (B, D) pooled embeddings
                     h_ref, attn_ref, bias_ref):     # VMEM scratch
    l = pl.program_id(0)

    # Hidden state is VMEM-resident across the L ("arbitrary") grid axis; the
    # (bidirectional) key-padding mask is built once and reused for all layers.
    @pl.when(l == 0)
    def _():
        h_ref[...] = x_ref[...].astype(jnp.float32)
        kpos = jax.lax.broadcasted_iota(jnp.int32, (S, S), 1)
        for b in range(B):
            allowed = kpos < lens_ref[b]
            bias_ref[b * S:(b + 1) * S, :] = jnp.where(
                allowed, 0.0, NEG_INF).astype(jnp.float32)

    x = h_ref[...]                                   # (BS, D) f32
    cosf = cos_ref[...]                              # (BS, D) batch+head-tiled cos
    sinf = sin_ref[...]                              # (BS, D) batch+head-tiled sin

    # ----------------------------- attention --------------------------------
    h1 = _rmsnorm(x, ln1_ref[0])
    # One wide bf16 matmul emits q, k, v, rotate_half(q), rotate_half(k):
    # the RoPE permutation is pre-folded into the weight/bias columns offline.
    qkv = jnp.dot(h1.astype(jnp.bfloat16), wqkv_ref[0],
                  preferred_element_type=jnp.float32) + bqkv_ref[0]   # (BS, 5D)
    q = qkv[:, :D]
    k = qkv[:, D:2 * D]
    v = qkv[:, 2 * D:3 * D]
    q_rot = qkv[:, 3 * D:4 * D]
    k_rot = qkv[:, 4 * D:]

    q = (q * cosf + q_rot * sinf).astype(jnp.bfloat16)
    k = (k * cosf + k_rot * sinf).astype(jnp.bfloat16)
    v = v.astype(jnp.bfloat16)

    scale = 1.0 / (HD ** 0.5)
    for b in range(B):                               # tiny (16,16) score tiles
        rs = b * S
        bias = bias_ref[rs:rs + S, :]                # (S, S)
        for hh in range(H):                          # 128-lane-aligned head slices
            cs = hh * HD
            qh = q[rs:rs + S, cs:cs + HD]
            kh = k[rs:rs + S, cs:cs + HD]
            vh = v[rs:rs + S, cs:cs + HD]
            s = jax.lax.dot_general(qh, kh, (((1,), (1,)), ((), ())),
                                    preferred_element_type=jnp.float32)
            s = s * scale + bias
            m = jnp.max(s, axis=-1, keepdims=True)
            p = jnp.exp(s - m)
            p = p * pl.reciprocal(jnp.sum(p, axis=-1, keepdims=True), approx=True)
            attn_ref[rs:rs + S, cs:cs + HD] = jnp.dot(
                p.astype(jnp.bfloat16), vh, preferred_element_type=jnp.float32)

    x1 = x + jnp.dot(attn_ref[...].astype(jnp.bfloat16), wo_ref[0],
                     preferred_element_type=jnp.float32)

    # ----------------------------- SwiGLU MLP --------------------------------
    h2 = _rmsnorm(x1, ln2_ref[0])
    gu = jnp.dot(h2.astype(jnp.bfloat16), wgu_ref[0],
                 preferred_element_type=jnp.float32)                 # (BS, 2F)
    g = gu[:, :F_FFN]
    u = gu[:, F_FFN:]
    act = (g * jax.nn.sigmoid(g)) * u                # SiLU(g) * u, f32
    x2 = x1 + jnp.dot(act.astype(jnp.bfloat16), wd_ref[0],
                      preferred_element_type=jnp.float32)

    h_ref[...] = x2

    # ---- last layer: last-token pool + final RMSNorm + L2 normalize ---------
    @pl.when(l == L - 1)
    def _():
        lnfw = lnf_ref[...]                                          # (1, D)
        for b in range(B):
            idx = b * S + lens_ref[b] - 1
            row = h_ref[pl.ds(idx, 1), :]                            # (1, D)
            var = jnp.mean(row * row, axis=-1, keepdims=True)
            normed = row * jax.lax.rsqrt(var + EPS) * lnfw
            ssq = jnp.sum(normed * normed, axis=-1, keepdims=True)
            out_ref[b:b + 1, :] = (normed * jax.lax.rsqrt(
                jnp.maximum(ssq, 1e-24))).astype(out_ref.dtype)


def gte_forward(tokens, attn_mask, emb_table, lnf, stacked, rope_consts):
    """Embedding lookup (glue) + one fused Pallas call for the full network."""
    (ln1_all, wqkv_all, bqkv_all, wo_all, ln2_all, wgu_all, wd_all) = stacked
    cos_bs, sin_bs = rope_consts

    lens = attn_mask.sum(axis=1).astype(jnp.int32)                  # (B,)
    x = jnp.take(emb_table, tokens, axis=0).reshape(BS, D)          # (B*S, D) glue

    grid_spec = pltpu.PrefetchScalarGridSpec(
        num_scalar_prefetch=1,
        grid=(L,),
        in_specs=[
            pl.BlockSpec((BS, D), lambda l, lens_r: (0, 0)),               # x (flat)
            pl.BlockSpec((BS, D), lambda l, lens_r: (0, 0)),               # cos (tiled)
            pl.BlockSpec((BS, D), lambda l, lens_r: (0, 0)),               # sin (tiled)
            pl.BlockSpec((1, D), lambda l, lens_r: (0, 0)),                # final norm w
            pl.BlockSpec((1, 1, D), lambda l, lens_r: (l, 0, 0)),          # ln1
            pl.BlockSpec((1, D, 5 * D), lambda l, lens_r: (l, 0, 0)),      # wqkv + rot
            pl.BlockSpec((1, 1, 5 * D), lambda l, lens_r: (l, 0, 0)),      # bqkv + rot
            pl.BlockSpec((1, D, D), lambda l, lens_r: (l, 0, 0)),          # wo
            pl.BlockSpec((1, 1, D), lambda l, lens_r: (l, 0, 0)),          # ln2
            pl.BlockSpec((1, D, 2 * F_FFN), lambda l, lens_r: (l, 0, 0)),  # wgu
            pl.BlockSpec((1, F_FFN, D), lambda l, lens_r: (l, 0, 0)),      # wd
        ],
        out_specs=pl.BlockSpec((B, D), lambda l, lens_r: (0, 0)),
        scratch_shapes=[pltpu.VMEM((BS, D), jnp.float32),     # hidden state
                        pltpu.VMEM((BS, D), jnp.float32),     # attention output
                        pltpu.VMEM((BS, S), jnp.float32)],    # additive mask
    )
    return pl.pallas_call(
        gte_fused_kernel,
        out_shape=jax.ShapeDtypeStruct((B, D), jnp.float32),
        grid_spec=grid_spec,
        compiler_params=pltpu.CompilerParams(
            dimension_semantics=("arbitrary",)),
    )(lens, x, cos_bs, sin_bs, lnf,
      ln1_all, wqkv_all, bqkv_all, wo_all, ln2_all, wgu_all, wd_all)


# ------------------------------ parameter init --------------------------------
def init_params(key):
    def nrm(k, shape, scale=0.02):
        return (scale * jax.random.normal(k, shape)).astype(jnp.float32)

    keys = jax.random.split(key, 1 + 5 * L)
    emb_table = nrm(keys[0], (V, D), 0.05)
    lnf = jnp.ones((1, D), jnp.float32)
    layers = []
    for i in range(L):
        k = keys[1 + 5 * i: 1 + 5 * (i + 1)]
        layers.append(dict(
            ln1=jnp.ones((1, D), jnp.float32),      # input_layernorm
            wqkv=nrm(k[0], (D, 3 * D)),             # fused q/k/v proj (in, out)
            bqkv=nrm(k[1], (1, 3 * D), 0.01),       # fused q/k/v bias
            wo=nrm(k[2], (D, D)),                   # o_proj (no bias)
            ln2=jnp.ones((1, D), jnp.float32),      # post_attention_layernorm
            wgu=nrm(k[3], (D, 2 * F_FFN)),          # fused gate/up proj
            wd=nrm(k[4], (F_FFN, D)),               # down proj
        ))
    return emb_table, lnf, layers


def stack_layers(layers, rot):
    """Stack per-layer weights; fold the RoPE rotate_half permutation into the
    QKV weight/bias so the kernel's single matmul also emits q_rot / k_rot."""
    ln1, wqkv_ext, bqkv_ext, wo, ln2, wgu, wd = [], [], [], [], [], [], []
    for ly in layers:
        w, bias = ly['wqkv'], ly['bqkv']
        wq, wk = w[:, :D], w[:, D:2 * D]
        bq, bk = bias[:, :D], bias[:, D:2 * D]
        wqkv_ext.append(jnp.concatenate([w, wq @ rot, wk @ rot], axis=1))   # (D, 5D)
        bqkv_ext.append(jnp.concatenate([bias, bq @ rot, bk @ rot], axis=1))
        ln1.append(ly['ln1']); wo.append(ly['wo']); ln2.append(ly['ln2'])
        wgu.append(ly['wgu']); wd.append(ly['wd'])

    def st(xs, dtype):
        return jnp.stack(xs, axis=0).astype(dtype)

    # big matmul operands in bf16 (f32 accumulation in-kernel); norms/bias in f32
    return (st(ln1, jnp.float32), st(wqkv_ext, jnp.bfloat16),
            st(bqkv_ext, jnp.float32), st(wo, jnp.bfloat16),
            st(ln2, jnp.float32), st(wgu, jnp.bfloat16), st(wd, jnp.bfloat16))


def rope_constants():
    inv_freq = 1.0 / (10000.0 ** (jnp.arange(0, HD, 2, dtype=jnp.float32) / HD))
    t = jnp.arange(S, dtype=jnp.float32)
    freqs = jnp.outer(t, inv_freq)                       # (S, HD/2)
    emb = jnp.concatenate([freqs, freqs], axis=-1)       # (S, HD)
    cos, sin = jnp.cos(emb), jnp.sin(emb)
    cos_bs = jnp.tile(jnp.tile(cos, (1, H)), (B, 1))     # (B*S, D) batch+head tiled
    sin_bs = jnp.tile(jnp.tile(sin, (1, H)), (B, 1))
    # Signed permutation matrix R s.t. (x @ R)[:, c] == rotate_half(x)[:, c]
    # within each head group of HD lanes (used OFFLINE only, folded into wqkv).
    col = jnp.arange(D)
    within = col % HD
    half = HD // 2
    src = jnp.where(within < half, col + half, col - half)
    sign = jnp.where(within < half, -1.0, 1.0).astype(jnp.float32)
    rot = jnp.zeros((D, D), jnp.float32).at[src, col].set(sign)
    return cos, sin, cos_bs, sin_bs, rot


# ----------------------------- pure-JAX reference ------------------------------
def reference_forward(tokens, attn_mask, emb_table, lnf, layers, cos, sin):
    def rms(x, w):
        return x * jax.lax.rsqrt(jnp.mean(x * x, -1, keepdims=True) + EPS) * w

    def rope(x):                                         # (B, H, S, HD)
        half = HD // 2
        rot = jnp.concatenate([-x[..., half:], x[..., :half]], -1)
        return x * cos[None, None] + rot * sin[None, None]

    x = jnp.take(emb_table, tokens, axis=0)
    # GTE-Qwen2 embedding model uses bidirectional attention: mask padded keys only.
    bias = jnp.where(attn_mask.astype(bool), 0.0, NEG_INF)[:, None, None, :]
    for ly in layers:
        h = rms(x, ly['ln1'])
        qkv = h @ ly['wqkv'] + ly['bqkv']
        q, k, v = qkv[..., :D], qkv[..., D:2 * D], qkv[..., 2 * D:]
        q = q.reshape(B, S, H, HD).transpose(0, 2, 1, 3)
        k = k.reshape(B, S, H, HD).transpose(0, 2, 1, 3)
        v = v.reshape(B, S, H, HD).transpose(0, 2, 1, 3)
        q, k = rope(q), rope(k)
        s = jnp.einsum("bhqd,bhkd->bhqk", q, k) / (HD ** 0.5) + bias
        p = jax.nn.softmax(s, axis=-1)
        a = jnp.einsum("bhqk,bhkd->bhqd", p, v).transpose(0, 2, 1, 3).reshape(B, S, D)
        x = x + a @ ly['wo']
        h2 = rms(x, ly['ln2'])
        gu = h2 @ ly['wgu']
        g, u = gu[..., :F_FFN], gu[..., F_FFN:]
        x = x + (jax.nn.silu(g) * u) @ ly['wd']
    idx = attn_mask.sum(1) - 1
    pooled = rms(x, lnf)[jnp.arange(B), idx]
    return pooled / jnp.maximum(
        jnp.linalg.norm(pooled, axis=1, keepdims=True), 1e-12)


# ------------------------------------ main ------------------------------------
if __name__ == "__main__":
    key = jax.random.PRNGKey(0)
    k_tok, k_params = jax.random.split(key)

    # "tokenizer output": deterministic token ids + padding mask
    lens = jnp.array([S, S - 5], dtype=jnp.int32)
    tokens = jax.random.randint(k_tok, (B, S), 0, V, dtype=jnp.int32)
    attn_mask = (jnp.arange(S)[None, :] < lens[:, None]).astype(jnp.int32)
    tokens = tokens * attn_mask                          # pad id = 0

    emb_table, lnf, layers = init_params(k_params)
    cos, sin, cos_bs, sin_bs, rot = rope_constants()
    stacked = stack_layers(layers, rot)

    # single fused Pallas call: L layers + pool + RMSNorm + L2 normalize
    out = gte_forward(tokens, attn_mask, emb_table, lnf, stacked, (cos_bs, sin_bs))
    out = jax.block_until_ready(out)

    # sanity check against pure-JAX f32 reference
    ref = reference_forward(tokens, attn_mask, emb_table, lnf, layers, cos, sin)
    assert out.shape == (B, D)
    assert jnp.allclose(jnp.linalg.norm(out, axis=1), 1.0, atol=1e-3)
    assert jnp.allclose(out, ref, atol=5e-2, rtol=5e-2)

    print("KERNEL_OK")
</pallas_src>

<mosaic_0001>
module attributes {stable_mosaic.version = 11 : i64} {
  func.func @gte_fused_kernel(%arg0: i32, %arg1: memref<2xi32, #tpu.memory_space<smem>>, %arg2: memref<32x256xf32, #tpu.memory_space<vmem>>, %arg3: memref<32x256xf32, #tpu.memory_space<vmem>>, %arg4: memref<32x256xf32, #tpu.memory_space<vmem>>, %arg5: memref<1x256xf32, #tpu.memory_space<vmem>>, %arg6: memref<1x1x256xf32, #tpu.memory_space<vmem>>, %arg7: memref<1x256x1280xbf16, #tpu.memory_space<vmem>>, %arg8: memref<1x1x1280xf32, #tpu.memory_space<vmem>>, %arg9: memref<1x256x256xbf16, #tpu.memory_space<vmem>>, %arg10: memref<1x1x256xf32, #tpu.memory_space<vmem>>, %arg11: memref<1x256x1024xbf16, #tpu.memory_space<vmem>>, %arg12: memref<1x512x256xbf16, #tpu.memory_space<vmem>>, %arg13: memref<2x256xf32, #tpu.memory_space<vmem>>, %arg14: memref<32x256xf32, #tpu.memory_space<vmem>>, %arg15: memref<32x256xf32, #tpu.memory_space<vmem>>, %arg16: memref<32x16xf32, #tpu.memory_space<vmem>>) attributes {dimension_semantics = [#tpu.dimension_semantics<arbitrary>], iteration_bounds = array<i64: 2>, scalar_prefetch = 1 : i64, scratch_operands = 3 : i64, tpu.core_type = #tpu.core_type<tc>, window_params = [{pipeline_mode = #tpu.pipeline_mode<synchronous>, transform_indices = @transform_0, window_bounds = array<i64: 32, 256>}, {pipeline_mode = #tpu.pipeline_mode<synchronous>, transform_indices = @transform_1, window_bounds = array<i64: 32, 256>}, {pipeline_mode = #tpu.pipeline_mode<synchronous>, transform_indices = @transform_2, window_bounds = array<i64: 32, 256>}, {pipeline_mode = #tpu.pipeline_mode<synchronous>, transform_indices = @transform_3, window_bounds = array<i64: 1, 256>}, {transform_indices = @transform_4, window_bounds = array<i64: 1, 1, 256>}, {transform_indices = @transform_5, window_bounds = array<i64: 1, 256, 1280>}, {transform_indices = @transform_6, window_bounds = array<i64: 1, 1, 1280>}, {transform_indices = @transform_7, window_bounds = array<i64: 1, 256, 256>}, {transform_indices = @transform_8, window_bounds = array<i64: 1, 1, 256>}, {transform_indices = @transform_9, window_bounds = array<i64: 1, 256, 1024>}, {transform_indices = @transform_10, window_bounds = array<i64: 1, 512, 256>}, {pipeline_mode = #tpu.pipeline_mode<synchronous>, transform_indices = @transform_11, window_bounds = array<i64: 2, 256>}]} {
    %c0_i32 = arith.constant 0 : i32
    %0 = arith.cmpi eq, %arg0, %c0_i32 : i32
    %1 = arith.extui %0 : i1 to i32
    %c0_i32_0 = arith.constant 0 : i32
    %2 = arith.cmpi ne, %1, %c0_i32_0 : i32
    scf.if %2 {
      %c0_72 = arith.constant 0 : index
      %c0_73 = arith.constant 0 : index
      %166 = vector.load %arg2[%c0_72, %c0_73] : memref<32x256xf32, #tpu.memory_space<vmem>>, vector<32x256xf32>
      %c0_74 = arith.constant 0 : index
      %c0_75 = arith.constant 0 : index
      %167 = vector.load %arg14[%c0_74, %c0_75] : memref<32x256xf32, #tpu.memory_space<vmem>>, vector<32x256xf32>
      tpu.vector_store %arg14[%c0_74, %c0_75], %166 {strides = array<i32>} : memref<32x256xf32, #tpu.memory_space<vmem>>, vector<32x256xf32>,
      %168 = tpu.iota {dimensions = array<i32: 1>} : vector<16x16xi32>
      %c0_76 = arith.constant 0 : index
      %169 = memref.load %arg1[%c0_76] : memref<2xi32, #tpu.memory_space<smem>>
      %170 = vector.broadcast %169 : i32 to vector<16x16xi32>
      %171 = arith.cmpi slt, %168, %170 : vector<16x16xi32>
      %cst_77 = arith.constant 0.000000e+00 : f32
      %cst_78 = arith.constant -1.000000e+09 : f32
      %172 = vector.broadcast %cst_77 : f32 to vector<16x16xf32>
      %173 = vector.broadcast %cst_78 : f32 to vector<16x16xf32>
      %174 = arith.select %171, %172, %173 : vector<16x16xi1>, vector<16x16xf32>
      %c0_79 = arith.constant 0 : index
      %c0_80 = arith.constant 0 : index
      %175 = vector.load %arg16[%c0_79, %c0_80] : memref<32x16xf32, #tpu.memory_space<vmem>>, vector<16x16xf32>
      tpu.vector_store %arg16[%c0_79, %c0_80], %174 {strides = array<i32>} : memref<32x16xf32, #tpu.memory_space<vmem>>, vector<16x16xf32>,
      %c1 = arith.constant 1 : index
      %176 = memref.load %arg1[%c1] : memref<2xi32, #tpu.memory_space<smem>>
      %177 = vector.broadcast %176 : i32 to vector<16x16xi32>
      %178 = arith.cmpi slt, %168, %177 : vector<16x16xi32>
      %cst_81 = arith.constant 0.000000e+00 : f32
      %cst_82 = arith.constant -1.000000e+09 : f32
      %179 = vector.broadcast %cst_81 : f32 to vector<16x16xf32>
      %180 = vector.broadcast %cst_82 : f32 to vector<16x16xf32>
      %181 = arith.select %178, %179, %180 : vector<16x16xi1>, vector<16x16xf32>
      %c16_83 = arith.constant 16 : index
      %c0_84 = arith.constant 0 : index
      %182 = vector.load %arg16[%c16_83, %c0_84] : memref<32x16xf32, #tpu.memory_space<vmem>>, vector<16x16xf32>
      tpu.vector_store %arg16[%c16_83, %c0_84], %181 {strides = array<i32>} : memref<32x16xf32, #tpu.memory_space<vmem>>, vector<16x16xf32>,
    } else {
    }
    %c0 = arith.constant 0 : index
    %c0_1 = arith.constant 0 : index
    %3 = vector.load %arg14[%c0, %c0_1] : memref<32x256xf32, #tpu.memory_space<vmem>>, vector<32x256xf32>
    %c0_2 = arith.constant 0 : index
    %c0_3 = arith.constant 0 : index
    %4 = vector.load %arg3[%c0_2, %c0_3] : memref<32x256xf32, #tpu.memory_space<vmem>>, vector<32x256xf32>
    %c0_4 = arith.constant 0 : index
    %c0_5 = arith.constant 0 : index
    %5 = vector.load %arg4[%c0_4, %c0_5] : memref<32x256xf32, #tpu.memory_space<vmem>>, vector<32x256xf32>
    %c0_6 = arith.constant 0 : index
    %c0_7 = arith.constant 0 : index
    %c0_8 = arith.constant 0 : index
    %6 = vector.load %arg6[%c0_6, %c0_7, %c0_8] : memref<1x1x256xf32, #tpu.memory_space<vmem>>, vector<1x1x256xf32>
    %7 = vector.shape_cast %6 : vector<1x1x256xf32> to vector<1x256xf32>
    %8 = arith.mulf %3, %3 : vector<32x256xf32>
    %cst = arith.constant dense<0.000000e+00> : vector<32xf32>
    %9 = vector.multi_reduction <add>, %8, %cst [1] : vector<32x256xf32> to vector<32xf32>
    %10 = vector.shape_cast %9 : vector<32xf32> to vector<32x1xf32>
    %cst_9 = arith.constant 2.560000e+02 : f32
    %11 = vector.broadcast %cst_9 : f32 to vector<32x1xf32>
    %12 = arith.divf %10, %11 : vector<32x1xf32>
    %cst_10 = arith.constant 9.99999997E-7 : f32
    %13 = vector.broadcast %cst_10 : f32 to vector<32x1xf32>
    %14 = arith.addf %12, %13 : vector<32x1xf32>
    %15 = math.rsqrt %14 : vector<32x1xf32>
    %16 = vector.broadcast %15 : vector<32x1xf32> to vector<32x256xf32>
    %17 = arith.mulf %3, %16 : vector<32x256xf32>
    %18 = vector.broadcast %7 : vector<1x256xf32> to vector<32x256xf32>
    %19 = arith.mulf %17, %18 : vector<32x256xf32>
    %20 = arith.truncf %19 : vector<32x256xf32> to vector<32x256xbf16>
    %c0_11 = arith.constant 0 : index
    %c0_12 = arith.constant 0 : index
    %c0_13 = arith.constant 0 : index
    %21 = vector.load %arg7[%c0_11, %c0_12, %c0_13] : memref<1x256x1280xbf16, #tpu.memory_space<vmem>>, vector<1x256x1280xbf16>
    %22 = vector.shape_cast %21 : vector<1x256x1280xbf16> to vector<256x1280xbf16>
    %cst_14 = arith.constant dense<0.000000e+00> : vector<32x1280xf32>
    %23 = tpu.matmul %20, %22, %cst_14 {dimension_numbers = #tpu.dot_dimension_numbers<[1], [0], [0], [1], [0, 0, 1, 1], [], []>} : vector<32x256xbf16>, vector<256x1280xbf16>, vector<32x1280xf32> -> vector<32x1280xf32>
    %c0_15 = arith.constant 0 : index
    %c0_16 = arith.constant 0 : index
    %c0_17 = arith.constant 0 : index
    %24 = vector.load %arg8[%c0_15, %c0_16, %c0_17] : memref<1x1x1280xf32, #tpu.memory_space<vmem>>, vector<1x1x1280xf32>
    %25 = vector.shape_cast %24 : vector<1x1x1280xf32> to vector<1x1280xf32>
    %26 = vector.broadcast %25 : vector<1x1280xf32> to vector<32x1280xf32>
    %27 = arith.addf %23, %26 : vector<32x1280xf32>
    %28 = vector.extract_strided_slice %27 {offsets = [0, 0], sizes = [32, 256], strides = [1, 1]} : vector<32x1280xf32> to vector<32x256xf32>
    %29 = vector.extract_strided_slice %27 {offsets = [0, 256], sizes = [32, 256], strides = [1, 1]} : vector<32x1280xf32> to vector<32x256xf32>
    %30 = vector.extract_strided_slice %27 {offsets = [0, 512], sizes = [32, 256], strides = [1, 1]} : vector<32x1280xf32> to vector<32x256xf32>
    %31 = vector.extract_strided_slice %27 {offsets = [0, 768], sizes = [32, 256], strides = [1, 1]} : vector<32x1280xf32> to vector<32x256xf32>
    %32 = vector.extract_strided_slice %27 {offsets = [0, 1024], sizes = [32, 256], strides = [1, 1]} : vector<32x1280xf32> to vector<32x256xf32>
    %33 = arith.mulf %28, %4 : vector<32x256xf32>
    %34 = arith.mulf %31, %5 : vector<32x256xf32>
    %35 = arith.addf %33, %34 : vector<32x256xf32>
    %36 = arith.truncf %35 : vector<32x256xf32> to vector<32x256xbf16>
    %37 = arith.mulf %29, %4 : vector<32x256xf32>
    %38 = arith.mulf %32, %5 : vector<32x256xf32>
    %39 = arith.addf %37, %38 : vector<32x256xf32>
    %40 = arith.truncf %39 : vector<32x256xf32> to vector<32x256xbf16>
    %41 = arith.truncf %30 : vector<32x256xf32> to vector<32x256xbf16>
    %c0_18 = arith.constant 0 : index
    %c0_19 = arith.constant 0 : index
    %42 = vector.load %arg16[%c0_18, %c0_19] : memref<32x16xf32, #tpu.memory_space<vmem>>, vector<16x16xf32>
    %43 = vector.extract_strided_slice %36 {offsets = [0, 0], sizes = [16, 128], strides = [1, 1]} : vector<32x256xbf16> to vector<16x128xbf16>
    %44 = vector.extract_strided_slice %40 {offsets = [0, 0], sizes = [16, 128], strides = [1, 1]} : vector<32x256xbf16> to vector<16x128xbf16>
    %45 = vector.extract_strided_slice %41 {offsets = [0, 0], sizes = [16, 128], strides = [1, 1]} : vector<32x256xbf16> to vector<16x128xbf16>
    %cst_20 = arith.constant dense<0.000000e+00> : vector<16x16xf32>
    %46 = tpu.matmul %43, %44, %cst_20 {dimension_numbers = #tpu.dot_dimension_numbers<[1], [1], [0], [0], [0, 0, 1, 0], [], []>} : vector<16x128xbf16>, vector<16x128xbf16>, vector<16x16xf32> -> vector<16x16xf32>
    %cst_21 = arith.constant 0.0883883461 : f32
    %47 = vector.broadcast %cst_21 : f32 to vector<16x16xf32>
    %48 = arith.mulf %46, %47 : vector<16x16xf32>
    %49 = arith.addf %48, %42 : vector<16x16xf32>
    %cst_22 = arith.constant dense<0xFF800000> : vector<16xf32>
    %50 = vector.multi_reduction <maximumf>, %49, %cst_22 [1] : vector<16x16xf32> to vector<16xf32>
    %51 = vector.shape_cast %50 : vector<16xf32> to vector<16x1xf32>
    %52 = vector.broadcast %51 : vector<16x1xf32> to vector<16x16xf32>
    %53 = arith.subf %49, %52 : vector<16x16xf32>
    %54 = math.exp %53 : vector<16x16xf32>
    %cst_23 = arith.constant dense<0.000000e+00> : vector<16xf32>
    %55 = vector.multi_reduction <add>, %54, %cst_23 [1] : vector<16x16xf32> to vector<16xf32>
    %56 = vector.shape_cast %55 : vector<16xf32> to vector<16x1xf32>
    %57 = tpu.reciprocal %56 {approx = true} : vector<16x1xf32> -> vector<16x1xf32>
    %58 = vector.broadcast %57 : vector<16x1xf32> to vector<16x16xf32>
    %59 = arith.mulf %54, %58 : vector<16x16xf32>
    %60 = arith.truncf %59 : vector<16x16xf32> to vector<16x16xbf16>
    %cst_24 = arith.constant dense<0.000000e+00> : vector<16x128xf32>
    %61 = tpu.matmul %60, %45, %cst_24 {dimension_numbers = #tpu.dot_dimension_numbers<[1], [0], [0], [1], [0, 0, 1, 1], [], []>} : vector<16x16xbf16>, vector<16x128xbf16>, vector<16x128xf32> -> vector<16x128xf32>
    %c0_25 = arith.constant 0 : index
    %c0_26 = arith.constant 0 : index
    %62 = vector.load %arg15[%c0_25, %c0_26] : memref<32x256xf32, #tpu.memory_space<vmem>>, vector<16x128xf32>
    tpu.vector_store %arg15[%c0_25, %c0_26], %61 {strides = array<i32>} : memref<32x256xf32, #tpu.memory_space<vmem>>, vector<16x128xf32>,
    %63 = vector.extract_strided_slice %36 {offsets = [0, 128], sizes = [16, 128], strides = [1, 1]} : vector<32x256xbf16> to vector<16x128xbf16>
    %64 = vector.extract_strided_slice %40 {offsets = [0, 128], sizes = [16, 128], strides = [1, 1]} : vector<32x256xbf16> to vector<16x128xbf16>
    %65 = vector.extract_strided_slice %41 {offsets = [0, 128], sizes = [16, 128], strides = [1, 1]} : vector<32x256xbf16> to vector<16x128xbf16>
    %cst_27 = arith.constant dense<0.000000e+00> : vector<16x16xf32>
    %66 = tpu.matmul %63, %64, %cst_27 {dimension_numbers = #tpu.dot_dimension_numbers<[1], [1], [0], [0], [0, 0, 1, 0], [], []>} : vector<16x128xbf16>, vector<16x128xbf16>, vector<16x16xf32> -> vector<16x16xf32>
    %cst_28 = arith.constant 0.0883883461 : f32
    %67 = vector.broadcast %cst_28 : f32 to vector<16x16xf32>
    %68 = arith.mulf %66, %67 : vector<16x16xf32>
    %69 = arith.addf %68, %42 : vector<16x16xf32>
    %cst_29 = arith.constant dense<0xFF800000> : vector<16xf32>
    %70 = vector.multi_reduction <maximumf>, %69, %cst_29 [1] : vector<16x16xf32> to vector<16xf32>
    %71 = vector.shape_cast %70 : vector<16xf32> to vector<16x1xf32>
    %72 = vector.broadcast %71 : vector<16x1xf32> to vector<16x16xf32>
    %73 = arith.subf %69, %72 : vector<16x16xf32>
    %74 = math.exp %73 : vector<16x16xf32>
    %cst_30 = arith.constant dense<0.000000e+00> : vector<16xf32>
    %75 = vector.multi_reduction <add>, %74, %cst_30 [1] : vector<16x16xf32> to vector<16xf32>
    %76 = vector.shape_cast %75 : vector<16xf32> to vector<16x1xf32>
    %77 = tpu.reciprocal %76 {approx = true} : vector<16x1xf32> -> vector<16x1xf32>
    %78 = vector.broadcast %77 : vector<16x1xf32> to vector<16x16xf32>
    %79 = arith.mulf %74, %78 : vector<16x16xf32>
    %80 = arith.truncf %79 : vector<16x16xf32> to vector<16x16xbf16>
    %cst_31 = arith.constant dense<0.000000e+00> : vector<16x128xf32>
    %81 = tpu.matmul %80, %65, %cst_31 {dimension_numbers = #tpu.dot_dimension_numbers<[1], [0], [0], [1], [0, 0, 1, 1], [], []>} : vector<16x16xbf16>, vector<16x128xbf16>, vector<16x128xf32> -> vector<16x128xf32>
    %c0_32 = arith.constant 0 : index
    %c128 = arith.constant 128 : index
    %82 = vector.load %arg15[%c0_32, %c128] : memref<32x256xf32, #tpu.memory_space<vmem>>, vector<16x128xf32>
    tpu.vector_store %arg15[%c0_32, %c128], %81 {strides = array<i32>} : memref<32x256xf32, #tpu.memory_space<vmem>>, vector<16x128xf32>,
    %c16 = arith.constant 16 : index
    %c0_33 = arith.constant 0 : index
    %83 = vector.load %arg16[%c16, %c0_33] : memref<32x16xf32, #tpu.memory_space<vmem>>, vector<16x16xf32>
    %84 = vector.extract_strided_slice %36 {offsets = [16, 0], sizes = [16, 128], strides = [1, 1]} : vector<32x256xbf16> to vector<16x128xbf16>
    %85 = vector.extract_strided_slice %40 {offsets = [16, 0], sizes = [16, 128], strides = [1, 1]} : vector<32x256xbf16> to vector<16x128xbf16>
    %86 = vector.extract_strided_slice %41 {offsets = [16, 0], sizes = [16, 128], strides = [1, 1]} : vector<32x256xbf16> to vector<16x128xbf16>
    %cst_34 = arith.constant dense<0.000000e+00> : vector<16x16xf32>
    %87 = tpu.matmul %84, %85, %cst_34 {dimension_numbers = #tpu.dot_dimension_numbers<[1], [1], [0], [0], [0, 0, 1, 0], [], []>} : vector<16x128xbf16>, vector<16x128xbf16>, vector<16x16xf32> -> vector<16x16xf32>
    %cst_35 = arith.constant 0.0883883461 : f32
    %88 = vector.broadcast %cst_35 : f32 to vector<16x16xf32>
    %89 = arith.mulf %87, %88 : vector<16x16xf32>
    %90 = arith.addf %89, %83 : vector<16x16xf32>
    %cst_36 = arith.constant dense<0xFF800000> : vector<16xf32>
    %91 = vector.multi_reduction <maximumf>, %90, %cst_36 [1] : vector<16x16xf32> to vector<16xf32>
    %92 = vector.shape_cast %91 : vector<16xf32> to vector<16x1xf32>
    %93 = vector.broadcast %92 : vector<16x1xf32> to vector<16x16xf32>
    %94 = arith.subf %90, %93 : vector<16x16xf32>
    %95 = math.exp %94 : vector<16x16xf32>
    %cst_37 = arith.constant dense<0.000000e+00> : vector<16xf32>
    %96 = vector.multi_reduction <add>, %95, %cst_37 [1] : vector<16x16xf32> to vector<16xf32>
    %97 = vector.shape_cast %96 : vector<16xf32> to vector<16x1xf32>
    %98 = tpu.reciprocal %97 {approx = true} : vector<16x1xf32> -> vector<16x1xf32>
    %99 = vector.broadcast %98 : vector<16x1xf32> to vector<16x16xf32>
    %100 = arith.mulf %95, %99 : vector<16x16xf32>
    %101 = arith.truncf %100 : vector<16x16xf32> to vector<16x16xbf16>
    %cst_38 = arith.constant dense<0.000000e+00> : vector<16x128xf32>
    %102 = tpu.matmul %101, %86, %cst_38 {dimension_numbers = #tpu.dot_dimension_numbers<[1], [0], [0], [1], [0, 0, 1, 1], [], []>} : vector<16x16xbf16>, vector<16x128xbf16>, vector<16x128xf32> -> vector<16x128xf32>
    %c16_39 = arith.constant 16 : index
    %c0_40 = arith.constant 0 : index
    %103 = vector.load %arg15[%c16_39, %c0_40] : memref<32x256xf32, #tpu.memory_space<vmem>>, vector<16x128xf32>
    tpu.vector_store %arg15[%c16_39, %c0_40], %102 {strides = array<i32>} : memref<32x256xf32, #tpu.memory_space<vmem>>, vector<16x128xf32>,
    %104 = vector.extract_strided_slice %36 {offsets = [16, 128], sizes = [16, 128], strides = [1, 1]} : vector<32x256xbf16> to vector<16x128xbf16>
    %105 = vector.extract_strided_slice %40 {offsets = [16, 128], sizes = [16, 128], strides = [1, 1]} : vector<32x256xbf16> to vector<16x128xbf16>
    %106 = vector.extract_strided_slice %41 {offsets = [16, 128], sizes = [16, 128], strides = [1, 1]} : vector<32x256xbf16> to vector<16x128xbf16>
    %cst_41 = arith.constant dense<0.000000e+00> : vector<16x16xf32>
    %107 = tpu.matmul %104, %105, %cst_41 {dimension_numbers = #tpu.dot_dimension_numbers<[1], [1], [0], [0], [0, 0, 1, 0], [], []>} : vector<16x128xbf16>, vector<16x128xbf16>, vector<16x16xf32> -> vector<16x16xf32>
    %cst_42 = arith.constant 0.0883883461 : f32
    %108 = vector.broadcast %cst_42 : f32 to vector<16x16xf32>
    %109 = arith.mulf %107, %108 : vector<16x16xf32>
    %110 = arith.addf %109, %83 : vector<16x16xf32>
    %cst_43 = arith.constant dense<0xFF800000> : vector<16xf32>
    %111 = vector.multi_reduction <maximumf>, %110, %cst_43 [1] : vector<16x16xf32> to vector<16xf32>
    %112 = vector.shape_cast %111 : vector<16xf32> to vector<16x1xf32>
    %113 = vector.broadcast %112 : vector<16x1xf32> to vector<16x16xf32>
    %114 = arith.subf %110, %113 : vector<16x16xf32>
    %115 = math.exp %114 : vector<16x16xf32>
    %cst_44 = arith.constant dense<0.000000e+00> : vector<16xf32>
    %116 = vector.multi_reduction <add>, %115, %cst_44 [1] : vector<16x16xf32> to vector<16xf32>
    %117 = vector.shape_cast %116 : vector<16xf32> to vector<16x1xf32>
    %118 = tpu.reciprocal %117 {approx = true} : vector<16x1xf32> -> vector<16x1xf32>
    %119 = vector.broadcast %118 : vector<16x1xf32> to vector<16x16xf32>
    %120 = arith.mulf %115, %119 : vector<16x16xf32>
    %121 = arith.truncf %120 : vector<16x16xf32> to vector<16x16xbf16>
    %cst_45 = arith.constant dense<0.000000e+00> : vector<16x128xf32>
    %122 = tpu.matmul %121, %106, %cst_45 {dimension_numbers = #tpu.dot_dimension_numbers<[1], [0], [0], [1], [0, 0, 1, 1], [], []>} : vector<16x16xbf16>, vector<16x128xbf16>, vector<16x128xf32> -> vector<16x128xf32>
    %c16_46 = arith.constant 16 : index
    %c128_47 = arith.constant 128 : index
    %123 = vector.load %arg15[%c16_46, %c128_47] : memref<32x256xf32, #tpu.memory_space<vmem>>, vector<16x128xf32>
    tpu.vector_store %arg15[%c16_46, %c128_47], %122 {strides = array<i32>} : memref<32x256xf32, #tpu.memory_space<vmem>>, vector<16x128xf32>,
    %c0_48 = arith.constant 0 : index
    %c0_49 = arith.constant 0 : index
    %124 = vector.load %arg15[%c0_48, %c0_49] : memref<32x256xf32, #tpu.memory_space<vmem>>, vector<32x256xf32>
    %125 = arith.truncf %124 : vector<32x256xf32> to vector<32x256xbf16>
    %c0_50 = arith.constant 0 : index
    %c0_51 = arith.constant 0 : index
    %c0_52 = arith.constant 0 : index
    %126 = vector.load %arg9[%c0_50, %c0_51, %c0_52] : memref<1x256x256xbf16, #tpu.memory_space<vmem>>, vector<1x256x256xbf16>
    %127 = vector.shape_cast %126 : vector<1x256x256xbf16> to vector<256x256xbf16>
    %cst_53 = arith.constant dense<0.000000e+00> : vector<32x256xf32>
    %128 = tpu.matmul %125, %127, %cst_53 {dimension_numbers = #tpu.dot_dimension_numbers<[1], [0], [0], [1], [0, 0, 1, 1], [], []>} : vector<32x256xbf16>, vector<256x256xbf16>, vector<32x256xf32> -> vector<32x256xf32>
    %129 = arith.addf %3, %128 : vector<32x256xf32>
    %c0_54 = arith.constant 0 : index
    %c0_55 = arith.constant 0 : index
    %c0_56 = arith.constant 0 : index
    %130 = vector.load %arg10[%c0_54, %c0_55, %c0_56] : memref<1x1x256xf32, #tpu.memory_space<vmem>>, vector<1x1x256xf32>
    %131 = vector.shape_cast %130 : vector<1x1x256xf32> to vector<1x256xf32>
    %132 = arith.mulf %129, %129 : vector<32x256xf32>
    %cst_57 = arith.constant dense<0.000000e+00> : vector<32xf32>
    %133 = vector.multi_reduction <add>, %132, %cst_57 [1] : vector<32x256xf32> to vector<32xf32>
    %134 = vector.shape_cast %133 : vector<32xf32> to vector<32x1xf32>
    %cst_58 = arith.constant 2.560000e+02 : f32
    %135 = vector.broadcast %cst_58 : f32 to vector<32x1xf32>
    %136 = arith.divf %134, %135 : vector<32x1xf32>
    %cst_59 = arith.constant 9.99999997E-7 : f32
    %137 = vector.broadcast %cst_59 : f32 to vector<32x1xf32>
    %138 = arith.addf %136, %137 : vector<32x1xf32>
    %139 = math.rsqrt %138 : vector<32x1xf32>
    %140 = vector.broadcast %139 : vector<32x1xf32> to vector<32x256xf32>
    %141 = arith.mulf %129, %140 : vector<32x256xf32>
    %142 = vector.broadcast %131 : vector<1x256xf32> to vector<32x256xf32>
    %143 = arith.mulf %141, %142 : vector<32x256xf32>
    %144 = arith.truncf %143 : vector<32x256xf32> to vector<32x256xbf16>
    %c0_60 = arith.constant 0 : index
    %c0_61 = arith.constant 0 : index
    %c0_62 = arith.constant 0 : index
    %145 = vector.load %arg11[%c0_60, %c0_61, %c0_62] : memref<1x256x1024xbf16, #tpu.memory_space<vmem>>, vector<1x256x1024xbf16>
    %146 = vector.shape_cast %145 : vector<1x256x1024xbf16> to vector<256x1024xbf16>
    %cst_63 = arith.constant dense<0.000000e+00> : vector<32x1024xf32>
    %147 = tpu.matmul %144, %146, %cst_63 {dimension_numbers = #tpu.dot_dimension_numbers<[1], [0], [0], [1], [0, 0, 1, 1], [], []>} : vector<32x256xbf16>, vector<256x1024xbf16>, vector<32x1024xf32> -> vector<32x1024xf32>
    %148 = vector.extract_strided_slice %147 {offsets = [0, 0], sizes = [32, 512], strides = [1, 1]} : vector<32x1024xf32> to vector<32x512xf32>
    %149 = vector.extract_strided_slice %147 {offsets = [0, 512], sizes = [32, 512], strides = [1, 1]} : vector<32x1024xf32> to vector<32x512xf32>
    %150 = arith.negf %148 : vector<32x512xf32>
    %151 = math.exp %150 : vector<32x512xf32>
    %cst_64 = arith.constant 1.000000e+00 : f32
    %152 = vector.broadcast %cst_64 : f32 to vector<32x512xf32>
    %153 = arith.addf %152, %151 : vector<32x512xf32>
    %154 = arith.divf %152, %153 : vector<32x512xf32>
    %155 = arith.mulf %148, %154 : vector<32x512xf32>
    %156 = arith.mulf %155, %149 : vector<32x512xf32>
    %157 = arith.truncf %156 : vector<32x512xf32> to vector<32x512xbf16>
    %c0_65 = arith.constant 0 : index
    %c0_66 = arith.constant 0 : index
    %c0_67 = arith.constant 0 : index
    %158 = vector.load %arg12[%c0_65, %c0_66, %c0_67] : memref<1x512x256xbf16, #tpu.memory_space<vmem>>, vector<1x512x256xbf16>
    %159 = vector.shape_cast %158 : vector<1x512x256xbf16> to vector<512x256xbf16>
    %cst_68 = arith.constant dense<0.000000e+00> : vector<32x256xf32>
    %160 = tpu.matmul %157, %159, %cst_68 {dimension_numbers = #tpu.dot_dimension_numbers<[1], [0], [0], [1], [0, 0, 1, 1], [], []>} : vector<32x512xbf16>, vector<512x256xbf16>, vector<32x256xf32> -> vector<32x256xf32>
    %161 = arith.addf %129, %160 : vector<32x256xf32>
    %c0_69 = arith.constant 0 : index
    %c0_70 = arith.constant 0 : index
    %162 = vector.load %arg14[%c0_69, %c0_70] : memref<32x256xf32, #tpu.memory_space<vmem>>, vector<32x256xf32>
    tpu.vector_store %arg14[%c0_69, %c0_70], %161 {strides = array<i32>} : memref<32x256xf32, #tpu.memory_space<vmem>>, vector<32x256xf32>,
    %c1_i32 = arith.constant 1 : i32
    %163 = arith.cmpi eq, %arg0, %c1_i32 : i32
    %164 = arith.extui %163 : i1 to i32
    %c0_i32_71 = arith.constant 0 : i32
    %165 = arith.cmpi ne, %164, %c0_i32_71 : i32
    scf.if %165 {
      %c0_72 = arith.constant 0 : index
      %c0_73 = arith.constant 0 : index
      %166 = vector.load %arg5[%c0_72, %c0_73] : memref<1x256xf32, #tpu.memory_space<vmem>>, vector<1x256xf32>
      %c0_74 = arith.constant 0 : index
      %167 = memref.load %arg1[%c0_74] : memref<2xi32, #tpu.memory_space<smem>>
      %c0_i32_75 = arith.constant 0 : i32
      %168 = arith.addi %c0_i32_75, %167 : i32
      %c1_i32_76 = arith.constant 1 : i32
      %169 = arith.subi %168, %c1_i32_76 : i32
      %170 = arith.index_cast %169 : i32 to index
      %c0_77 = arith.constant 0 : index
      %171 = vector.load %arg14[%170, %c0_77] : memref<32x256xf32, #tpu.memory_space<vmem>>, vector<1x256xf32>
      %172 = arith.mulf %171, %171 : vector<1x256xf32>
      %cst_78 = arith.constant dense<0.000000e+00> : vector<1xf32>
      %173 = vector.multi_reduction <add>, %172, %cst_78 [1] : vector<1x256xf32> to vector<1xf32>
      %174 = vector.shape_cast %173 : vector<1xf32> to vector<1x1xf32>
      %cst_79 = arith.constant 2.560000e+02 : f32
      %175 = vector.broadcast %cst_79 : f32 to vector<1x1xf32>
      %176 = arith.divf %174, %175 : vector<1x1xf32>
      %cst_80 = arith.constant 9.99999997E-7 : f32
      %177 = vector.broadcast %cst_80 : f32 to vector<1x1xf32>
      %178 = arith.addf %176, %177 : vector<1x1xf32>
      %179 = math.rsqrt %178 : vector<1x1xf32>
      %180 = vector.broadcast %179 : vector<1x1xf32> to vector<1x256xf32>
      %181 = arith.mulf %171, %180 : vector<1x256xf32>
      %182 = arith.mulf %181, %166 : vector<1x256xf32>
      %183 = arith.mulf %182, %182 : vector<1x256xf32>
      %cst_81 = arith.constant dense<0.000000e+00> : vector<1xf32>
      %184 = vector.multi_reduction <add>, %183, %cst_81 [1] : vector<1x256xf32> to vector<1xf32>
      %185 = vector.shape_cast %184 : vector<1xf32> to vector<1x1xf32>
      %cst_82 = arith.constant 1.000000e-24 : f32
      %186 = vector.broadcast %cst_82 : f32 to vector<1x1xf32>
      %187 = arith.maximumf %185, %186 : vector<1x1xf32>
      %188 = math.rsqrt %187 : vector<1x1xf32>
      %189 = vector.broadcast %188 : vector<1x1xf32> to vector<1x256xf32>
      %190 = arith.mulf %182, %189 : vector<1x256xf32>
      %c0_83 = arith.constant 0 : index
      %c0_84 = arith.constant 0 : index
      %191 = vector.load %arg13[%c0_83, %c0_84] : memref<2x256xf32, #tpu.memory_space<vmem>>, vector<1x256xf32>
      tpu.vector_store %arg13[%c0_83, %c0_84], %190 {strides = array<i32>} : memref<2x256xf32, #tpu.memory_space<vmem>>, vector<1x256xf32>,
      %c1 = arith.constant 1 : index
      %192 = memref.load %arg1[%c1] : memref<2xi32, #tpu.memory_space<smem>>
      %c16_i32 = arith.constant 16 : i32
      %193 = arith.addi %c16_i32, %192 : i32
      %c1_i32_85 = arith.constant 1 : i32
      %194 = arith.subi %193, %c1_i32_85 : i32
      %195 = arith.index_cast %194 : i32 to index
      %c0_86 = arith.constant 0 : index
      %196 = vector.load %arg14[%195, %c0_86] : memref<32x256xf32, #tpu.memory_space<vmem>>, vector<1x256xf32>
      %197 = arith.mulf %196, %196 : vector<1x256xf32>
      %cst_87 = arith.constant dense<0.000000e+00> : vector<1xf32>
      %198 = vector.multi_reduction <add>, %197, %cst_87 [1] : vector<1x256xf32> to vector<1xf32>
      %199 = vector.shape_cast %198 : vector<1xf32> to vector<1x1xf32>
      %cst_88 = arith.constant 2.560000e+02 : f32
      %200 = vector.broadcast %cst_88 : f32 to vector<1x1xf32>
      %201 = arith.divf %199, %200 : vector<1x1xf32>
      %cst_89 = arith.constant 9.99999997E-7 : f32
      %202 = vector.broadcast %cst_89 : f32 to vector<1x1xf32>
      %203 = arith.addf %201, %202 : vector<1x1xf32>
      %204 = math.rsqrt %203 : vector<1x1xf32>
      %205 = vector.broadcast %204 : vector<1x1xf32> to vector<1x256xf32>
      %206 = arith.mulf %196, %205 : vector<1x256xf32>
      %207 = arith.mulf %206, %166 : vector<1x256xf32>
      %208 = arith.mulf %207, %207 : vector<1x256xf32>
      %cst_90 = arith.constant dense<0.000000e+00> : vector<1xf32>
      %209 = vector.multi_reduction <add>, %208, %cst_90 [1] : vector<1x256xf32> to vector<1xf32>
      %210 = vector.shape_cast %209 : vector<1xf32> to vector<1x1xf32>
      %cst_91 = arith.constant 1.000000e-24 : f32
      %211 = vector.broadcast %cst_91 : f32 to vector<1x1xf32>
      %212 = arith.maximumf %210, %211 : vector<1x1xf32>
      %213 = math.rsqrt %212 : vector<1x1xf32>
      %214 = vector.broadcast %213 : vector<1x1xf32> to vector<1x256xf32>
      %215 = arith.mulf %207, %214 : vector<1x256xf32>
      %c1_92 = arith.constant 1 : index
      %c0_93 = arith.constant 0 : index
      %216 = vector.load %arg13[%c1_92, %c0_93] : memref<2x256xf32, #tpu.memory_space<vmem>>, vector<1x256xf32>
      tpu.vector_store %arg13[%c1_92, %c0_93], %215 {strides = array<i32>} : memref<2x256xf32, #tpu.memory_space<vmem>>, vector<1x256xf32>,
    } else {
    }
    return
  }
  func.func @transform_0(%arg0: i32, %arg1: memref<2xi32, #tpu.memory_space<smem>>) -> (i32, i32) {
    %c0_i32 = arith.constant 0 : i32
    %c0_i32_0 = arith.constant 0 : i32
    %c0_i32_1 = arith.constant 0 : i32
    return %c0_i32, %c0_i32_0 : i32, i32
  }
  func.func @transform_1(%arg0: i32, %arg1: memref<2xi32, #tpu.memory_space<smem>>) -> (i32, i32) {
    %c0_i32 = arith.constant 0 : i32
    %c0_i32_0 = arith.constant 0 : i32
    %c0_i32_1 = arith.constant 0 : i32
    return %c0_i32, %c0_i32_0 : i32, i32
  }
  func.func @transform_2(%arg0: i32, %arg1: memref<2xi32, #tpu.memory_space<smem>>) -> (i32, i32) {
    %c0_i32 = arith.constant 0 : i32
    %c0_i32_0 = arith.constant 0 : i32
    %c0_i32_1 = arith.constant 0 : i32
    return %c0_i32, %c0_i32_0 : i32, i32
  }
  func.func @transform_3(%arg0: i32, %arg1: memref<2xi32, #tpu.memory_space<smem>>) -> (i32, i32) {
    %c0_i32 = arith.constant 0 : i32
    %c0_i32_0 = arith.constant 0 : i32
    %c0_i32_1 = arith.constant 0 : i32
    return %c0_i32, %c0_i32_0 : i32, i32
  }
  func.func @transform_4(%arg0: i32, %arg1: memref<2xi32, #tpu.memory_space<smem>>) -> (i32, i32, i32) {
    %c0_i32 = arith.constant 0 : i32
    %c0_i32_0 = arith.constant 0 : i32
    %c0_i32_1 = arith.constant 0 : i32
    return %arg0, %c0_i32, %c0_i32_0 : i32, i32, i32
  }
  func.func @transform_5(%arg0: i32, %arg1: memref<2xi32, #tpu.memory_space<smem>>) -> (i32, i32, i32) {
    %c0_i32 = arith.constant 0 : i32
    %c0_i32_0 = arith.constant 0 : i32
    %c0_i32_1 = arith.constant 0 : i32
    return %arg0, %c0_i32, %c0_i32_0 : i32, i32, i32
  }
  func.func @transform_6(%arg0: i32, %arg1: memref<2xi32, #tpu.memory_space<smem>>) -> (i32, i32, i32) {
    %c0_i32 = arith.constant 0 : i32
    %c0_i32_0 = arith.constant 0 : i32
    %c0_i32_1 = arith.constant 0 : i32
    return %arg0, %c0_i32, %c0_i32_0 : i32, i32, i32
  }
  func.func @transform_7(%arg0: i32, %arg1: memref<2xi32, #tpu.memory_space<smem>>) -> (i32, i32, i32) {
    %c0_i32 = arith.constant 0 : i32
    %c0_i32_0 = arith.constant 0 : i32
    %c0_i32_1 = arith.constant 0 : i32
    return %arg0, %c0_i32, %c0_i32_0 : i32, i32, i32
  }
  func.func @transform_8(%arg0: i32, %arg1: memref<2xi32, #tpu.memory_space<smem>>) -> (i32, i32, i32) {
    %c0_i32 = arith.constant 0 : i32
    %c0_i32_0 = arith.constant 0 : i32
    %c0_i32_1 = arith.constant 0 : i32
    return %arg0, %c0_i32, %c0_i32_0 : i32, i32, i32
  }
  func.func @transform_9(%arg0: i32, %arg1: memref<2xi32, #tpu.memory_space<smem>>) -> (i32, i32, i32) {
    %c0_i32 = arith.constant 0 : i32
    %c0_i32_0 = arith.constant 0 : i32
    %c0_i32_1 = arith.constant 0 : i32
    return %arg0, %c0_i32, %c0_i32_0 : i32, i32, i32
  }
  func.func @transform_10(%arg0: i32, %arg1: memref<2xi32, #tpu.memory_space<smem>>) -> (i32, i32, i32) {
    %c0_i32 = arith.constant 0 : i32
    %c0_i32_0 = arith.constant 0 : i32
    %c0_i32_1 = arith.constant 0 : i32
    return %arg0, %c0_i32, %c0_i32_0 : i32, i32, i32
  }
  func.func @transform_11(%arg0: i32, %arg1: memref<2xi32, #tpu.memory_space<smem>>) -> (i32, i32) {
    %c0_i32 = arith.constant 0 : i32
    %c0_i32_0 = arith.constant 0 : i32
    %c0_i32_1 = arith.constant 0 : i32
    return %c0_i32, %c0_i32_0 : i32, i32
  }
}

</mosaic_0001>

<llo_original>
// kernel: tpu_custom_call.1
$region0: #{tpu_custom_call.1}
  #allocation0 [shape = 'u32[]', space=smem, size = 0x4, offset = 0x4, fixed_abs, tag = 'smem constant byte address 0x4 - core index']
  #allocation1 [shape = 'u32[144,128]{1,0:T(1,128)}', space=vmem, size = 0x12000, scoped, tag = 'internal scratch']
  #allocation2 [shape = 'f32[32,256]{1,0:T(8,128)}', space=vmem, size = 0x8000, scoped, tag = 'scratch operand']
  #allocation3 [shape = 'f32[32,256]{1,0:T(8,128)}', space=vmem, size = 0x8000, scoped, tag = 'scratch operand']
  #allocation4 [shape = 'f32[32,16]{1,0:T(8,128)}', space=vmem, size = 0x4000, scoped, tag = 'scratch operand']
  #allocation5 [shape = 's32[1]{0}', space=sflag, size = 0x4, scoped, tag = 'scoped memory for tpu_custom_call.1']
  #allocation6 [shape = 'u8[512]{0}', space=smem, size = 0x200, scoped, tag = 'prefetched SMEM operand 0']
  %s0 = inlined_call_operand.hbm [shape: s32[2], index: 0, kind: input, shape index: {}]
  %s1 = inlined_call_operand.hbm [shape: f32[32,256], index: 1, kind: input, shape index: {}]
  %s2 = inlined_call_operand.hbm [shape: f32[32,256], index: 2, kind: input, shape index: {}]
  %s3 = inlined_call_operand.hbm [shape: f32[32,256], index: 3, kind: input, shape index: {}]
  %s4 = inlined_call_operand.hbm [shape: f32[1,256], index: 4, kind: input, shape index: {}]
  %s5 = inlined_call_operand.hbm [shape: f32[2,1,256], index: 5, kind: input, shape index: {}]
  %s6 = inlined_call_operand.hbm [shape: bf16[2,256,1280], index: 6, kind: input, shape index: {}]
  %s7 = inlined_call_operand.hbm [shape: f32[2,1,1280], index: 7, kind: input, shape index: {}]
  %s8 = inlined_call_operand.hbm [shape: bf16[2,256,256], index: 8, kind: input, shape index: {}]
  %s9 = inlined_call_operand.hbm [shape: f32[2,1,256], index: 9, kind: input, shape index: {}]
  %s10 = inlined_call_operand.hbm [shape: bf16[2,256,1024], index: 10, kind: input, shape index: {}]
  %s11 = inlined_call_operand.hbm [shape: bf16[2,512,256], index: 11, kind: input, shape index: {}]
  %s12 = inlined_call_operand.hbm [shape: f32[2,256], index: 12, kind: output, shape index: {}]
  %s13 = sld [smem:[#allocation0]]
  $region129: #{tpu_custom_call.1} parent=0
    _
  %s15 = ssub.s32 1, %s13
  %s16 = scalar_select 0, %s15, %s13
  %18 = dma.hbm_to_smem %s0, 16, [#allocation6], [#allocation5]
  %19 = dma.done [#allocation5], 16
  %20 = sfence
  $region1: #{tpu_custom_call.1} parent=0
    #allocation7 [shape = 'u8[32768]{0}', space=vmem, size = 0x8000, scoped, tag = 'input window, operand 1, single buffered']
    #allocation8 [shape = 's32[2]{0}', space=sflag, size = 0x8, scoped, tag = 'scoped memory for tpu_custom_call.1']
    #allocation9 [shape = 's32[2]{0}', space=sflag, size = 0x8, scoped, tag = 'scoped memory for tpu_custom_call.1']
    #allocation10 [shape = 'u8[32768]{0}', space=vmem, size = 0x8000, scoped, tag = 'input window, operand 2, single buffered']
    #allocation11 [shape = 's32[1]{0}', space=sflag, size = 0x4, scoped, tag = 'scoped memory for tpu_custom_call.1']
    #allocation12 [shape = 'u8[32768]{0}', space=vmem, size = 0x8000, scoped, tag = 'input window, operand 3, single buffered']
    #allocation13 [shape = 'u8[1024]{0}', space=vmem, size = 0x400, scoped, tag = 'input window, operand 4, single buffered']
    #allocation14 [shape = 's32[1]{0}', space=sflag, size = 0x4, scoped, tag = 'scoped memory for tpu_custom_call.1']
    #allocation15 [shape = 'u8[2048]{0}', space=vmem, size = 0x800, scoped, tag = 'input window, operand 5']
    #allocation16 [shape = 'u8[1310720]{0}', space=vmem, size = 0x140000, scoped, tag = 'input window, operand 6']
    #allocation17 [shape = 'u8[10240]{0}', space=vmem, size = 0x2800, scoped, tag = 'input window, operand 7']
    #allocation18 [shape = 'u8[262144]{0}', space=vmem, size = 0x40000, scoped, tag = 'input window, operand 8']
    #allocation19 [shape = 'u8[2048]{0}', space=vmem, size = 0x800, scoped, tag = 'input window, operand 9']
    #allocation20 [shape = 'u8[1048576]{0}', space=vmem, size = 0x100000, scoped, tag = 'input window, operand 10']
    #allocation21 [shape = 'u8[524288]{0}', space=vmem, size = 0x80000, scoped, tag = 'input window, operand 11']
    #allocation22 [shape = 'u8[2048]{0}', space=vmem, size = 0x800, scoped, tag = 'output window, operand 0, single buffered']
    %21 = vsyncpa [#allocation8], 0
    %22 = vsyncpa [#allocation11], 0
    %23 = vsyncpa [#allocation14], 0
    %24 = vsyncpa [#allocation9], 0
    loop: start=0, step=1, limit=4
    $region2: #{tpu_custom_call.1} parent=1 // loop_pre_header
      _
    $region3: #{tpu_custom_call.1} parent=1 // loop_header
      %s26 = sphi 0, %s30
      %p27 = scmp.ge.s32.totalorder %s26, 4
      %s34 = sphi 0, %s34
      %s36 = sphi 0, %s34
      %s37 = sphi 0, %s36
      %s51 = sphi 0, %s37
      %s55 = sphi 0, %s55
      %s57 = sphi 0, %s55
      %s58 = sphi 0, %s57
      %s72 = sphi 0, %s58
      %s76 = sphi 0, %s76
      %s78 = sphi 0, %s76
      %s79 = sphi 0, %s78
      %s93 = sphi 0, %s79
      %s97 = sphi 0, %s97
      %s99 = sphi 0, %s97
      %s100 = sphi 0, %s99
      %s114 = sphi 0, %s100
      %s120 = sphi 0, %s122
      %s123 = sphi 0, %s120
      %s124 = sphi 0, %s123
      %s140 = sphi 0, %s124
      %s146 = sphi 0, %s148
      %s149 = sphi 0, %s146
      %s150 = sphi 0, %s149
      %s166 = sphi 0, %s150
      %s172 = sphi 0, %s174
      %s175 = sphi 0, %s172
      %s176 = sphi 0, %s175
      %s192 = sphi 0, %s176
      %s198 = sphi 0, %s200
      %s201 = sphi 0, %s198
      %s202 = sphi 0, %s201
      %s218 = sphi 0, %s202
      %s224 = sphi 0, %s226
      %s227 = sphi 0, %s224
      %s228 = sphi 0, %s227
      %s244 = sphi 0, %s228
      %s250 = sphi 0, %s252
      %s253 = sphi 0, %s250
      %s254 = sphi 0, %s253
      %s270 = sphi 0, %s254
      %s276 = sphi 0, %s278
      %s279 = sphi 0, %s276
      %s280 = sphi 0, %s279
      %s296 = sphi 0, %s280
      %s300 = sphi 0, %s300
      %s302 = sphi 0, %s300
      %s303 = sphi 0, %s302
      %s317 = sphi 0, %s303
    $region4: #{tpu_custom_call.1} parent=1 // loop_header_branch
      %29 = sbr.rel (%p27) target = $region8
    $region5: #{tpu_custom_call.1} parent=1 // loop_body
      %s31 = ssub.s32 %s26, 1
      %s32 = ssub.s32 %s26, 2
      %s33 = sadd.s32 %s26, 1
      %s35 = sadd.s32 %s34, 1
      %p38 = scmp.eq.s32.totalorder %s26, 1
      %p39 = scmp.ne.s32.totalorder %s34, %s36
      %p40 = scmp.eq.s32.totalorder %s26, 0
      %p41 = por %p39, %p40
      %p42 = scmp.ne.s32.totalorder %s34, %s36
      %p43 = scmp.eq.s32.totalorder %s31, 1
      %p44 = por %p42, %p43
      %p45 = scmp.ne.s32.totalorder %s36, %s37
      %p46 = scmp.eq.s32.totalorder %s31, 0
      %p47 = por %p45, %p46
      %p48 = scmp.ne.s32.totalorder %s36, %s37
      %p49 = scmp.eq.s32.totalorder %s32, 1
      %p50 = por %p48, %p49
      %p52 = scmp.ne.s32.totalorder %s37, %s51
      %p53 = scmp.eq.s32.totalorder %s32, 0
      %p54 = por %p52, %p53
      %s56 = sadd.s32 %s55, 1
      %p59 = scmp.eq.s32.totalorder %s26, 1
      %p60 = scmp.ne.s32.totalorder %s55, %s57
      %p61 = scmp.eq.s32.totalorder %s26, 0
      %p62 = por %p60, %p61
      %p63 = scmp.ne.s32.totalorder %s55, %s57
      %p64 = scmp.eq.s32.totalorder %s31, 1
      %p65 = por %p63, %p64
      %p66 = scmp.ne.s32.totalorder %s57, %s58
      %p67 = scmp.eq.s32.totalorder %s31, 0
      %p68 = por %p66, %p67
      %p69 = scmp.ne.s32.totalorder %s57, %s58
      %p70 = scmp.eq.s32.totalorder %s32, 1
      %p71 = por %p69, %p70
      %p73 = scmp.ne.s32.totalorder %s58, %s72
      %p74 = scmp.eq.s32.totalorder %s32, 0
      %p75 = por %p73, %p74
      %s77 = sadd.s32 %s76, 1
      %p80 = scmp.eq.s32.totalorder %s26, 1
      %p81 = scmp.ne.s32.totalorder %s76, %s78
      %p82 = scmp.eq.s32.totalorder %s26, 0
      %p83 = por %p81, %p82
      %p84 = scmp.ne.s32.totalorder %s76, %s78
      %p85 = scmp.eq.s32.totalorder %s31, 1
      %p86 = por %p84, %p85
      %p87 = scmp.ne.s32.totalorder %s78, %s79
      %p88 = scmp.eq.s32.totalorder %s31, 0
      %p89 = por %p87, %p88
      %p90 = scmp.ne.s32.totalorder %s78, %s79
      %p91 = scmp.eq.s32.totalorder %s32, 1
      %p92 = por %p90, %p91
      %p94 = scmp.ne.s32.totalorder %s79, %s93
      %p95 = scmp.eq.s32.totalorder %s32, 0
      %p96 = por %p94, %p95
      %s98 = sadd.s32 %s97, 1
      %p101 = scmp.eq.s32.totalorder %s26, 1
      %p102 = scmp.ne.s32.totalorder %s97, %s99
      %p103 = scmp.eq.s32.totalorder %s26, 0
      %p104 = por %p102, %p103
      %p105 = scmp.ne.s32.totalorder %s97, %s99
      %p106 = scmp.eq.s32.totalorder %s31, 1
      %p107 = por %p105, %p106
      %p108 = scmp.ne.s32.totalorder %s99, %s100
      %p109 = scmp.eq.s32.totalorder %s31, 0
      %p110 = por %p108, %p109
      %p111 = scmp.ne.s32.totalorder %s99, %s100
      %p112 = scmp.eq.s32.totalorder %s32, 1
      %p113 = por %p111, %p112
      %p115 = scmp.ne.s32.totalorder %s100, %s114
      %p116 = scmp.eq.s32.totalorder %s32, 0
      %p117 = por %p115, %p116
      %s118 = ssub.s32 %s26, %s33
      %p119 = scmp.eq.s32.totalorder %s118, 0
      %s121 = sadd.s32 %s120, 1
      %s122 = scalar_select %p119, %s120, %s121
      %p125 = pneg %p119
      %p126 = scmp.eq.s32.totalorder %s26, 1
      %p127 = por %p125, %p126
      %p128 = scmp.ne.s32.totalorder %s120, %s123
      %p129 = scmp.eq.s32.totalorder %s26, 0
      %p130 = por %p128, %p129
      %p131 = scmp.ne.s32.totalorder %s120, %s123
      %p132 = scmp.eq.s32.totalorder %s31, 1
      %p133 = por %p131, %p132
      %p134 = scmp.ne.s32.totalorder %s123, %s124
      %p135 = scmp.eq.s32.totalorder %s31, 0
      %p136 = por %p134, %p135
      %p137 = scmp.ne.s32.totalorder %s123, %s124
      %p138 = scmp.eq.s32.totalorder %s32, 1
      %p139 = por %p137, %p138
      %p141 = scmp.ne.s32.totalorder %s124, %s140
      %p142 = scmp.eq.s32.totalorder %s32, 0
      %p143 = por %p141, %p142
      %s144 = ssub.s32 %s26, %s33
      %p145 = scmp.eq.s32.totalorder %s144, 0
      %s147 = sadd.s32 %s146, 1
      %s148 = scalar_select %p145, %s146, %s147
      %p151 = pneg %p145
      %p152 = scmp.eq.s32.totalorder %s26, 1
      %p153 = por %p151, %p152
      %p154 = scmp.ne.s32.totalorder %s146, %s149
      %p155 = scmp.eq.s32.totalorder %s26, 0
      %p156 = por %p154, %p155
      %p157 = scmp.ne.s32.totalorder %s146, %s149
      %p158 = scmp.eq.s32.totalorder %s31, 1
      %p159 = por %p157, %p158
      %p160 = scmp.ne.s32.totalorder %s149, %s150
      %p161 = scmp.eq.s32.totalorder %s31, 0
      %p162 = por %p160, %p161
      %p163 = scmp.ne.s32.totalorder %s149, %s150
      %p164 = scmp.eq.s32.totalorder %s32, 1
      %p165 = por %p163, %p164
      %p167 = scmp.ne.s32.totalorder %s150, %s166
      %p168 = scmp.eq.s32.totalorder %s32, 0
      %p169 = por %p167, %p168
      %s170 = ssub.s32 %s26, %s33
      %p171 = scmp.eq.s32.totalorder %s170, 0
      %s173 = sadd.s32 %s172, 1
      %s174 = scalar_select %p171, %s172, %s173
      %p177 = pneg %p171
      %p178 = scmp.eq.s32.totalorder %s26, 1
      %p179 = por %p177, %p178
      %p180 = scmp.ne.s32.totalorder %s172, %s175
      %p181 = scmp.eq.s32.totalorder %s26, 0
      %p182 = por %p180, %p181
      %p183 = scmp.ne.s32.totalorder %s172, %s175
      %p184 = scmp.eq.s32.totalorder %s31, 1
      %p185 = por %p183, %p184
      %p186 = scmp.ne.s32.totalorder %s175, %s176
      %p187 = scmp.eq.s32.totalorder %s31, 0
      %p188 = por %p186, %p187
      %p189 = scmp.ne.s32.totalorder %s175, %s176
      %p190 = scmp.eq.s32.totalorder %s32, 1
      %p191 = por %p189, %p190
      %p193 = scmp.ne.s32.totalorder %s176, %s192
      %p194 = scmp.eq.s32.totalorder %s32, 0
      %p195 = por %p193, %p194
      %s196 = ssub.s32 %s26, %s33
      %p197 = scmp.eq.s32.totalorder %s196, 0
      %s199 = sadd.s32 %s198, 1
      %s200 = scalar_select %p197, %s198, %s199
      %p203 = pneg %p197
      %p204 = scmp.eq.s32.totalorder %s26, 1
      %p205 = por %p203, %p204
      %p206 = scmp.ne.s32.totalorder %s198, %s201
      %p207 = scmp.eq.s32.totalorder %s26, 0
      %p208 = por %p206, %p207
      %p209 = scmp.ne.s32.totalorder %s198, %s201
      %p210 = scmp.eq.s32.totalorder %s31, 1
      %p211 = por %p209, %p210
      %p212 = scmp.ne.s32.totalorder %s201, %s202
      %p213 = scmp.eq.s32.totalorder %s31, 0
      %p214 = por %p212, %p213
      %p215 = scmp.ne.s32.totalorder %s201, %s202
      %p216 = scmp.eq.s32.totalorder %s32, 1
      %p217 = por %p215, %p216
      %p219 = scmp.ne.s32.totalorder %s202, %s218
      %p220 = scmp.eq.s32.totalorder %s32, 0
      %p221 = por %p219, %p220
      %s222 = ssub.s32 %s26, %s33
      %p223 = scmp.eq.s32.totalorder %s222, 0
      %s225 = sadd.s32 %s224, 1
      %s226 = scalar_select %p223, %s224, %s225
      %p229 = pneg %p223
      %p230 = scmp.eq.s32.totalorder %s26, 1
      %p231 = por %p229, %p230
      %p232 = scmp.ne.s32.totalorder %s224, %s227
      %p233 = scmp.eq.s32.totalorder %s26, 0
      %p234 = por %p232, %p233
      %p235 = scmp.ne.s32.totalorder %s224, %s227
      %p236 = scmp.eq.s32.totalorder %s31, 1
      %p237 = por %p235, %p236
      %p238 = scmp.ne.s32.totalorder %s227, %s228
      %p239 = scmp.eq.s32.totalorder %s31, 0
      %p240 = por %p238, %p239
      %p241 = scmp.ne.s32.totalorder %s227, %s228
      %p242 = scmp.eq.s32.totalorder %s32, 1
      %p243 = por %p241, %p242
      %p245 = scmp.ne.s32.totalorder %s228, %s244
      %p246 = scmp.eq.s32.totalorder %s32, 0
      %p247 = por %p245, %p246
      %s248 = ssub.s32 %s26, %s33
      %p249 = scmp.eq.s32.totalorder %s248, 0
      %s251 = sadd.s32 %s250, 1
      %s252 = scalar_select %p249, %s250, %s251
      %p255 = pneg %p249
      %p256 = scmp.eq.s32.totalorder %s26, 1
      %p257 = por %p255, %p256
      %p258 = scmp.ne.s32.totalorder %s250, %s253
      %p259 = scmp.eq.s32.totalorder %s26, 0
      %p260 = por %p258, %p259
      %p261 = scmp.ne.s32.totalorder %s250, %s253
      %p262 = scmp.eq.s32.totalorder %s31, 1
      %p263 = por %p261, %p262
      %p264 = scmp.ne.s32.totalorder %s253, %s254
      %p265 = scmp.eq.s32.totalorder %s31, 0
      %p266 = por %p264, %p265
      %p267 = scmp.ne.s32.totalorder %s253, %s254
      %p268 = scmp.eq.s32.totalorder %s32, 1
      %p269 = por %p267, %p268
      %p271 = scmp.ne.s32.totalorder %s254, %s270
      %p272 = scmp.eq.s32.totalorder %s32, 0
      %p273 = por %p271, %p272
      %s274 = ssub.s32 %s26, %s33
      %p275 = scmp.eq.s32.totalorder %s274, 0
      %s277 = sadd.s32 %s276, 1
      %s278 = scalar_select %p275, %s276, %s277
      %p281 = pneg %p275
      %p282 = scmp.eq.s32.totalorder %s26, 1
      %p283 = por %p281, %p282
      %p284 = scmp.ne.s32.totalorder %s276, %s279
      %p285 = scmp.eq.s32.totalorder %s26, 0
      %p286 = por %p284, %p285
      %p287 = scmp.ne.s32.totalorder %s276, %s279
      %p288 = scmp.eq.s32.totalorder %s31, 1
      %p289 = por %p287, %p288
      %p290 = scmp.ne.s32.totalorder %s279, %s280
      %p291 = scmp.eq.s32.totalorder %s31, 0
      %p292 = por %p290, %p291
      %p293 = scmp.ne.s32.totalorder %s279, %s280
      %p294 = scmp.eq.s32.totalorder %s32, 1
      %p295 = por %p293, %p294
      %p297 = scmp.ne.s32.totalorder %s280, %s296
      %p298 = scmp.eq.s32.totalorder %s32, 0
      %p299 = por %p297, %p298
      %s301 = sadd.s32 %s300, 1
      %p304 = scmp.eq.s32.totalorder %s26, 1
      %p305 = scmp.ne.s32.totalorder %s300, %s302
      %p306 = scmp.eq.s32.totalorder %s26, 0
      %p307 = por %p305, %p306
      %p308 = scmp.ne.s32.totalorder %s300, %s302
      %p309 = scmp.eq.s32.totalorder %s31, 1
      %p310 = por %p308, %p309
      %p311 = scmp.ne.s32.totalorder %s302, %s303
      %p312 = scmp.eq.s32.totalorder %s31, 0
      %p313 = por %p311, %p312
      %p314 = scmp.ne.s32.totalorder %s302, %s303
      %p315 = scmp.eq.s32.totalorder %s32, 1
      %p316 = por %p314, %p315
      %p318 = scmp.ne.s32.totalorder %s303, %s317
      %p319 = scmp.eq.s32.totalorder %s32, 0
      %p320 = por %p318, %p319
      %p321 = scmp.le.s32.totalorder 1, %s26
      %p322 = scmp.lt.s32.totalorder %s26, 3
      %p323 = pnand %p321, %p322
      %p324 = pneg %p323
      // Predicated region
      $region9: #{tpu_custom_call.1} parent=5 // pred_check
        _
      $region10: #{tpu_custom_call.1} parent=5 // pred_check_branch
        %326 = sbr.rel (%p323) target = $region12
      $region11: #{tpu_custom_call.1} parent=5 // pred_region
        %s327 = ssub.s32 %s26, 1
        // Predicated region
        $region13: #{tpu_custom_call.1} parent=11 // pred_check
          %p328 = pneg %p47
        $region14: #{tpu_custom_call.1} parent=11 // pred_check_branch
          %330 = sbr.rel (%p328) target = $region16
        $region15: #{tpu_custom_call.1} parent=11 // pred_region
          %s332 = ssub.s32 1024, 1024
          %333 = vsyncadd [#allocation8], %s332
          %s334 = sshll.u32 [#allocation7], 4
          %s335 = int_to_ptr.vmem [resolvable:$true] %s334
          %340 = dma.hbm_to_vmem [thread:$0]  %s1, 1024, %s335, [#allocation8], 256, 256, 16
        $region16: #{tpu_custom_call.1} parent=11 // pred_fallthru
          _
        // Predicated region
        $region17: #{tpu_custom_call.1} parent=11 // pred_check
          %p341 = pneg %p68
        $region18: #{tpu_custom_call.1} parent=11 // pred_check_branch
          %343 = sbr.rel (%p341) target = $region20
        $region19: #{tpu_custom_call.1} parent=11 // pred_region
          %s345 = ssub.s32 1024, 1024
          %346 = vsyncadd [#allocation11], %s345
          %s347 = sshll.u32 [#allocation10], 4
          %s348 = int_to_ptr.vmem [resolvable:$true] %s347
          %353 = dma.hbm_to_vmem [thread:$0]  %s2, 1024, %s348, [#allocation11], 256, 256, 16
        $region20: #{tpu_custom_call.1} parent=11 // pred_fallthru
          _
        // Predicated region
        $region21: #{tpu_custom_call.1} parent=11 // pred_check
          %p354 = pneg %p89
        $region22: #{tpu_custom_call.1} parent=11 // pred_check_branch
          %356 = sbr.rel (%p354) target = $region24
        $region23: #{tpu_custom_call.1} parent=11 // pred_region
          %s358 = ssub.s32 1024, 1024
          %359 = vsyncadd [#allocation11], %s358
          %s360 = sshll.u32 [#allocation12], 4
          %s361 = int_to_ptr.vmem [resolvable:$true] %s360
          %366 = dma.hbm_to_vmem [thread:$0]  %s3, 1024, %s361, [#allocation11], 256, 256, 16
        $region24: #{tpu_custom_call.1} parent=11 // pred_fallthru
          _
        // Predicated region
        $region25: #{tpu_custom_call.1} parent=11 // pred_check
          %p367 = pneg %p110
        $region26: #{tpu_custom_call.1} parent=11 // pred_check_branch
          %369 = sbr.rel (%p367) target = $region28
        $region27: #{tpu_custom_call.1} parent=11 // pred_region
          %s371 = ssub.s32 32, 32
          %372 = vsyncadd [#allocation14], %s371
          %s374 = sshll.u32 [#allocation13], 4
          %s375 = int_to_ptr.vmem [resolvable:$true] %s374
          %377 = dma.hbm_to_vmem [thread:$0]  %s4, 32, %s375, [#allocation14]
        $region28: #{tpu_custom_call.1} parent=11 // pred_fallthru
          _
      $region12: #{tpu_custom_call.1} parent=5 // pred_fallthru
        _
      %p378 = scmp.lt.s32.totalorder %s26, 2
      // Predicated region
      $region29: #{tpu_custom_call.1} parent=5 // pred_check
        %p379 = pneg %p378
      $region30: #{tpu_custom_call.1} parent=5 // pred_check_branch
        %381 = sbr.rel (%p379) target = $region32
      $region31: #{tpu_custom_call.1} parent=5 // pred_region
        // Predicated region
        $region33: #{tpu_custom_call.1} parent=31 // pred_check
          %p382 = pneg %p130
        $region34: #{tpu_custom_call.1} parent=31 // pred_check_branch
          %384 = sbr.rel (%p382) target = $region36
        $region35: #{tpu_custom_call.1} parent=31 // pred_region
          %s385 = sand.u32 %s26, 1
          %s386 = scalar_lea.sflag [#allocation8], %s385
          %s387 = sand.u32 %s120, 1
          %s388 = smul.addr %s387, 2
          %s389 = scalar_lea.vmem [#allocation15], %s388
          %s391 = ssub.s32 32, 32
          %392 = vsyncadd %s386, %s391
          %s393 = smul.addr %s26, 2
          %s394 = smul.addr %s393, 16
          %s395 = scalar_lea.hbm %s5, %s394
          %s397 = sshll.u32 %s389, 4
          %s398 = int_to_ptr.vmem [resolvable:$true] %s397
          %400 = dma.hbm_to_vmem [thread:$0]  %s395, 32, %s398, %s386
        $region36: #{tpu_custom_call.1} parent=31 // pred_fallthru
          _
        // Predicated region
        $region37: #{tpu_custom_call.1} parent=31 // pred_check
          %p401 = pneg %p156
        $region38: #{tpu_custom_call.1} parent=31 // pred_check_branch
          %403 = sbr.rel (%p401) target = $region40
        $region39: #{tpu_custom_call.1} parent=31 // pred_region
          %s404 = sand.u32 %s26, 1
          %s405 = scalar_lea.sflag [#allocation8], %s404
          %s406 = sand.u32 %s146, 1
          %s407 = smul.addr %s406, 1280
          %s408 = scalar_lea.vmem [#allocation16], %s407
          %s410 = ssub.s32 20480, 20480
          %411 = vsyncadd %s405, %s410
          %s412 = smul.addr %s26, 320
          %s413 = smul.addr %s412, 64
          %s414 = scalar_lea.hbm %s6, %s413
          %s415 = sshll.u32 %s408, 4
          %s416 = int_to_ptr.vmem [resolvable:$true] %s415
          %421 = dma.hbm_to_vmem [thread:$0]  %s414, 20480, %s416, %s405, 640, 640, 40
        $region40: #{tpu_custom_call.1} parent=31 // pred_fallthru
          _
        // Predicated region
        $region41: #{tpu_custom_call.1} parent=31 // pred_check
          %p422 = pneg %p182
        $region42: #{tpu_custom_call.1} parent=31 // pred_check_branch
          %424 = sbr.rel (%p422) target = $region44
        $region43: #{tpu_custom_call.1} parent=31 // pred_region
          %s425 = sand.u32 %s26, 1
          %s426 = scalar_lea.sflag [#allocation8], %s425
          %s427 = sand.u32 %s172, 1
          %s428 = smul.addr %s427, 10
          %s429 = scalar_lea.vmem [#allocation17], %s428
          %s431 = ssub.s32 160, 160
          %432 = vsyncadd %s426, %s431
          %s433 = smul.addr %s26, 10
          %s434 = smul.addr %s433, 16
          %s435 = scalar_lea.hbm %s7, %s434
          %s437 = sshll.u32 %s429, 4
          %s438 = int_to_ptr.vmem [resolvable:$true] %s437
          %440 = dma.hbm_to_vmem [thread:$0]  %s435, 160, %s438, %s426
        $region44: #{tpu_custom_call.1} parent=31 // pred_fallthru
          _
        // Predicated region
        $region45: #{tpu_custom_call.1} parent=31 // pred_check
          %p441 = pneg %p208
        $region46: #{tpu_custom_call.1} parent=31 // pred_check_branch
          %443 = sbr.rel (%p441) target = $region48
        $region47: #{tpu_custom_call.1} parent=31 // pred_region
          %s444 = sand.u32 %s26, 1
          %s445 = scalar_lea.sflag [#allocation8], %s444
          %s446 = sand.u32 %s198, 1
          %s447 = smul.addr %s446, 256
          %s448 = scalar_lea.vmem [#allocation18], %s447
          %s450 = ssub.s32 4096, 4096
          %451 = vsyncadd %s445, %s450
          %s452 = smul.addr %s26, 64
          %s453 = smul.addr %s452, 64
          %s454 = scalar_lea.hbm %s8, %s453
          %s455 = sshll.u32 %s448, 4
          %s456 = int_to_ptr.vmem [resolvable:$true] %s455
          %461 = dma.hbm_to_vmem [thread:$0]  %s454, 4096, %s456, %s445, 128, 128, 8
        $region48: #{tpu_custom_call.1} parent=31 // pred_fallthru
          _
        // Predicated region
        $region49: #{tpu_custom_call.1} parent=31 // pred_check
          %p462 = pneg %p234
        $region50: #{tpu_custom_call.1} parent=31 // pred_check_branch
          %464 = sbr.rel (%p462) target = $region52
        $region51: #{tpu_custom_call.1} parent=31 // pred_region
          %s465 = sand.u32 %s26, 1
          %s466 = scalar_lea.sflag [#allocation8], %s465
          %s467 = sand.u32 %s224, 1
          %s468 = smul.addr %s467, 2
          %s469 = scalar_lea.vmem [#allocation19], %s468
          %s471 = ssub.s32 32, 32
          %472 = vsyncadd %s466, %s471
          %s473 = smul.addr %s26, 2
          %s474 = smul.addr %s473, 16
          %s475 = scalar_lea.hbm %s9, %s474
          %s477 = sshll.u32 %s469, 4
          %s478 = int_to_ptr.vmem [resolvable:$true] %s477
          %480 = dma.hbm_to_vmem [thread:$0]  %s475, 32, %s478, %s466
        $region52: #{tpu_custom_call.1} parent=31 // pred_fallthru
          _
        // Predicated region
        $region53: #{tpu_custom_call.1} parent=31 // pred_check
          %p481 = pneg %p260
        $region54: #{tpu_custom_call.1} parent=31 // pred_check_branch
          %483 = sbr.rel (%p481) target = $region56
        $region55: #{tpu_custom_call.1} parent=31 // pred_region
          %s484 = sand.u32 %s26, 1
          %s485 = scalar_lea.sflag [#allocation8], %s484
          %s486 = sand.u32 %s250, 1
          %s487 = smul.addr %s486, 1024
          %s488 = scalar_lea.vmem [#allocation20], %s487
          %s490 = ssub.s32 16384, 16384
          %491 = vsyncadd %s485, %s490
          %s492 = smul.addr %s26, 256
          %s493 = smul.addr %s492, 64
          %s494 = scalar_lea.hbm %s10, %s493
          %s495 = sshll.u32 %s488, 4
          %s496 = int_to_ptr.vmem [resolvable:$true] %s495
          %501 = dma.hbm_to_vmem [thread:$0]  %s494, 16384, %s496, %s485, 512, 512, 32
        $region56: #{tpu_custom_call.1} parent=31 // pred_fallthru
          _
        // Predicated region
        $region57: #{tpu_custom_call.1} parent=31 // pred_check
          %p502 = pneg %p286
        $region58: #{tpu_custom_call.1} parent=31 // pred_check_branch
          %504 = sbr.rel (%p502) target = $region60
        $region59: #{tpu_custom_call.1} parent=31 // pred_region
          %s505 = sand.u32 %s26, 1
          %s506 = scalar_lea.sflag [#allocation8], %s505
          %s507 = sand.u32 %s276, 1
          %s508 = smul.addr %s507, 512
          %s509 = scalar_lea.vmem [#allocation21], %s508
          %s511 = ssub.s32 8192, 8192
          %512 = vsyncadd %s506, %s511
          %s513 = smul.addr %s26, 128
          %s514 = smul.addr %s513, 64
          %s515 = scalar_lea.hbm %s11, %s514
          %s516 = sshll.u32 %s509, 4
          %s517 = int_to_ptr.vmem [resolvable:$true] %s516
          %522 = dma.hbm_to_vmem [thread:$0]  %s515, 8192, %s517, %s506, 128, 128, 8
        $region60: #{tpu_custom_call.1} parent=31 // pred_fallthru
          _
      $region32: #{tpu_custom_call.1} parent=5 // pred_fallthru
        _
      %p523 = scmp.le.s32.totalorder 1, %s26
      %p524 = scmp.lt.s32.totalorder %s26, 3
      %p525 = pnand %p523, %p524
      %p526 = pneg %p525
      // Predicated region
      $region61: #{tpu_custom_call.1} parent=5 // pred_check
        _
      $region62: #{tpu_custom_call.1} parent=5 // pred_check_branch
        %528 = sbr.rel (%p525) target = $region64
      $region63: #{tpu_custom_call.1} parent=5 // pred_region
        %s529 = ssub.s32 %s26, 1
        // Predicated region
        $region65: #{tpu_custom_call.1} parent=63 // pred_check
          %p530 = pneg %p47
        $region66: #{tpu_custom_call.1} parent=63 // pred_check_branch
          %532 = sbr.rel (%p530) target = $region68
        $region67: #{tpu_custom_call.1} parent=63 // pred_region
          %533 = dma.done [#allocation8], 1024
        $region68: #{tpu_custom_call.1} parent=63 // pred_fallthru
          _
        // Predicated region
        $region69: #{tpu_custom_call.1} parent=63 // pred_check
          %p534 = pneg %p68
        $region70: #{tpu_custom_call.1} parent=63 // pred_check_branch
          %536 = sbr.rel (%p534) target = $region72
        $region71: #{tpu_custom_call.1} parent=63 // pred_region
          %537 = dma.done [#allocation11], 1024
        $region72: #{tpu_custom_call.1} parent=63 // pred_fallthru
          _
        // Predicated region
        $region73: #{tpu_custom_call.1} parent=63 // pred_check
          %p538 = pneg %p89
        $region74: #{tpu_custom_call.1} parent=63 // pred_check_branch
          %540 = sbr.rel (%p538) target = $region76
        $region75: #{tpu_custom_call.1} parent=63 // pred_region
          %541 = dma.done [#allocation11], 1024
        $region76: #{tpu_custom_call.1} parent=63 // pred_fallthru
          _
        // Predicated region
        $region77: #{tpu_custom_call.1} parent=63 // pred_check
          %p542 = pneg %p110
        $region78: #{tpu_custom_call.1} parent=63 // pred_check_branch
          %544 = sbr.rel (%p542) target = $region80
        $region79: #{tpu_custom_call.1} parent=63 // pred_region
          %545 = dma.done [#allocation14], 32
        $region80: #{tpu_custom_call.1} parent=63 // pred_fallthru
          _
        %s546 = sand.u32 %s31, 1
        %s547 = scalar_lea.sflag [#allocation8], %s546
        %s548 = sand.u32 %s123, 1
        %s549 = smul.addr %s548, 2
        %s550 = scalar_lea.vmem [#allocation15], %s549
        // Predicated region
        $region81: #{tpu_custom_call.1} parent=63 // pred_check
          %p551 = pneg %p136
        $region82: #{tpu_custom_call.1} parent=63 // pred_check_branch
          %553 = sbr.rel (%p551) target = $region84
        $region83: #{tpu_custom_call.1} parent=63 // pred_region
          %554 = dma.done %s547, 32
        $region84: #{tpu_custom_call.1} parent=63 // pred_fallthru
          _
        %s555 = sand.u32 %s31, 1
        %s556 = scalar_lea.sflag [#allocation8], %s555
        %s557 = sand.u32 %s149, 1
        %s558 = smul.addr %s557, 1280
        %s559 = scalar_lea.vmem [#allocation16], %s558
        // Predicated region
        $region85: #{tpu_custom_call.1} parent=63 // pred_check
          %p560 = pneg %p162
        $region86: #{tpu_custom_call.1} parent=63 // pred_check_branch
          %562 = sbr.rel (%p560) target = $region88
        $region87: #{tpu_custom_call.1} parent=63 // pred_region
          %563 = dma.done %s556, 20480
        $region88: #{tpu_custom_call.1} parent=63 // pred_fallthru
          _
        %s564 = sand.u32 %s31, 1
        %s565 = scalar_lea.sflag [#allocation8], %s564
        %s566 = sand.u32 %s175, 1
        %s567 = smul.addr %s566, 10
        %s568 = scalar_lea.vmem [#allocation17], %s567
        // Predicated region
        $region89: #{tpu_custom_call.1} parent=63 // pred_check
          %p569 = pneg %p188
        $region90: #{tpu_custom_call.1} parent=63 // pred_check_branch
          %571 = sbr.rel (%p569) target = $region92
        $region91: #{tpu_custom_call.1} parent=63 // pred_region
          %572 = dma.done %s565, 160
        $region92: #{tpu_custom_call.1} parent=63 // pred_fallthru
          _
        %s573 = sand.u32 %s31, 1
        %s574 = scalar_lea.sflag [#allocation8], %s573
        %s575 = sand.u32 %s201, 1
        %s576 = smul.addr %s575, 256
        %s577 = scalar_lea.vmem [#allocation18], %s576
        // Predicated region
        $region93: #{tpu_custom_call.1} parent=63 // pred_check
          %p578 = pneg %p214
        $region94: #{tpu_custom_call.1} parent=63 // pred_check_branch
          %580 = sbr.rel (%p578) target = $region96
        $region95: #{tpu_custom_call.1} parent=63 // pred_region
          %581 = dma.done %s574, 4096
        $region96: #{tpu_custom_call.1} parent=63 // pred_fallthru
          _
        %s582 = sand.u32 %s31, 1
        %s583 = scalar_lea.sflag [#allocation8], %s582
        %s584 = sand.u32 %s227, 1
        %s585 = smul.addr %s584, 2
        %s586 = scalar_lea.vmem [#allocation19], %s585
        // Predicated region
        $region97: #{tpu_custom_call.1} parent=63 // pred_check
          %p587 = pneg %p240
        $region98: #{tpu_custom_call.1} parent=63 // pred_check_branch
          %589 = sbr.rel (%p587) target = $region100
        $region99: #{tpu_custom_call.1} parent=63 // pred_region
          %590 = dma.done %s583, 32
        $region100: #{tpu_custom_call.1} parent=63 // pred_fallthru
          _
        %s591 = sand.u32 %s31, 1
        %s592 = scalar_lea.sflag [#allocation8], %s591
        %s593 = sand.u32 %s253, 1
        %s594 = smul.addr %s593, 1024
        %s595 = scalar_lea.vmem [#allocation20], %s594
        // Predicated region
        $region101: #{tpu_custom_call.1} parent=63 // pred_check
          %p596 = pneg %p266
        $region102: #{tpu_custom_call.1} parent=63 // pred_check_branch
          %598 = sbr.rel (%p596) target = $region104
        $region103: #{tpu_custom_call.1} parent=63 // pred_region
          %599 = dma.done %s592, 16384
        $region104: #{tpu_custom_call.1} parent=63 // pred_fallthru
          _
        %s600 = sand.u32 %s31, 1
        %s601 = scalar_lea.sflag [#allocation8], %s600
        %s602 = sand.u32 %s279, 1
        %s603 = smul.addr %s602, 512
        %s604 = scalar_lea.vmem [#allocation21], %s603
        // Predicated region
        $region105: #{tpu_custom_call.1} parent=63 // pred_check
          %p605 = pneg %p292
        $region106: #{tpu_custom_call.1} parent=63 // pred_check_branch
          %607 = sbr.rel (%p605) target = $region108
        $region107: #{tpu_custom_call.1} parent=63 // pred_region
          %608 = dma.done %s601, 8192
        $region108: #{tpu_custom_call.1} parent=63 // pred_fallthru
          _
        %p609 = pneg %p47
        %p610 = pneg %p44
        %p611 = pneg %p68
        %p612 = pneg %p65
        %p613 = pneg %p89
        %p614 = pneg %p86
        %p615 = pneg %p110
        %p616 = pneg %p107
        %s617 = sand.u32 %s31, 1
        %s618 = scalar_lea.sflag [#allocation8], %s617
        %s619 = sand.u32 %s123, 1
        %s620 = smul.addr %s619, 2
        %s621 = scalar_lea.vmem [#allocation15], %s620
        %p622 = pneg %p136
        %p623 = pneg %p133
        %s624 = sand.u32 %s31, 1
        %s625 = scalar_lea.sflag [#allocation8], %s624
        %s626 = sand.u32 %s149, 1
        %s627 = smul.addr %s626, 1280
        %s628 = scalar_lea.vmem [#allocation16], %s627
        %p629 = pneg %p162
        %p630 = pneg %p159
        %s631 = sand.u32 %s31, 1
        %s632 = scalar_lea.sflag [#allocation8], %s631
        %s633 = sand.u32 %s175, 1
        %s634 = smul.addr %s633, 10
        %s635 = scalar_lea.vmem [#allocation17], %s634
        %p636 = pneg %p188
        %p637 = pneg %p185
        %s638 = sand.u32 %s31, 1
        %s639 = scalar_lea.sflag [#allocation8], %s638
        %s640 = sand.u32 %s201, 1
        %s641 = smul.addr %s640, 256
        %s642 = scalar_lea.vmem [#allocation18], %s641
        %p643 = pneg %p214
        %p644 = pneg %p211
        %s645 = sand.u32 %s31, 1
        %s646 = scalar_lea.sflag [#allocation8], %s645
        %s647 = sand.u32 %s227, 1
        %s648 = smul.addr %s647, 2
        %s649 = scalar_lea.vmem [#allocation19], %s648
        %p650 = pneg %p240
        %p651 = pneg %p237
        %s652 = sand.u32 %s31, 1
        %s653 = scalar_lea.sflag [#allocation8], %s652
        %s654 = sand.u32 %s253, 1
        %s655 = smul.addr %s654, 1024
        %s656 = scalar_lea.vmem [#allocation20], %s655
        %p657 = pneg %p266
        %p658 = pneg %p263
        %s659 = sand.u32 %s31, 1
        %s660 = scalar_lea.sflag [#allocation8], %s659
        %s661 = sand.u32 %s279, 1
        %s662 = smul.addr %s661, 512
        %s663 = scalar_lea.vmem [#allocation21], %s662
        %p664 = pneg %p292
        %p665 = pneg %p289
        %p666 = pneg %p313
        %p667 = pneg %p310
        %p669 = scmp.eq.s32.totalorder %s31, 0
        // Predicated region
        $region109: #{tpu_custom_call.1} parent=63 // pred_check
          %p670 = pneg %p669
        $region110: #{tpu_custom_call.1} parent=63 // pred_check_branch
          %672 = sbr.rel (%p670) target = $region112
        $region111: #{tpu_custom_call.1} parent=63 // pred_region
          %v673 = vld [vmem:[#allocation7] sm:$0xff]
          %v674 = vld [vmem:[#allocation7 + $0x8] sm:$0xff]
          %v675 = vld [vmem:[#allocation7 + $0x10] sm:$0xff]
          %v676 = vld [vmem:[#allocation7 + $0x18] sm:$0xff]
          %v677 = vld [vmem:[#allocation7 + $0x20] sm:$0xff]
          %v678 = vld [vmem:[#allocation7 + $0x28] sm:$0xff]
          %v679 = vld [vmem:[#allocation7 + $0x30] sm:$0xff]
          %v680 = vld [vmem:[#allocation7 + $0x38] sm:$0xff]
          %681 = vst [vmem:[#allocation2] sm:$0xff] %v673
          %682 = vst [vmem:[#allocation2 + $0x8] sm:$0xff] %v674
          %683 = vst [vmem:[#allocation2 + $0x10] sm:$0xff] %v675
          %684 = vst [vmem:[#allocation2 + $0x18] sm:$0xff] %v676
          %685 = vst [vmem:[#allocation2 + $0x20] sm:$0xff] %v677
          %686 = vst [vmem:[#allocation2 + $0x28] sm:$0xff] %v678
          %687 = vst [vmem:[#allocation2 + $0x30] sm:$0xff] %v679
          %688 = vst [vmem:[#allocation2 + $0x38] sm:$0xff] %v680
          %v689 = vlaneseq
          %v690 = vand.u32 %v689, 127
          %s691 = sld [smem:[#allocation6]]
          %v692 = vstv %s691
          %vm693 = vcmp.lt.s32.totalorder %v690, %v692
          %v694 = vsel %vm693, 0.0, -1e+09
          %vm695 = vcmask 130048
          %696 = vst.msk [vmem:[#allocation4] sm:$0xff] %vm695, %v694
          %697 = vst.msk [vmem:[#allocation4 + $0x8] sm:$0xff] %vm695, %v694
          %s698 = sld [smem:[#allocation6 + $0x1]]
          %v699 = vstv %s698
          %vm700 = vcmp.lt.s32.totalorder %v690, %v699
          %v701 = vsel %vm700, 0.0, -1e+09
          %702 = vst.msk [vmem:[#allocation4 + $0x10] sm:$0xff] %vm695, %v701
          %703 = vst.msk [vmem:[#allocation4 + $0x18] sm:$0xff] %vm695, %v701
        $region112: #{tpu_custom_call.1} parent=63 // pred_fallthru
          _
        %v704 = vld [vmem:[#allocation2] sm:$0xff]
        %v705 = vld [vmem:[#allocation2 + $0x8] sm:$0xff]
        %v706 = vld [vmem:[#allocation2 + $0x10] sm:$0xff]
        %v707 = vld [vmem:[#allocation2 + $0x18] sm:$0xff]
        %v708 = vld [vmem:[#allocation2 + $0x20] sm:$0xff]
        %v709 = vld [vmem:[#allocation2 + $0x28] sm:$0xff]
        %v710 = vld [vmem:[#allocation2 + $0x30] sm:$0xff]
        %v711 = vld [vmem:[#allocation2 + $0x38] sm:$0xff]
        %v712 = vld [vmem:[#allocation10] sm:$0xff]
        %v713 = vld [vmem:[#allocation10 + $0x8] sm:$0xff]
        %v714 = vld [vmem:[#allocation10 + $0x10] sm:$0xff]
        %v715 = vld [vmem:[#allocation10 + $0x18] sm:$0xff]
        %v716 = vld [vmem:[#allocation10 + $0x20] sm:$0xff]
        %v717 = vld [vmem:[#allocation10 + $0x28] sm:$0xff]
        %v718 = vld [vmem:[#allocation10 + $0x30] sm:$0xff]
        %v719 = vld [vmem:[#allocation10 + $0x38] sm:$0xff]
        %v720 = vld [vmem:[#allocation12] sm:$0xff]
        %v721 = vld [vmem:[#allocation12 + $0x8] sm:$0xff]
        %v722 = vld [vmem:[#allocation12 + $0x10] sm:$0xff]
        %v723 = vld [vmem:[#allocation12 + $0x18] sm:$0xff]
        %v724 = vld [vmem:[#allocation12 + $0x20] sm:$0xff]
        %v725 = vld [vmem:[#allocation12 + $0x28] sm:$0xff]
        %v726 = vld [vmem:[#allocation12 + $0x30] sm:$0xff]
        %v727 = vld [vmem:[#allocation12 + $0x38] sm:$0xff]
        %v728 = vld [vmem:[%s550] sm:$0x3]
        %v729 = vmul.f32 %v704, %v704
        %v730 = vmul.f32 %v705, %v705
        %v731 = vmul.f32 %v706, %v706
        %v732 = vmul.f32 %v707, %v707
        %v733 = vmul.f32 %v708, %v708
        %v734 = vmul.f32 %v709, %v709
        %v735 = vmul.f32 %v710, %v710
        %v736 = vmul.f32 %v711, %v711
        %v737 = vadd.f32 %v729, %v730
        %738 = vadd.xlane.f32.xlu0 %v737
        %v739 = vpop.xlane.xlu0 %738
        %v740 = vadd.f32 %v731, %v732
        %741 = vadd.xlane.f32.xlu0 %v740
        %v742 = vpop.xlane.xlu0 %741
        %v743 = vadd.f32 %v733, %v734
        %744 = vadd.xlane.f32.xlu0 %v743
        %v745 = vpop.xlane.xlu0 %744
        %v746 = vadd.f32 %v735, %v736
        %747 = vadd.xlane.f32.xlu0 %v746
        %v748 = vpop.xlane.xlu0 %747
        %v749 = vrcp.pop 256.0
        %v750 = vmul.f32 %v739, %v749
        %v751 = vmul.f32 %v742, %v749
        %v752 = vmul.f32 %v745, %v749
        %v753 = vmul.f32 %v748, %v749
        %v754 = vadd.f32 %v750, 1e-06
        %v755 = vadd.f32 %v751, 1e-06
        %v756 = vadd.f32 %v752, 1e-06
        %v757 = vadd.f32 %v753, 1e-06
        %v758 = vrsqrt.pop %v754
        %v759 = vrsqrt.pop %v755
        %v760 = vrsqrt.pop %v756
        %v761 = vrsqrt.pop %v757
        %v762 = vmul.f32 %v704, %v758
        %v763 = vmul.f32 %v705, %v758
        %v764 = vmul.f32 %v706, %v759
        %v765 = vmul.f32 %v707, %v759
        %v766 = vmul.f32 %v708, %v760
        %v767 = vmul.f32 %v709, %v760
        %v768 = vmul.f32 %v710, %v761
        %v769 = vmul.f32 %v711, %v761
        %v771 = vlaneseq
        %v772 = vshrl.u32 %v771, 7
        %v773 = vsub.s32 0, %v772
        %v774 = vrot.slane %v728, %v773
        %v775 = vlaneseq
        %v776 = vshrl.u32 %v775, 7
        %v777 = vsub.s32 1, %v776
        %v778 = vrot.slane %v728, %v777
        %v781 = vmul.f32 %v762, %v774
        %v782 = vmul.f32 %v763, %v778
        %v783 = vmul.f32 %v764, %v774
        %v784 = vmul.f32 %v765, %v778
        %v785 = vmul.f32 %v766, %v774
        %v786 = vmul.f32 %v767, %v778
        %v787 = vmul.f32 %v768, %v774
        %v788 = vmul.f32 %v769, %v778
        %v789 = vpack.c.bf16 %v783, %v781
        %v790 = vpack.c.bf16 %v784, %v782
        %v791 = vpack.c.bf16 %v787, %v785
        %v792 = vpack.c.bf16 %v788, %v786
        %v793 = vld [vmem:[%s559] sm:$0xff]
        %v794 = vld [vmem:[%s559 + $0x8] sm:$0xff]
        %v795 = vld [vmem:[%s559 + $0x10] sm:$0xff]
        %v796 = vld [vmem:[%s559 + $0x18] sm:$0xff]
        %v797 = vld [vmem:[%s559 + $0x20] sm:$0xff]
        %v798 = vld [vmem:[%s559 + $0x28] sm:$0xff]
        %v799 = vld [vmem:[%s559 + $0x30] sm:$0xff]
        %v800 = vld [vmem:[%s559 + $0x38] sm:$0xff]
        %v801 = vld [vmem:[%s559 + $0x40] sm:$0xff]
        %v802 = vld [vmem:[%s559 + $0x48] sm:$0xff]
        %v803 = vld [vmem:[%s559 + $0x50] sm:$0xff]
        %v804 = vld [vmem:[%s559 + $0x58] sm:$0xff]
        %v805 = vld [vmem:[%s559 + $0x60] sm:$0xff]
        %v806 = vld [vmem:[%s559 + $0x68] sm:$0xff]
        %v807 = vld [vmem:[%s559 + $0x70] sm:$0xff]
        %v808 = vld [vmem:[%s559 + $0x78] sm:$0xff]
        %v809 = vld [vmem:[%s559 + $0x80] sm:$0xff]
        %v810 = vld [vmem:[%s559 + $0x88] sm:$0xff]
        %v811 = vld [vmem:[%s559 + $0x90] sm:$0xff]
        %v812 = vld [vmem:[%s559 + $0x98] sm:$0xff]
        %v813 = vld [vmem:[%s559 + $0xa0] sm:$0xff]
        %v814 = vld [vmem:[%s559 + $0xa8] sm:$0xff]
        %v815 = vld [vmem:[%s559 + $0xb0] sm:$0xff]
        %v816 = vld [vmem:[%s559 + $0xb8] sm:$0xff]
        %v817 = vld [vmem:[%s559 + $0xc0] sm:$0xff]
        %v818 = vld [vmem:[%s559 + $0xc8] sm:$0xff]
        %v819 = vld [vmem:[%s559 + $0xd0] sm:$0xff]
        %v820 = vld [vmem:[%s559 + $0xd8] sm:$0xff]
        %v821 = vld [vmem:[%s559 + $0xe0] sm:$0xff]
        %v822 = vld [vmem:[%s559 + $0xe8] sm:$0xff]
        %v823 = vld [vmem:[%s559 + $0xf0] sm:$0xff]
        %v824 = vld [vmem:[%s559 + $0xf8] sm:$0xff]
        %v825 = vld [vmem:[%s559 + $0x100] sm:$0xff]
        %v826 = vld [vmem:[%s559 + $0x108] sm:$0xff]
        %v827 = vld [vmem:[%s559 + $0x110] sm:$0xff]
        %v828 = vld [vmem:[%s559 + $0x118] sm:$0xff]
        %v829 = vld [vmem:[%s559 + $0x120] sm:$0xff]
        %v830 = vld [vmem:[%s559 + $0x128] sm:$0xff]
        %v831 = vld [vmem:[%s559 + $0x130] sm:$0xff]
        %v832 = vld [vmem:[%s559 + $0x138] sm:$0xff]
        %v833 = vld [vmem:[%s559 + $0x140] sm:$0xff]
        %v834 = vld [vmem:[%s559 + $0x148] sm:$0xff]
        %v835 = vld [vmem:[%s559 + $0x150] sm:$0xff]
        %v836 = vld [vmem:[%s559 + $0x158] sm:$0xff]
        %v837 = vld [vmem:[%s559 + $0x160] sm:$0xff]
        %v838 = vld [vmem:[%s559 + $0x168] sm:$0xff]
        %v839 = vld [vmem:[%s559 + $0x170] sm:$0xff]
        %v840 = vld [vmem:[%s559 + $0x178] sm:$0xff]
        %v841 = vld [vmem:[%s559 + $0x180] sm:$0xff]
        %v842 = vld [vmem:[%s559 + $0x188] sm:$0xff]
        %v843 = vld [vmem:[%s559 + $0x190] sm:$0xff]
        %v844 = vld [vmem:[%s559 + $0x198] sm:$0xff]
        %v845 = vld [vmem:[%s559 + $0x1a0] sm:$0xff]
        %v846 = vld [vmem:[%s559 + $0x1a8] sm:$0xff]
        %v847 = vld [vmem:[%s559 + $0x1b0] sm:$0xff]
        %v848 = vld [vmem:[%s559 + $0x1b8] sm:$0xff]
        %v849 = vld [vmem:[%s559 + $0x1c0] sm:$0xff]
        %v850 = vld [vmem:[%s559 + $0x1c8] sm:$0xff]
        %v851 = vld [vmem:[%s559 + $0x1d0] sm:$0xff]
        %v852 = vld [vmem:[%s559 + $0x1d8] sm:$0xff]
        %v853 = vld [vmem:[%s559 + $0x1e0] sm:$0xff]
        %v854 = vld [vmem:[%s559 + $0x1e8] sm:$0xff]
        %v855 = vld [vmem:[%s559 + $0x1f0] sm:$0xff]
        %v856 = vld [vmem:[%s559 + $0x1f8] sm:$0xff]
        %v857 = vld [vmem:[%s559 + $0x200] sm:$0xff]
        %v858 = vld [vmem:[%s559 + $0x208] sm:$0xff]
        %v859 = vld [vmem:[%s559 + $0x210] sm:$0xff]
        %v860 = vld [vmem:[%s559 + $0x218] sm:$0xff]
        %v861 = vld [vmem:[%s559 + $0x220] sm:$0xff]
        %v862 = vld [vmem:[%s559 + $0x228] sm:$0xff]
        %v863 = vld [vmem:[%s559 + $0x230] sm:$0xff]
        %v864 = vld [vmem:[%s559 + $0x238] sm:$0xff]
        %v865 = vld [vmem:[%s559 + $0x240] sm:$0xff]
        %v866 = vld [vmem:[%s559 + $0x248] sm:$0xff]
        %v867 = vld [vmem:[%s559 + $0x250] sm:$0xff]
        %v868 = vld [vmem:[%s559 + $0x258] sm:$0xff]
        %v869 = vld [vmem:[%s559 + $0x260] sm:$0xff]
        %v870 = vld [vmem:[%s559 + $0x268] sm:$0xff]
        %v871 = vld [vmem:[%s559 + $0x270] sm:$0xff]
        %v872 = vld [vmem:[%s559 + $0x278] sm:$0xff]
        %v873 = vld [vmem:[%s559 + $0x280] sm:$0xff]
        %v874 = vld [vmem:[%s559 + $0x288] sm:$0xff]
        %v875 = vld [vmem:[%s559 + $0x290] sm:$0xff]
        %v876 = vld [vmem:[%s559 + $0x298] sm:$0xff]
        %v877 = vld [vmem:[%s559 + $0x2a0] sm:$0xff]
        %v878 = vld [vmem:[%s559 + $0x2a8] sm:$0xff]
        %v879 = vld [vmem:[%s559 + $0x2b0] sm:$0xff]
        %v880 = vld [vmem:[%s559 + $0x2b8] sm:$0xff]
        %v881 = vld [vmem:[%s559 + $0x2c0] sm:$0xff]
        %v882 = vld [vmem:[%s559 + $0x2c8] sm:$0xff]
        %v883 = vld [vmem:[%s559 + $0x2d0] sm:$0xff]
        %v884 = vld [vmem:[%s559 + $0x2d8] sm:$0xff]
        %v885 = vld [vmem:[%s559 + $0x2e0] sm:$0xff]
        %v886 = vld [vmem:[%s559 + $0x2e8] sm:$0xff]
        %v887 = vld [vmem:[%s559 + $0x2f0] sm:$0xff]
        %v888 = vld [vmem:[%s559 + $0x2f8] sm:$0xff]
        %v889 = vld [vmem:[%s559 + $0x300] sm:$0xff]
        %v890 = vld [vmem:[%s559 + $0x308] sm:$0xff]
        %v891 = vld [vmem:[%s559 + $0x310] sm:$0xff]
        %v892 = vld [vmem:[%s559 + $0x318] sm:$0xff]
        %v893 = vld [vmem:[%s559 + $0x320] sm:$0xff]
        %v894 = vld [vmem:[%s559 + $0x328] sm:$0xff]
        %v895 = vld [vmem:[%s559 + $0x330] sm:$0xff]
        %v896 = vld [vmem:[%s559 + $0x338] sm:$0xff]
        %v897 = vld [vmem:[%s559 + $0x340] sm:$0xff]
        %v898 = vld [vmem:[%s559 + $0x348] sm:$0xff]
        %v899 = vld [vmem:[%s559 + $0x350] sm:$0xff]
        %v900 = vld [vmem:[%s559 + $0x358] sm:$0xff]
        %v901 = vld [vmem:[%s559 + $0x360] sm:$0xff]
        %v902 = vld [vmem:[%s559 + $0x368] sm:$0xff]
        %v903 = vld [vmem:[%s559 + $0x370] sm:$0xff]
        %v904 = vld [vmem:[%s559 + $0x378] sm:$0xff]
        %v905 = vld [vmem:[%s559 + $0x380] sm:$0xff]
        %v906 = vld [vmem:[%s559 + $0x388] sm:$0xff]
        %v907 = vld [vmem:[%s559 + $0x390] sm:$0xff]
        %v908 = vld [vmem:[%s559 + $0x398] sm:$0xff]
        %v909 = vld [vmem:[%s559 + $0x3a0] sm:$0xff]
        %v910 = vld [vmem:[%s559 + $0x3a8] sm:$0xff]
        %v911 = vld [vmem:[%s559 + $0x3b0] sm:$0xff]
        %v912 = vld [vmem:[%s559 + $0x3b8] sm:$0xff]
        %v913 = vld [vmem:[%s559 + $0x3c0] sm:$0xff]
        %v914 = vld [vmem:[%s559 + $0x3c8] sm:$0xff]
        %v915 = vld [vmem:[%s559 + $0x3d0] sm:$0xff]
        %v916 = vld [vmem:[%s559 + $0x3d8] sm:$0xff]
        %v917 = vld [vmem:[%s559 + $0x3e0] sm:$0xff]
        %v918 = vld [vmem:[%s559 + $0x3e8] sm:$0xff]
        %v919 = vld [vmem:[%s559 + $0x3f0] sm:$0xff]
        %v920 = vld [vmem:[%s559 + $0x3f8] sm:$0xff]
        %v921 = vld [vmem:[%s559 + $0x400] sm:$0xff]
        %v922 = vld [vmem:[%s559 + $0x408] sm:$0xff]
        %v923 = vld [vmem:[%s559 + $0x410] sm:$0xff]
        %v924 = vld [vmem:[%s559 + $0x418] sm:$0xff]
        %v925 = vld [vmem:[%s559 + $0x420] sm:$0xff]
        %v926 = vld [vmem:[%s559 + $0x428] sm:$0xff]
        %v927 = vld [vmem:[%s559 + $0x430] sm:$0xff]
        %v928 = vld [vmem:[%s559 + $0x438] sm:$0xff]
        %v929 = vld [vmem:[%s559 + $0x440] sm:$0xff]
        %v930 = vld [vmem:[%s559 + $0x448] sm:$0xff]
        %v931 = vld [vmem:[%s559 + $0x450] sm:$0xff]
        %v932 = vld [vmem:[%s559 + $0x458] sm:$0xff]
        %v933 = vld [vmem:[%s559 + $0x460] sm:$0xff]
        %v934 = vld [vmem:[%s559 + $0x468] sm:$0xff]
        %v935 = vld [vmem:[%s559 + $0x470] sm:$0xff]
        %v936 = vld [vmem:[%s559 + $0x478] sm:$0xff]
        %v937 = vld [vmem:[%s559 + $0x480] sm:$0xff]
        %v938 = vld [vmem:[%s559 + $0x488] sm:$0xff]
        %v939 = vld [vmem:[%s559 + $0x490] sm:$0xff]
        %v940 = vld [vmem:[%s559 + $0x498] sm:$0xff]
        %v941 = vld [vmem:[%s559 + $0x4a0] sm:$0xff]
        %v942 = vld [vmem:[%s559 + $0x4a8] sm:$0xff]
        %v943 = vld [vmem:[%s559 + $0x4b0] sm:$0xff]
        %v944 = vld [vmem:[%s559 + $0x4b8] sm:$0xff]
        %v945 = vld [vmem:[%s559 + $0x4c0] sm:$0xff]
        %v946 = vld [vmem:[%s559 + $0x4c8] sm:$0xff]
        %v947 = vld [vmem:[%s559 + $0x4d0] sm:$0xff]
        %v948 = vld [vmem:[%s559 + $0x4d8] sm:$0xff]
        %v949 = vld [vmem:[%s559 + $0x4e0] sm:$0xff]
        %v950 = vld [vmem:[%s559 + $0x4e8] sm:$0xff]
        %v951 = vld [vmem:[%s559 + $0x4f0] sm:$0xff]
        %v952 = vld [vmem:[%s559 + $0x4f8] sm:$0xff]
        %v953 = vld [vmem:[%s568] sm:$0xff]
        %v954 = vld [vmem:[%s568 + $0x8] sm:$0x3]
        %v957 = vlaneseq
        %v958 = vshrl.u32 %v957, 7
        %v959 = vsub.s32 0, %v958
        %v960 = vrot.slane %v953, %v959
        %v961 = vlaneseq
        %v962 = vshrl.u32 %v961, 7
        %v963 = vsub.s32 1, %v962
        %v964 = vrot.slane %v953, %v963
        %v965 = vlaneseq
        %v966 = vshrl.u32 %v965, 7
        %v967 = vsub.s32 2, %v966
        %v968 = vrot.slane %v953, %v967
        %v969 = vlaneseq
        %v970 = vshrl.u32 %v969, 7
        %v971 = vsub.s32 3, %v970
        %v972 = vrot.slane %v953, %v971
        %v973 = vlaneseq
        %v974 = vshrl.u32 %v973, 7
        %v975 = vsub.s32 4, %v974
        %v976 = vrot.slane %v953, %v975
        %v977 = vlaneseq
        %v978 = vshrl.u32 %v977, 7
        %v979 = vsub.s32 5, %v978
        %v980 = vrot.slane %v953, %v979
        %v981 = vlaneseq
        %v982 = vshrl.u32 %v981, 7
        %v983 = vsub.s32 6, %v982
        %v984 = vrot.slane %v953, %v983
        %v985 = vlaneseq
        %v986 = vshrl.u32 %v985, 7
        %v987 = vsub.s32 7, %v986
        %v988 = vrot.slane %v953, %v987
        %v989 = vlaneseq
        %v990 = vshrl.u32 %v989, 7
        %v991 = vsub.s32 0, %v990
        %v992 = vrot.slane %v954, %v991
        %v993 = vlaneseq
        %v994 = vshrl.u32 %v993, 7
        %v995 = vsub.s32 1, %v994
        %v996 = vrot.slane %v954, %v995
        %v1167 = vunpack.c.l.b16 %v793
        %v1168 = vunpack.c.h.b16 %v793
        %v1169 = vunpack.c.l.b16 %v794
        %v1170 = vunpack.c.h.b16 %v794
        %v1171 = vunpack.c.l.b16 %v795
        %v1172 = vunpack.c.h.b16 %v795
        %v1173 = vunpack.c.l.b16 %v796
        %v1174 = vunpack.c.h.b16 %v796
        %v1175 = vunpack.c.l.b16 %v797
        %v1176 = vunpack.c.h.b16 %v797
        %v1177 = vunpack.c.l.b16 %v798
        %v1178 = vunpack.c.h.b16 %v798
        %v1179 = vunpack.c.l.b16 %v799
        %v1180 = vunpack.c.h.b16 %v799
        %v1181 = vunpack.c.l.b16 %v800
        %v1182 = vunpack.c.h.b16 %v800
        %v1183 = vunpack.c.l.b16 %v801
        %v1184 = vunpack.c.h.b16 %v801
        %v1185 = vunpack.c.l.b16 %v802
        %v1186 = vunpack.c.h.b16 %v802
        %v1187 = vunpack.c.l.b16 %v803
        %v1188 = vunpack.c.h.b16 %v803
        %v1189 = vunpack.c.l.b16 %v804
        %v1190 = vunpack.c.h.b16 %v804
        %v1191 = vunpack.c.l.b16 %v805
        %v1192 = vunpack.c.h.b16 %v805
        %v1193 = vunpack.c.l.b16 %v806
        %v1194 = vunpack.c.h.b16 %v806
        %v1195 = vunpack.c.l.b16 %v807
        %v1196 = vunpack.c.h.b16 %v807
        %v1197 = vunpack.c.l.b16 %v808
        %v1198 = vunpack.c.h.b16 %v808
        %v1199 = vunpack.c.l.b16 %v809
        %v1200 = vunpack.c.h.b16 %v809
        %v1201 = vunpack.c.l.b16 %v810
        %v1202 = vunpack.c.h.b16 %v810
        %v1203 = vunpack.c.l.b16 %v811
        %v1204 = vunpack.c.h.b16 %v811
        %v1205 = vunpack.c.l.b16 %v812
        %v1206 = vunpack.c.h.b16 %v812
        %v1207 = vunpack.c.l.b16 %v813
        %v1208 = vunpack.c.h.b16 %v813
        %v1209 = vunpack.c.l.b16 %v814
        %v1210 = vunpack.c.h.b16 %v814
        %v1211 = vunpack.c.l.b16 %v815
        %v1212 = vunpack.c.h.b16 %v815
        %v1213 = vunpack.c.l.b16 %v816
        %v1214 = vunpack.c.h.b16 %v816
        %v1215 = vunpack.c.l.b16 %v817
        %v1216 = vunpack.c.h.b16 %v817
        %v1217 = vunpack.c.l.b16 %v818
        %v1218 = vunpack.c.h.b16 %v818
        %v1219 = vunpack.c.l.b16 %v819
        %v1220 = vunpack.c.h.b16 %v819
        %v1221 = vunpack.c.l.b16 %v820
        %v1222 = vunpack.c.h.b16 %v820
        %v1223 = vunpack.c.l.b16 %v821
        %v1224 = vunpack.c.h.b16 %v821
        %v1225 = vunpack.c.l.b16 %v822
        %v1226 = vunpack.c.h.b16 %v822
        %v1227 = vunpack.c.l.b16 %v823
        %v1228 = vunpack.c.h.b16 %v823
        %v1229 = vunpack.c.l.b16 %v824
        %v1230 = vunpack.c.h.b16 %v824
        %v1231 = vunpack.c.l.b16 %v825
        %v1232 = vunpack.c.h.b16 %v825
        %v1233 = vunpack.c.l.b16 %v826
        %v1234 = vunpack.c.h.b16 %v826
        %v1235 = vunpack.c.l.b16 %v827
        %v1236 = vunpack.c.h.b16 %v827
        %v1237 = vunpack.c.l.b16 %v828
        %v1238 = vunpack.c.h.b16 %v828
        %v1239 = vunpack.c.l.b16 %v829
        %v1240 = vunpack.c.h.b16 %v829
        %v1241 = vunpack.c.l.b16 %v830
        %v1242 = vunpack.c.h.b16 %v830
        %v1243 = vunpack.c.l.b16 %v831
        %v1244 = vunpack.c.h.b16 %v831
        %v1245 = vunpack.c.l.b16 %v832
        %v1246 = vunpack.c.h.b16 %v832
        %v1247 = vunpack.c.l.b16 %v833
        %v1248 = vunpack.c.h.b16 %v833
        %v1249 = vunpack.c.l.b16 %v834
        %v1250 = vunpack.c.h.b16 %v834
        %v1251 = vunpack.c.l.b16 %v835
        %v1252 = vunpack.c.h.b16 %v835
        %v1253 = vunpack.c.l.b16 %v836
        %v1254 = vunpack.c.h.b16 %v836
        %v1255 = vunpack.c.l.b16 %v837
        %v1256 = vunpack.c.h.b16 %v837
        %v1257 = vunpack.c.l.b16 %v838
        %v1258 = vunpack.c.h.b16 %v838
        %v1259 = vunpack.c.l.b16 %v839
        %v1260 = vunpack.c.h.b16 %v839
        %v1261 = vunpack.c.l.b16 %v840
        %v1262 = vunpack.c.h.b16 %v840
        %v1263 = vunpack.c.l.b16 %v841
        %v1264 = vunpack.c.h.b16 %v841
        %v1265 = vunpack.c.l.b16 %v842
        %v1266 = vunpack.c.h.b16 %v842
        %v1267 = vunpack.c.l.b16 %v843
        %v1268 = vunpack.c.h.b16 %v843
        %v1269 = vunpack.c.l.b16 %v844
        %v1270 = vunpack.c.h.b16 %v844
        %v1271 = vunpack.c.l.b16 %v845
        %v1272 = vunpack.c.h.b16 %v845
        %v1273 = vunpack.c.l.b16 %v846
        %v1274 = vunpack.c.h.b16 %v846
        %v1275 = vunpack.c.l.b16 %v847
        %v1276 = vunpack.c.h.b16 %v847
        %v1277 = vunpack.c.l.b16 %v848
        %v1278 = vunpack.c.h.b16 %v848
        %v1279 = vunpack.c.l.b16 %v849
        %v1280 = vunpack.c.h.b16 %v849
        %v1281 = vunpack.c.l.b16 %v850
        %v1282 = vunpack.c.h.b16 %v850
        %v1283 = vunpack.c.l.b16 %v851
        %v1284 = vunpack.c.h.b16 %v851
        %v1285 = vunpack.c.l.b16 %v852
        %v1286 = vunpack.c.h.b16 %v852
        %v1287 = vunpack.c.l.b16 %v853
        %v1288 = vunpack.c.h.b16 %v853
        %v1289 = vunpack.c.l.b16 %v854
        %v1290 = vunpack.c.h.b16 %v854
        %v1291 = vunpack.c.l.b16 %v855
        %v1292 = vunpack.c.h.b16 %v855
        %v1293 = vunpack.c.l.b16 %v856
        %v1294 = vunpack.c.h.b16 %v856
        %v1295 = vunpack.c.l.b16 %v857
        %v1296 = vunpack.c.h.b16 %v857
        %v1297 = vunpack.c.l.b16 %v858
        %v1298 = vunpack.c.h.b16 %v858
        %v1299 = vunpack.c.l.b16 %v859
        %v1300 = vunpack.c.h.b16 %v859
        %v1301 = vunpack.c.l.b16 %v860
        %v1302 = vunpack.c.h.b16 %v860
        %v1303 = vunpack.c.l.b16 %v861
        %v1304 = vunpack.c.h.b16 %v861
        %v1305 = vunpack.c.l.b16 %v862
        %v1306 = vunpack.c.h.b16 %v862
        %v1307 = vunpack.c.l.b16 %v863
        %v1308 = vunpack.c.h.b16 %v863
        %v1309 = vunpack.c.l.b16 %v864
        %v1310 = vunpack.c.h.b16 %v864
        %v1311 = vunpack.c.l.b16 %v865
        %v1312 = vunpack.c.h.b16 %v865
        %v1313 = vunpack.c.l.b16 %v866
        %v1314 = vunpack.c.h.b16 %v866
        %v1315 = vunpack.c.l.b16 %v867
        %v1316 = vunpack.c.h.b16 %v867
        %v1317 = vunpack.c.l.b16 %v868
        %v1318 = vunpack.c.h.b16 %v868
        %v1319 = vunpack.c.l.b16 %v869
        %v1320 = vunpack.c.h.b16 %v869
        %v1321 = vunpack.c.l.b16 %v870
        %v1322 = vunpack.c.h.b16 %v870
        %v1323 = vunpack.c.l.b16 %v871
        %v1324 = vunpack.c.h.b16 %v871
        %v1325 = vunpack.c.l.b16 %v872
        %v1326 = vunpack.c.h.b16 %v872
        %v1327 = vunpack.c.l.b16 %v873
        %v1328 = vunpack.c.h.b16 %v873
        %v1329 = vunpack.c.l.b16 %v874
        %v1330 = vunpack.c.h.b16 %v874
        %v1331 = vunpack.c.l.b16 %v875
        %v1332 = vunpack.c.h.b16 %v875
        %v1333 = vunpack.c.l.b16 %v876
        %v1334 = vunpack.c.h.b16 %v876
        %v1335 = vunpack.c.l.b16 %v877
        %v1336 = vunpack.c.h.b16 %v877
        %v1337 = vunpack.c.l.b16 %v878
        %v1338 = vunpack.c.h.b16 %v878
        %v1339 = vunpack.c.l.b16 %v879
        %v1340 = vunpack.c.h.b16 %v879
        %v1341 = vunpack.c.l.b16 %v880
        %v1342 = vunpack.c.h.b16 %v880
        %v1343 = vunpack.c.l.b16 %v881
        %v1344 = vunpack.c.h.b16 %v881
        %v1345 = vunpack.c.l.b16 %v882
        %v1346 = vunpack.c.h.b16 %v882
        %v1347 = vunpack.c.l.b16 %v883
        %v1348 = vunpack.c.h.b16 %v883
        %v1349 = vunpack.c.l.b16 %v884
        %v1350 = vunpack.c.h.b16 %v884
        %v1351 = vunpack.c.l.b16 %v885
        %v1352 = vunpack.c.h.b16 %v885
        %v1353 = vunpack.c.l.b16 %v886
        %v1354 = vunpack.c.h.b16 %v886
        %v1355 = vunpack.c.l.b16 %v887
        %v1356 = vunpack.c.h.b16 %v887
        %v1357 = vunpack.c.l.b16 %v888
        %v1358 = vunpack.c.h.b16 %v888
        %v1359 = vunpack.c.l.b16 %v889
        %v1360 = vunpack.c.h.b16 %v889
        %v1361 = vunpack.c.l.b16 %v890
        %v1362 = vunpack.c.h.b16 %v890
        %v1363 = vunpack.c.l.b16 %v891
        %v1364 = vunpack.c.h.b16 %v891
        %v1365 = vunpack.c.l.b16 %v892
        %v1366 = vunpack.c.h.b16 %v892
        %v1367 = vunpack.c.l.b16 %v893
        %v1368 = vunpack.c.h.b16 %v893
        %v1369 = vunpack.c.l.b16 %v894
        %v1370 = vunpack.c.h.b16 %v894
        %v1371 = vunpack.c.l.b16 %v895
        %v1372 = vunpack.c.h.b16 %v895
        %v1373 = vunpack.c.l.b16 %v896
        %v1374 = vunpack.c.h.b16 %v896
        %v1375 = vunpack.c.l.b16 %v897
        %v1376 = vunpack.c.h.b16 %v897
        %v1377 = vunpack.c.l.b16 %v898
        %v1378 = vunpack.c.h.b16 %v898
        %v1379 = vunpack.c.l.b16 %v899
        %v1380 = vunpack.c.h.b16 %v899
        %v1381 = vunpack.c.l.b16 %v900
        %v1382 = vunpack.c.h.b16 %v900
        %v1383 = vunpack.c.l.b16 %v901
        %v1384 = vunpack.c.h.b16 %v901
        %v1385 = vunpack.c.l.b16 %v902
        %v1386 = vunpack.c.h.b16 %v902
        %v1387 = vunpack.c.l.b16 %v903
        %v1388 = vunpack.c.h.b16 %v903
        %v1389 = vunpack.c.l.b16 %v904
        %v1390 = vunpack.c.h.b16 %v904
        %v1391 = vunpack.c.l.b16 %v905
        %v1392 = vunpack.c.h.b16 %v905
        %v1393 = vunpack.c.l.b16 %v906
        %v1394 = vunpack.c.h.b16 %v906
        %v1395 = vunpack.c.l.b16 %v907
        %v1396 = vunpack.c.h.b16 %v907
        %v1397 = vunpack.c.l.b16 %v908
        %v1398 = vunpack.c.h.b16 %v908
        %v1399 = vunpack.c.l.b16 %v909
        %v1400 = vunpack.c.h.b16 %v909
        %v1401 = vunpack.c.l.b16 %v910
        %v1402 = vunpack.c.h.b16 %v910
        %v1403 = vunpack.c.l.b16 %v911
        %v1404 = vunpack.c.h.b16 %v911
        %v1405 = vunpack.c.l.b16 %v912
        %v1406 = vunpack.c.h.b16 %v912
        %v1407 = vunpack.c.l.b16 %v913
        %v1408 = vunpack.c.h.b16 %v913
        %v1409 = vunpack.c.l.b16 %v914
        %v1410 = vunpack.c.h.b16 %v914
        %v1411 = vunpack.c.l.b16 %v915
        %v1412 = vunpack.c.h.b16 %v915
        %v1413 = vunpack.c.l.b16 %v916
        %v1414 = vunpack.c.h.b16 %v916
        %v1415 = vunpack.c.l.b16 %v917
        %v1416 = vunpack.c.h.b16 %v917
        %v1417 = vunpack.c.l.b16 %v918
        %v1418 = vunpack.c.h.b16 %v918
        %v1419 = vunpack.c.l.b16 %v919
        %v1420 = vunpack.c.h.b16 %v919
        %v1421 = vunpack.c.l.b16 %v920
        %v1422 = vunpack.c.h.b16 %v920
        %v1423 = vunpack.c.l.b16 %v921
        %v1424 = vunpack.c.h.b16 %v921
        %v1425 = vunpack.c.l.b16 %v922
        %v1426 = vunpack.c.h.b16 %v922
        %v1427 = vunpack.c.l.b16 %v923
        %v1428 = vunpack.c.h.b16 %v923
        %v1429 = vunpack.c.l.b16 %v924
        %v1430 = vunpack.c.h.b16 %v924
        %v1431 = vunpack.c.l.b16 %v925
        %v1432 = vunpack.c.h.b16 %v925
        %v1433 = vunpack.c.l.b16 %v926
        %v1434 = vunpack.c.h.b16 %v926
        %v1435 = vunpack.c.l.b16 %v927
        %v1436 = vunpack.c.h.b16 %v927
        %v1437 = vunpack.c.l.b16 %v928
        %v1438 = vunpack.c.h.b16 %v928
        %v1439 = vunpack.c.l.b16 %v929
        %v1440 = vunpack.c.h.b16 %v929
        %v1441 = vunpack.c.l.b16 %v930
        %v1442 = vunpack.c.h.b16 %v930
        %v1443 = vunpack.c.l.b16 %v931
        %v1444 = vunpack.c.h.b16 %v931
        %v1445 = vunpack.c.l.b16 %v932
        %v1446 = vunpack.c.h.b16 %v932
        %v1447 = vunpack.c.l.b16 %v933
        %v1448 = vunpack.c.h.b16 %v933
        %v1449 = vunpack.c.l.b16 %v934
        %v1450 = vunpack.c.h.b16 %v934
        %v1451 = vunpack.c.l.b16 %v935
        %v1452 = vunpack.c.h.b16 %v935
        %v1453 = vunpack.c.l.b16 %v936
        %v1454 = vunpack.c.h.b16 %v936
        %v1455 = vunpack.c.l.b16 %v937
        %v1456 = vunpack.c.h.b16 %v937
        %v1457 = vunpack.c.l.b16 %v938
        %v1458 = vunpack.c.h.b16 %v938
        %v1459 = vunpack.c.l.b16 %v939
        %v1460 = vunpack.c.h.b16 %v939
        %v1461 = vunpack.c.l.b16 %v940
        %v1462 = vunpack.c.h.b16 %v940
        %v1463 = vunpack.c.l.b16 %v941
        %v1464 = vunpack.c.h.b16 %v941
        %v1465 = vunpack.c.l.b16 %v942
        %v1466 = vunpack.c.h.b16 %v942
        %v1467 = vunpack.c.l.b16 %v943
        %v1468 = vunpack.c.h.b16 %v943
        %v1469 = vunpack.c.l.b16 %v944
        %v1470 = vunpack.c.h.b16 %v944
        %v1471 = vunpack.c.l.b16 %v945
        %v1472 = vunpack.c.h.b16 %v945
        %v1473 = vunpack.c.l.b16 %v946
        %v1474 = vunpack.c.h.b16 %v946
        %v1475 = vunpack.c.l.b16 %v947
        %v1476 = vunpack.c.h.b16 %v947
        %v1477 = vunpack.c.l.b16 %v948
        %v1478 = vunpack.c.h.b16 %v948
        %v1479 = vunpack.c.l.b16 %v949
        %v1480 = vunpack.c.h.b16 %v949
        %v1481 = vunpack.c.l.b16 %v950
        %v1482 = vunpack.c.h.b16 %v950
        %v1483 = vunpack.c.l.b16 %v951
        %v1484 = vunpack.c.h.b16 %v951
        %v1485 = vunpack.c.l.b16 %v952
        %v1486 = vunpack.c.h.b16 %v952
        %v1487 = vpack.c.b16 %v1177, %v1167
        %v1488 = vpack.c.b16 %v1178, %v1168
        %v1489 = vpack.c.b16 %v1179, %v1169
        %v1490 = vpack.c.b16 %v1180, %v1170
        %v1491 = vpack.c.b16 %v1181, %v1171
        %v1492 = vpack.c.b16 %v1182, %v1172
        %v1493 = vpack.c.b16 %v1183, %v1173
        %v1494 = vpack.c.b16 %v1184, %v1174
        %v1495 = vpack.c.b16 %v1185, %v1175
        %v1496 = vpack.c.b16 %v1186, %v1176
        %v1497 = vpack.c.b16 %v1197, %v1187
        %v1498 = vpack.c.b16 %v1198, %v1188
        %v1499 = vpack.c.b16 %v1199, %v1189
        %v1500 = vpack.c.b16 %v1200, %v1190
        %v1501 = vpack.c.b16 %v1201, %v1191
        %v1502 = vpack.c.b16 %v1202, %v1192
        %v1503 = vpack.c.b16 %v1203, %v1193
        %v1504 = vpack.c.b16 %v1204, %v1194
        %v1505 = vpack.c.b16 %v1205, %v1195
        %v1506 = vpack.c.b16 %v1206, %v1196
        %v1507 = vpack.c.b16 %v1217, %v1207
        %v1508 = vpack.c.b16 %v1218, %v1208
        %v1509 = vpack.c.b16 %v1219, %v1209
        %v1510 = vpack.c.b16 %v1220, %v1210
        %v1511 = vpack.c.b16 %v1221, %v1211
        %v1512 = vpack.c.b16 %v1222, %v1212
        %v1513 = vpack.c.b16 %v1223, %v1213
        %v1514 = vpack.c.b16 %v1224, %v1214
        %v1515 = vpack.c.b16 %v1225, %v1215
        %v1516 = vpack.c.b16 %v1226, %v1216
        %v1517 = vpack.c.b16 %v1237, %v1227
        %v1518 = vpack.c.b16 %v1238, %v1228
        %v1519 = vpack.c.b16 %v1239, %v1229
        %v1520 = vpack.c.b16 %v1240, %v1230
        %v1521 = vpack.c.b16 %v1241, %v1231
        %v1522 = vpack.c.b16 %v1242, %v1232
        %v1523 = vpack.c.b16 %v1243, %v1233
        %v1524 = vpack.c.b16 %v1244, %v1234
        %v1525 = vpack.c.b16 %v1245, %v1235
        %v1526 = vpack.c.b16 %v1246, %v1236
        %v1527 = vpack.c.b16 %v1257, %v1247
        %v1528 = vpack.c.b16 %v1258, %v1248
        %v1529 = vpack.c.b16 %v1259, %v1249
        %v1530 = vpack.c.b16 %v1260, %v1250
        %v1531 = vpack.c.b16 %v1261, %v1251
        %v1532 = vpack.c.b16 %v1262, %v1252
        %v1533 = vpack.c.b16 %v1263, %v1253
        %v1534 = vpack.c.b16 %v1264, %v1254
        %v1535 = vpack.c.b16 %v1265, %v1255
        %v1536 = vpack.c.b16 %v1266, %v1256
        %v1537 = vpack.c.b16 %v1277, %v1267
        %v1538 = vpack.c.b16 %v1278, %v1268
        %v1539 = vpack.c.b16 %v1279, %v1269
        %v1540 = vpack.c.b16 %v1280, %v1270
        %v1541 = vpack.c.b16 %v1281, %v1271
        %v1542 = vpack.c.b16 %v1282, %v1272
        %v1543 = vpack.c.b16 %v1283, %v1273
        %v1544 = vpack.c.b16 %v1284, %v1274
        %v1545 = vpack.c.b16 %v1285, %v1275
        %v1546 = vpack.c.b16 %v1286, %v1276
        %v1547 = vpack.c.b16 %v1297, %v1287
        %v1548 = vpack.c.b16 %v1298, %v1288
        %v1549 = vpack.c.b16 %v1299, %v1289
        %v1550 = vpack.c.b16 %v1300, %v1290
        %v1551 = vpack.c.b16 %v1301, %v1291
        %v1552 = vpack.c.b16 %v1302, %v1292
        %v1553 = vpack.c.b16 %v1303, %v1293
        %v1554 = vpack.c.b16 %v1304, %v1294
        %v1555 = vpack.c.b16 %v1305, %v1295
        %v1556 = vpack.c.b16 %v1306, %v1296
        %v1557 = vpack.c.b16 %v1317, %v1307
        %v1558 = vpack.c.b16 %v1318, %v1308
        %v1559 = vpack.c.b16 %v1319, %v1309
        %v1560 = vpack.c.b16 %v1320, %v1310
        %v1561 = vpack.c.b16 %v1321, %v1311
        %v1562 = vpack.c.b16 %v1322, %v1312
        %v1563 = vpack.c.b16 %v1323, %v1313
        %v1564 = vpack.c.b16 %v1324, %v1314
        %v1565 = vpack.c.b16 %v1325, %v1315
        %v1566 = vpack.c.b16 %v1326, %v1316
        %v1567 = vpack.c.b16 %v1337, %v1327
        %v1568 = vpack.c.b16 %v1338, %v1328
        %v1569 = vpack.c.b16 %v1339, %v1329
        %v1570 = vpack.c.b16 %v1340, %v1330
        %v1571 = vpack.c.b16 %v1341, %v1331
        %v1572 = vpack.c.b16 %v1342, %v1332
        %v1573 = vpack.c.b16 %v1343, %v1333
        %v1574 = vpack.c.b16 %v1344, %v1334
        %v1575 = vpack.c.b16 %v1345, %v1335
        %v1576 = vpack.c.b16 %v1346, %v1336
        %v1577 = vpack.c.b16 %v1357, %v1347
        %v1578 = vpack.c.b16 %v1358, %v1348
        %v1579 = vpack.c.b16 %v1359, %v1349
        %v1580 = vpack.c.b16 %v1360, %v1350
        %v1581 = vpack.c.b16 %v1361, %v1351
        %v1582 = vpack.c.b16 %v1362, %v1352
        %v1583 = vpack.c.b16 %v1363, %v1353
        %v1584 = vpack.c.b16 %v1364, %v1354
        %v1585 = vpack.c.b16 %v1365, %v1355
        %v1586 = vpack.c.b16 %v1366, %v1356
        %v1587 = vpack.c.b16 %v1377, %v1367
        %v1588 = vpack.c.b16 %v1378, %v1368
        %v1589 = vpack.c.b16 %v1379, %v1369
        %v1590 = vpack.c.b16 %v1380, %v1370
        %v1591 = vpack.c.b16 %v1381, %v1371
        %v1592 = vpack.c.b16 %v1382, %v1372
        %v1593 = vpack.c.b16 %v1383, %v1373
        %v1594 = vpack.c.b16 %v1384, %v1374
        %v1595 = vpack.c.b16 %v1385, %v1375
        %v1596 = vpack.c.b16 %v1386, %v1376
        %v1597 = vpack.c.b16 %v1397, %v1387
        %v1598 = vpack.c.b16 %v1398, %v1388
        %v1599 = vpack.c.b16 %v1399, %v1389
        %v1600 = vpack.c.b16 %v1400, %v1390
        %v1601 = vpack.c.b16 %v1401, %v1391
        %v1602 = vpack.c.b16 %v1402, %v1392
        %v1603 = vpack.c.b16 %v1403, %v1393
        %v1604 = vpack.c.b16 %v1404, %v1394
        %v1605 = vpack.c.b16 %v1405, %v1395
        %v1606 = vpack.c.b16 %v1406, %v1396
        %v1607 = vpack.c.b16 %v1417, %v1407
        %v1608 = vpack.c.b16 %v1418, %v1408
        %v1609 = vpack.c.b16 %v1419, %v1409
        %v1610 = vpack.c.b16 %v1420, %v1410
        %v1611 = vpack.c.b16 %v1421, %v1411
        %v1612 = vpack.c.b16 %v1422, %v1412
        %v1613 = vpack.c.b16 %v1423, %v1413
        %v1614 = vpack.c.b16 %v1424, %v1414
        %v1615 = vpack.c.b16 %v1425, %v1415
        %v1616 = vpack.c.b16 %v1426, %v1416
        %v1617 = vpack.c.b16 %v1437, %v1427
        %v1618 = vpack.c.b16 %v1438, %v1428
        %v1619 = vpack.c.b16 %v1439, %v1429
        %v1620 = vpack.c.b16 %v1440, %v1430
        %v1621 = vpack.c.b16 %v1441, %v1431
        %v1622 = vpack.c.b16 %v1442, %v1432
        %v1623 = vpack.c.b16 %v1443, %v1433
        %v1624 = vpack.c.b16 %v1444, %v1434
        %v1625 = vpack.c.b16 %v1445, %v1435
        %v1626 = vpack.c.b16 %v1446, %v1436
        %v1627 = vpack.c.b16 %v1457, %v1447
        %v1628 = vpack.c.b16 %v1458, %v1448
        %v1629 = vpack.c.b16 %v1459, %v1449
        %v1630 = vpack.c.b16 %v1460, %v1450
        %v1631 = vpack.c.b16 %v1461, %v1451
        %v1632 = vpack.c.b16 %v1462, %v1452
        %v1633 = vpack.c.b16 %v1463, %v1453
        %v1634 = vpack.c.b16 %v1464, %v1454
        %v1635 = vpack.c.b16 %v1465, %v1455
        %v1636 = vpack.c.b16 %v1466, %v1456
        %v1637 = vpack.c.b16 %v1477, %v1467
        %v1638 = vpack.c.b16 %v1478, %v1468
        %v1639 = vpack.c.b16 %v1479, %v1469
        %v1640 = vpack.c.b16 %v1480, %v1470
        %v1641 = vpack.c.b16 %v1481, %v1471
        %v1642 = vpack.c.b16 %v1482, %v1472
        %v1643 = vpack.c.b16 %v1483, %v1473
        %v1644 = vpack.c.b16 %v1484, %v1474
        %v1645 = vpack.c.b16 %v1485, %v1475
        %v1646 = vpack.c.b16 %v1486, %v1476
        %1807 = vmatprep.subr.bf16.mxu0 %v1488
        %1808 = vmatpush1.bf16.msra.mxu0 %v1487
        %1809 = vmatprep.subr.bf16.mxu0 %v1498
        %1810 = vmatpush1.bf16.msra.mxu0 %v1497
        %1811 = vmatprep.subr.bf16.mxu0 %v1508
        %1812 = vmatpush1.bf16.msra.mxu0 %v1507
        %1813 = vmatprep.subr.bf16.mxu0 %v1518
        %1814 = vmatpush1.bf16.msra.mxu0 %v1517
        %1815 = vmatprep.subr.bf16.mxu0 %v1528
        %1816 = vmatpush1.bf16.msra.mxu0 %v1527
        %1817 = vmatprep.subr.bf16.mxu0 %v1538
        %1818 = vmatpush1.bf16.msra.mxu0 %v1537
        %1819 = vmatprep.subr.bf16.mxu0 %v1548
        %1820 = vmatpush1.bf16.msra.mxu0 %v1547
        %1821 = vmatprep.subr.bf16.mxu0 %v1558
        %1822 = vmatpush1.bf16.msra.mxu0 %v1557
        %1823 = vmatprep.subr.bf16.mxu0 %v1568
        %1824 = vmatpush1.bf16.msra.mxu0 %v1567
        %1825 = vmatprep.subr.bf16.mxu0 %v1578
        %1826 = vmatpush1.bf16.msra.mxu0 %v1577
        %1827 = vmatprep.subr.bf16.mxu0 %v1588
        %1828 = vmatpush1.bf16.msra.mxu0 %v1587
        %1829 = vmatprep.subr.bf16.mxu0 %v1598
        %1830 = vmatpush1.bf16.msra.mxu0 %v1597
        %1831 = vmatprep.subr.bf16.mxu0 %v1608
        %1832 = vmatpush1.bf16.msra.mxu0 %v1607
        %1833 = vmatprep.subr.bf16.mxu0 %v1618
        %1834 = vmatpush1.bf16.msra.mxu0 %v1617
        %1835 = vmatprep.subr.bf16.mxu0 %v1628
        %1836 = vmatpush1.bf16.msra.mxu0 %v1627
        %1837 = vmatprep.subr.bf16.mxu0 %v1638
        %1838 = vmatpush1.bf16.msra.mxu0 %v1637
        %1839 = vmatprep.mubr.bf16.mxu0 %v790
        %1840 = vmatmul.mubr.bf16.gmra.mrb[0].mxu0 %v789
        %v1841 = vpop.f32.mrb[0].mxu0
        %v1842 = vadd.f32 %v960, %v1841
        %v1843 = vpop.f32.mrb[0].mxu0
        %v1844 = vadd.f32 %v964, %v1843
        %v1845 = vpop.f32.mrb[0].mxu0
        %v1846 = vadd.f32 %v960, %v1845
        %v1847 = vpop.f32.mrb[0].mxu0
        %v1848 = vadd.f32 %v964, %v1847
        %1849 = vmatprep.mubr.bf16.mxu0 %v792
        %1850 = vmatmul.mubr.bf16.gmra.mrb[0].mxu0 %v791
        %v1851 = vpop.f32.mrb[0].mxu0
        %v1852 = vadd.f32 %v960, %v1851
        %v1853 = vpop.f32.mrb[0].mxu0
        %v1854 = vadd.f32 %v964, %v1853
        %v1855 = vpop.f32.mrb[0].mxu0
        %v1856 = vadd.f32 %v960, %v1855
        %v1857 = vpop.f32.mrb[0].mxu0
        %v1858 = vadd.f32 %v964, %v1857
        %1859 = vdwg.mxu0
        %1860 = vmatprep.subr.bf16.mxu0 %v1490
        %1861 = vmatpush1.bf16.msra.mxu0 %v1489
        %1862 = vmatprep.subr.bf16.mxu0 %v1500
        %1863 = vmatpush1.bf16.msra.mxu0 %v1499
        %1864 = vmatprep.subr.bf16.mxu0 %v1510
        %1865 = vmatpush1.bf16.msra.mxu0 %v1509
        %1866 = vmatprep.subr.bf16.mxu0 %v1520
        %1867 = vmatpush1.bf16.msra.mxu0 %v1519
        %1868 = vmatprep.subr.bf16.mxu0 %v1530
        %1869 = vmatpush1.bf16.msra.mxu0 %v1529
        %1870 = vmatprep.subr.bf16.mxu0 %v1540
        %1871 = vmatpush1.bf16.msra.mxu0 %v1539
        %1872 = vmatprep.subr.bf16.mxu0 %v1550
        %1873 = vmatpush1.bf16.msra.mxu0 %v1549
        %1874 = vmatprep.subr.bf16.mxu0 %v1560
        %1875 = vmatpush1.bf16.msra.mxu0 %v1559
        %1876 = vmatprep.subr.bf16.mxu0 %v1570
        %1877 = vmatpush1.bf16.msra.mxu0 %v1569
        %1878 = vmatprep.subr.bf16.mxu0 %v1580
        %1879 = vmatpush1.bf16.msra.mxu0 %v1579
        %1880 = vmatprep.subr.bf16.mxu0 %v1590
        %1881 = vmatpush1.bf16.msra.mxu0 %v1589
        %1882 = vmatprep.subr.bf16.mxu0 %v1600
        %1883 = vmatpush1.bf16.msra.mxu0 %v1599
        %1884 = vmatprep.subr.bf16.mxu0 %v1610
        %1885 = vmatpush1.bf16.msra.mxu0 %v1609
        %1886 = vmatprep.subr.bf16.mxu0 %v1620
        %1887 = vmatpush1.bf16.msra.mxu0 %v1619
        %1888 = vmatprep.subr.bf16.mxu0 %v1630
        %1889 = vmatpush1.bf16.msra.mxu0 %v1629
        %1890 = vmatprep.subr.bf16.mxu0 %v1640
        %1891 = vmatpush1.bf16.msra.mxu0 %v1639
        %1892 = vmatprep.mubr.bf16.mxu0 %v790
        %1893 = vmatmul.mubr.bf16.gmra.mrb[0].mxu0 %v789
        %v1894 = vpop.f32.mrb[0].mxu0
        %v1895 = vadd.f32 %v968, %v1894
        %v1896 = vpop.f32.mrb[0].mxu0
        %v1897 = vadd.f32 %v972, %v1896
        %v1898 = vpop.f32.mrb[0].mxu0
        %v1899 = vadd.f32 %v968, %v1898
        %v1900 = vpop.f32.mrb[0].mxu0
        %v1901 = vadd.f32 %v972, %v1900
        %1902 = vmatprep.mubr.bf16.mxu0 %v792
        %1903 = vmatmul.mubr.bf16.gmra.mrb[0].mxu0 %v791
        %v1904 = vpop.f32.mrb[0].mxu0
        %v1905 = vadd.f32 %v968, %v1904
        %v1906 = vpop.f32.mrb[0].mxu0
        %v1907 = vadd.f32 %v972, %v1906
        %v1908 = vpop.f32.mrb[0].mxu0
        %v1909 = vadd.f32 %v968, %v1908
        %v1910 = vpop.f32.mrb[0].mxu0
        %v1911 = vadd.f32 %v972, %v1910
        %1912 = vdwg.mxu0
        %1913 = vmatprep.subr.bf16.mxu0 %v1492
        %1914 = vmatpush1.bf16.msra.mxu0 %v1491
        %1915 = vmatprep.subr.bf16.mxu0 %v1502
        %1916 = vmatpush1.bf16.msra.mxu0 %v1501
        %1917 = vmatprep.subr.bf16.mxu0 %v1512
        %1918 = vmatpush1.bf16.msra.mxu0 %v1511
        %1919 = vmatprep.subr.bf16.mxu0 %v1522
        %1920 = vmatpush1.bf16.msra.mxu0 %v1521
        %1921 = vmatprep.subr.bf16.mxu0 %v1532
        %1922 = vmatpush1.bf16.msra.mxu0 %v1531
        %1923 = vmatprep.subr.bf16.mxu0 %v1542
        %1924 = vmatpush1.bf16.msra.mxu0 %v1541
        %1925 = vmatprep.subr.bf16.mxu0 %v1552
        %1926 = vmatpush1.bf16.msra.mxu0 %v1551
        %1927 = vmatprep.subr.bf16.mxu0 %v1562
        %1928 = vmatpush1.bf16.msra.mxu0 %v1561
        %1929 = vmatprep.subr.bf16.mxu0 %v1572
        %1930 = vmatpush1.bf16.msra.mxu0 %v1571
        %1931 = vmatprep.subr.bf16.mxu0 %v1582
        %1932 = vmatpush1.bf16.msra.mxu0 %v1581
        %1933 = vmatprep.subr.bf16.mxu0 %v1592
        %1934 = vmatpush1.bf16.msra.mxu0 %v1591
        %1935 = vmatprep.subr.bf16.mxu0 %v1602
        %1936 = vmatpush1.bf16.msra.mxu0 %v1601
        %1937 = vmatprep.subr.bf16.mxu0 %v1612
        %1938 = vmatpush1.bf16.msra.mxu0 %v1611
        %1939 = vmatprep.subr.bf16.mxu0 %v1622
        %1940 = vmatpush1.bf16.msra.mxu0 %v1621
        %1941 = vmatprep.subr.bf16.mxu0 %v1632
        %1942 = vmatpush1.bf16.msra.mxu0 %v1631
        %1943 = vmatprep.subr.bf16.mxu0 %v1642
        %1944 = vmatpush1.bf16.msra.mxu0 %v1641
        %1945 = vmatprep.mubr.bf16.mxu0 %v790
        %1946 = vmatmul.mubr.bf16.gmra.mrb[0].mxu0 %v789
        %v1947 = vpop.f32.mrb[0].mxu0
        %v1948 = vadd.f32 %v976, %v1947
        %v1949 = vpop.f32.mrb[0].mxu0
        %v1950 = vadd.f32 %v980, %v1949
        %v1951 = vpop.f32.mrb[0].mxu0
        %v1952 = vadd.f32 %v976, %v1951
        %v1953 = vpop.f32.mrb[0].mxu0
        %v1954 = vadd.f32 %v980, %v1953
        %1955 = vmatprep.mubr.bf16.mxu0 %v792
        %1956 = vmatmul.mubr.bf16.gmra.mrb[0].mxu0 %v791
        %v1957 = vpop.f32.mrb[0].mxu0
        %v1958 = vadd.f32 %v976, %v1957
        %v1959 = vpop.f32.mrb[0].mxu0
        %v1960 = vadd.f32 %v980, %v1959
        %v1961 = vpop.f32.mrb[0].mxu0
        %v1962 = vadd.f32 %v976, %v1961
        %v1963 = vpop.f32.mrb[0].mxu0
        %v1964 = vadd.f32 %v980, %v1963
        %1965 = vdwg.mxu0
        %1966 = vmatprep.subr.bf16.mxu0 %v1494
        %1967 = vmatpush1.bf16.msra.mxu0 %v1493
        %1968 = vmatprep.subr.bf16.mxu0 %v1504
        %1969 = vmatpush1.bf16.msra.mxu0 %v1503
        %1970 = vmatprep.subr.bf16.mxu0 %v1514
        %1971 = vmatpush1.bf16.msra.mxu0 %v1513
        %1972 = vmatprep.subr.bf16.mxu0 %v1524
        %1973 = vmatpush1.bf16.msra.mxu0 %v1523
        %1974 = vmatprep.subr.bf16.mxu0 %v1534
        %1975 = vmatpush1.bf16.msra.mxu0 %v1533
        %1976 = vmatprep.subr.bf16.mxu0 %v1544
        %1977 = vmatpush1.bf16.msra.mxu0 %v1543
        %1978 = vmatprep.subr.bf16.mxu0 %v1554
        %1979 = vmatpush1.bf16.msra.mxu0 %v1553
        %1980 = vmatprep.subr.bf16.mxu0 %v1564
        %1981 = vmatpush1.bf16.msra.mxu0 %v1563
        %1982 = vmatprep.subr.bf16.mxu0 %v1574
        %1983 = vmatpush1.bf16.msra.mxu0 %v1573
        %1984 = vmatprep.subr.bf16.mxu0 %v1584
        %1985 = vmatpush1.bf16.msra.mxu0 %v1583
        %1986 = vmatprep.subr.bf16.mxu0 %v1594
        %1987 = vmatpush1.bf16.msra.mxu0 %v1593
        %1988 = vmatprep.subr.bf16.mxu0 %v1604
        %1989 = vmatpush1.bf16.msra.mxu0 %v1603
        %1990 = vmatprep.subr.bf16.mxu0 %v1614
        %1991 = vmatpush1.bf16.msra.mxu0 %v1613
        %1992 = vmatprep.subr.bf16.mxu0 %v1624
        %1993 = vmatpush1.bf16.msra.mxu0 %v1623
        %1994 = vmatprep.subr.bf16.mxu0 %v1634
        %1995 = vmatpush1.bf16.msra.mxu0 %v1633
        %1996 = vmatprep.subr.bf16.mxu0 %v1644
        %1997 = vmatpush1.bf16.msra.mxu0 %v1643
        %1998 = vmatprep.mubr.bf16.mxu0 %v790
        %1999 = vmatmul.mubr.bf16.gmra.mrb[0].mxu0 %v789
        %v2000 = vpop.f32.mrb[0].mxu0
        %v2001 = vadd.f32 %v984, %v2000
        %v2002 = vpop.f32.mrb[0].mxu0
        %v2003 = vadd.f32 %v988, %v2002
        %v2004 = vpop.f32.mrb[0].mxu0
        %v2005 = vadd.f32 %v984, %v2004
        %v2006 = vpop.f32.mrb[0].mxu0
        %v2007 = vadd.f32 %v988, %v2006
        %2008 = vmatprep.mubr.bf16.mxu0 %v792
        %2009 = vmatmul.mubr.bf16.gmra.mrb[0].mxu0 %v791
        %v2010 = vpop.f32.mrb[0].mxu0
        %v2011 = vadd.f32 %v984, %v2010
        %v2012 = vpop.f32.mrb[0].mxu0
        %v2013 = vadd.f32 %v988, %v2012
        %v2014 = vpop.f32.mrb[0].mxu0
        %v2015 = vadd.f32 %v984, %v2014
        %v2016 = vpop.f32.mrb[0].mxu0
        %v2017 = vadd.f32 %v988, %v2016
        %2018 = vdwg.mxu0
        %2019 = vmatprep.subr.bf16.mxu0 %v1496
        %2020 = vmatpush1.bf16.msra.mxu0 %v1495
        %2021 = vmatprep.subr.bf16.mxu0 %v1506
        %2022 = vmatpush1.bf16.msra.mxu0 %v1505
        %2023 = vmatprep.subr.bf16.mxu0 %v1516
        %2024 = vmatpush1.bf16.msra.mxu0 %v1515
        %2025 = vmatprep.subr.bf16.mxu0 %v1526
        %2026 = vmatpush1.bf16.msra.mxu0 %v1525
        %2027 = vmatprep.subr.bf16.mxu0 %v1536
        %2028 = vmatpush1.bf16.msra.mxu0 %v1535
        %2029 = vmatprep.subr.bf16.mxu0 %v1546
        %2030 = vmatpush1.bf16.msra.mxu0 %v1545
        %2031 = vmatprep.subr.bf16.mxu0 %v1556
        %2032 = vmatpush1.bf16.msra.mxu0 %v1555
        %2033 = vmatprep.subr.bf16.mxu0 %v1566
        %2034 = vmatpush1.bf16.msra.mxu0 %v1565
        %2035 = vmatprep.subr.bf16.mxu0 %v1576
        %2036 = vmatpush1.bf16.msra.mxu0 %v1575
        %2037 = vmatprep.subr.bf16.mxu0 %v1586
        %2038 = vmatpush1.bf16.msra.mxu0 %v1585
        %2039 = vmatprep.subr.bf16.mxu0 %v1596
        %2040 = vmatpush1.bf16.msra.mxu0 %v1595
        %2041 = vmatprep.subr.bf16.mxu0 %v1606
        %2042 = vmatpush1.bf16.msra.mxu0 %v1605
        %2043 = vmatprep.subr.bf16.mxu0 %v1616
        %2044 = vmatpush1.bf16.msra.mxu0 %v1615
        %2045 = vmatprep.subr.bf16.mxu0 %v1626
        %2046 = vmatpush1.bf16.msra.mxu0 %v1625
        %2047 = vmatprep.subr.bf16.mxu0 %v1636
        %2048 = vmatpush1.bf16.msra.mxu0 %v1635
        %2049 = vmatprep.subr.bf16.mxu0 %v1646
        %2050 = vmatpush1.bf16.msra.mxu0 %v1645
        %2051 = vmatprep.mubr.bf16.mxu0 %v790
        %2052 = vmatmul.mubr.bf16.gmra.mrb[0].mxu0 %v789
        %v2053 = vpop.f32.mrb[0].mxu0
        %v2054 = vadd.f32 %v992, %v2053
        %v2055 = vpop.f32.mrb[0].mxu0
        %v2056 = vadd.f32 %v996, %v2055
        %v2057 = vpop.f32.mrb[0].mxu0
        %v2058 = vadd.f32 %v992, %v2057
        %v2059 = vpop.f32.mrb[0].mxu0
        %v2060 = vadd.f32 %v996, %v2059
        %2061 = vmatprep.mubr.bf16.mxu0 %v792
        %2062 = vmatmul.mubr.bf16.gmra.mrb[0].mxu0 %v791
        %v2063 = vpop.f32.mrb[0].mxu0
        %v2064 = vadd.f32 %v992, %v2063
        %v2065 = vpop.f32.mrb[0].mxu0
        %v2066 = vadd.f32 %v996, %v2065
        %v2067 = vpop.f32.mrb[0].mxu0
        %v2068 = vadd.f32 %v992, %v2067
        %v2069 = vpop.f32.mrb[0].mxu0
        %v2070 = vadd.f32 %v996, %v2069
        %2071 = vdwg.mxu0
        %v2072 = vmul.f32 %v1842, %v712
        %v2073 = vmul.f32 %v1844, %v713
        %v2074 = vmul.f32 %v1846, %v714
        %v2075 = vmul.f32 %v1848, %v715
        %v2076 = vmul.f32 %v1852, %v716
        %v2077 = vmul.f32 %v1854, %v717
        %v2078 = vmul.f32 %v1856, %v718
        %v2079 = vmul.f32 %v1858, %v719
        %v2080 = vmul.f32 %v2001, %v720
        %v2081 = vmul.f32 %v2003, %v721
        %v2082 = vmul.f32 %v2005, %v722
        %v2083 = vmul.f32 %v2007, %v723
        %v2084 = vmul.f32 %v2011, %v724
        %v2085 = vmul.f32 %v2013, %v725
        %v2086 = vmul.f32 %v2015, %v726
        %v2087 = vmul.f32 %v2017, %v727
        %v2088 = vadd.f32 %v2072, %v2080
        %v2089 = vadd.f32 %v2073, %v2081
        %v2090 = vadd.f32 %v2074, %v2082
        %v2091 = vadd.f32 %v2075, %v2083
        %v2092 = vadd.f32 %v2076, %v2084
        %v2093 = vadd.f32 %v2077, %v2085
        %v2094 = vadd.f32 %v2078, %v2086
        %v2095 = vadd.f32 %v2079, %v2087
        %v2096 = vpack.c.bf16 %v2090, %v2088
        %v2097 = vpack.c.bf16 %v2091, %v2089
        %v2098 = vpack.c.bf16 %v2094, %v2092
        %v2099 = vpack.c.bf16 %v2095, %v2093
        %v2100 = vmul.f32 %v1895, %v712
        %v2101 = vmul.f32 %v1897, %v713
        %v2102 = vmul.f32 %v1899, %v714
        %v2103 = vmul.f32 %v1901, %v715
        %v2104 = vmul.f32 %v1905, %v716
        %v2105 = vmul.f32 %v1907, %v717
        %v2106 = vmul.f32 %v1909, %v718
        %v2107 = vmul.f32 %v1911, %v719
        %v2108 = vmul.f32 %v2054, %v720
        %v2109 = vmul.f32 %v2056, %v721
        %v2110 = vmul.f32 %v2058, %v722
        %v2111 = vmul.f32 %v2060, %v723
        %v2112 = vmul.f32 %v2064, %v724
        %v2113 = vmul.f32 %v2066, %v725
        %v2114 = vmul.f32 %v2068, %v726
        %v2115 = vmul.f32 %v2070, %v727
        %v2116 = vadd.f32 %v2100, %v2108
        %v2117 = vadd.f32 %v2101, %v2109
        %v2118 = vadd.f32 %v2102, %v2110
        %v2119 = vadd.f32 %v2103, %v2111
        %v2120 = vadd.f32 %v2104, %v2112
        %v2121 = vadd.f32 %v2105, %v2113
        %v2122 = vadd.f32 %v2106, %v2114
        %v2123 = vadd.f32 %v2107, %v2115
        %v2124 = vpack.c.bf16 %v2118, %v2116
        %v2125 = vpack.c.bf16 %v2119, %v2117
        %v2126 = vpack.c.bf16 %v2122, %v2120
        %v2127 = vpack.c.bf16 %v2123, %v2121
        %v2128 = vpack.c.bf16 %v1952, %v1948
        %v2129 = vpack.c.bf16 %v1954, %v1950
        %v2130 = vpack.c.bf16 %v1962, %v1958
        %v2131 = vpack.c.bf16 %v1964, %v1960
        %v2132 = vld [vmem:[#allocation4] sm:$0xff]
        %v2133 = vld [vmem:[#allocation4 + $0x8] sm:$0xff]
        %2134 = vmatprep.subr.bf16.mxu0 0
        %2135 = vmatpush1.bf16.xpose.msra.mxu0 %v2124
        %2136 = vmatprep.subr.bf16.mxu0 0
        %2137 = vmatpush1.bf16.xpose.msra.mxu0 0
        %2138 = vmatprep.subr.bf16.mxu0 0
        %2139 = vmatpush1.bf16.xpose.msra.mxu0 0
        %2140 = vmatprep.subr.bf16.mxu0 0
        %2141 = vmatpush1.bf16.xpose.msra.mxu0 0
        %2142 = vmatprep.subr.bf16.mxu0 0
        %2143 = vmatpush1.bf16.xpose.msra.mxu0 0
        %2144 = vmatprep.subr.bf16.mxu0 0
        %2145 = vmatpush1.bf16.xpose.msra.mxu0 0
        %2146 = vmatprep.subr.bf16.mxu0 0
        %2147 = vmatpush1.bf16.xpose.msra.mxu0 0
        %2148 = vmatprep.subr.bf16.mxu0 0
        %2149 = vmatpush1.bf16.xpose.msra.mxu0 0
        %2150 = vmatprep.subr.bf16.mxu0 0
        %2151 = vmatpush1.bf16.xpose.msra.mxu0 0
        %2152 = vmatprep.subr.bf16.mxu0 0
        %2153 = vmatpush1.bf16.xpose.msra.mxu0 0
        %2154 = vmatprep.subr.bf16.mxu0 0
        %2155 = vmatpush1.bf16.xpose.msra.mxu0 0
        %2156 = vmatprep.subr.bf16.mxu0 0
        %2157 = vmatpush1.bf16.xpose.msra.mxu0 0
        %2158 = vmatprep.subr.bf16.mxu0 0
        %2159 = vmatpush1.bf16.xpose.msra.mxu0 0
        %2160 = vmatprep.subr.bf16.mxu0 0
        %2161 = vmatpush1.bf16.xpose.msra.mxu0 0
        %2162 = vmatprep.subr.bf16.mxu0 0
        %2163 = vmatpush1.bf16.xpose.msra.mxu0 0
        %2164 = vmatprep.subr.bf16.mxu0 0
        %2165 = vmatpush1.bf16.xpose.msra.mxu0 0
        %2166 = vmatprep.mubr.bf16.mxu0 0
        %2167 = vmatmul.mubr.bf16.gmra.mrb[0].mxu0 %v2096
        %v2168 = vpop.f32.mrb[0].mxu0
        %v2169 = vadd.f32 0.0, %v2168
        %v2170 = vpop.f32.mrb[0].mxu0
        %v2171 = vpop.f32.mrb[0].mxu0
        %v2172 = vadd.f32 0.0, %v2171
        %v2173 = vpop.f32.mrb[0].mxu0
        %2174 = vdwg.mxu0
        %v2175 = vmul.f32 %v2169, 0.088388346
        %v2176 = vmul.f32 %v2172, 0.088388346
        %v2177 = vadd.f32 %v2175, %v2132
        %v2178 = vadd.f32 %v2176, %v2133
        %vm2179 = vcmask 130048
        %v2180 = vsel %vm2179, %v2177, -inf
        %2181 = vmax.xlane.f32.xlu0 %v2180
        %v2182 = vpop.xlane.xlu0 %2181
        %v2183 = vsel %vm2179, %v2178, -inf
        %2184 = vmax.xlane.f32.xlu0 %v2183
        %v2185 = vpop.xlane.xlu0 %2184
        %v2186 = vsub.f32 %v2177, %v2182
        %v2187 = vsub.f32 %v2178, %v2185
        %v2188 = vmul.f32 %v2186, 1.442695
        %v2189 = vpow.pop %v2188
        %v2190 = vmul.f32 %v2187, 1.442695
        %v2191 = vpow.pop %v2190
        %v2192 = vsel %vm2179, %v2189, 0.0
        %2193 = vadd.xlane.f32.xlu0 %v2192
        %v2194 = vpop.xlane.xlu0 %2193
        %v2195 = vsel %vm2179, %v2191, 0.0
        %2196 = vadd.xlane.f32.xlu0 %v2195
        %v2197 = vpop.xlane.xlu0 %2196
        %v2198 = vrcp.pop %v2194
        %v2199 = vrcp.pop %v2197
        %v2200 = vmul.f32 %v2189, %v2198
        %v2201 = vmul.f32 %v2191, %v2199
        %v2202 = vpack.c.bf16 %v2201, %v2200
        %v2204 = vsel %vm2179, %v2202, 0
        %2206 = vmatprep.subr.bf16.mxu0 0
        %2207 = vmatpush1.bf16.msra.mxu0 %v2128
        %2208 = vmatprep.subr.bf16.mxu0 0
        %2209 = vmatpush1.bf16.msra.mxu0 0
        %2210 = vmatprep.subr.bf16.mxu0 0
        %2211 = vmatpush1.bf16.msra.mxu0 0
        %2212 = vmatprep.subr.bf16.mxu0 0
        %2213 = vmatpush1.bf16.msra.mxu0 0
        %2214 = vmatprep.subr.bf16.mxu0 0
        %2215 = vmatpush1.bf16.msra.mxu0 0
        %2216 = vmatprep.subr.bf16.mxu0 0
        %2217 = vmatpush1.bf16.msra.mxu0 0
        %2218 = vmatprep.subr.bf16.mxu0 0
        %2219 = vmatpush1.bf16.msra.mxu0 0
        %2220 = vmatprep.subr.bf16.mxu0 0
        %2221 = vmatpush1.bf16.msra.mxu0 0
        %2222 = vmatprep.subr.bf16.mxu0 0
        %2223 = vmatpush1.bf16.msra.mxu0 0
        %2224 = vmatprep.subr.bf16.mxu0 0
        %2225 = vmatpush1.bf16.msra.mxu0 0
        %2226 = vmatprep.subr.bf16.mxu0 0
        %2227 = vmatpush1.bf16.msra.mxu0 0
        %2228 = vmatprep.subr.bf16.mxu0 0
        %2229 = vmatpush1.bf16.msra.mxu0 0
        %2230 = vmatprep.subr.bf16.mxu0 0
        %2231 = vmatpush1.bf16.msra.mxu0 0
        %2232 = vmatprep.subr.bf16.mxu0 0
        %2233 = vmatpush1.bf16.msra.mxu0 0
        %2234 = vmatprep.subr.bf16.mxu0 0
        %2235 = vmatpush1.bf16.msra.mxu0 0
        %2236 = vmatprep.subr.bf16.mxu0 0
        %2237 = vmatpush1.bf16.msra.mxu0 0
        %2238 = vmatprep.mubr.bf16.mxu0 0
        %2239 = vmatmul.mubr.bf16.gmra.mrb[0].mxu0 %v2204
        %v2240 = vpop.f32.mrb[0].mxu0
        %v2241 = vadd.f32 0.0, %v2240
        %v2242 = vpop.f32.mrb[0].mxu0
        %v2243 = vpop.f32.mrb[0].mxu0
        %v2244 = vadd.f32 0.0, %v2243
        %v2245 = vpop.f32.mrb[0].mxu0
        %2246 = vdwg.mxu0
        %2247 = vst [vmem:[#allocation3] sm:$0xff] %v2241
        %2248 = vst [vmem:[#allocation3 + $0x10] sm:$0xff] %v2244
        %2249 = vmatprep.subr.bf16.mxu0 0
        %2250 = vmatpush1.bf16.xpose.msra.mxu0 %v2125
        %2251 = vmatprep.subr.bf16.mxu0 0
        %2252 = vmatpush1.bf16.xpose.msra.mxu0 0
        %2253 = vmatprep.subr.bf16.mxu0 0
        %2254 = vmatpush1.bf16.xpose.msra.mxu0 0
        %2255 = vmatprep.subr.bf16.mxu0 0
        %2256 = vmatpush1.bf16.xpose.msra.mxu0 0
        %2257 = vmatprep.subr.bf16.mxu0 0
        %2258 = vmatpush1.bf16.xpose.msra.mxu0 0
        %2259 = vmatprep.subr.bf16.mxu0 0
        %2260 = vmatpush1.bf16.xpose.msra.mxu0 0
        %2261 = vmatprep.subr.bf16.mxu0 0
        %2262 = vmatpush1.bf16.xpose.msra.mxu0 0
        %2263 = vmatprep.subr.bf16.mxu0 0
        %2264 = vmatpush1.bf16.xpose.msra.mxu0 0
        %2265 = vmatprep.subr.bf16.mxu0 0
        %2266 = vmatpush1.bf16.xpose.msra.mxu0 0
        %2267 = vmatprep.subr.bf16.mxu0 0
        %2268 = vmatpush1.bf16.xpose.msra.mxu0 0
        %2269 = vmatprep.subr.bf16.mxu0 0
        %2270 = vmatpush1.bf16.xpose.msra.mxu0 0
        %2271 = vmatprep.subr.bf16.mxu0 0
        %2272 = vmatpush1.bf16.xpose.msra.mxu0 0
        %2273 = vmatprep.subr.bf16.mxu0 0
        %2274 = vmatpush1.bf16.xpose.msra.mxu0 0
        %2275 = vmatprep.subr.bf16.mxu0 0
        %2276 = vmatpush1.bf16.xpose.msra.mxu0 0
        %2277 = vmatprep.subr.bf16.mxu0 0
        %2278 = vmatpush1.bf16.xpose.msra.mxu0 0
        %2279 = vmatprep.subr.bf16.mxu0 0
        %2280 = vmatpush1.bf16.xpose.msra.mxu0 0
        %2281 = vmatprep.mubr.bf16.mxu0 0
        %2282 = vmatmul.mubr.bf16.gmra.mrb[0].mxu0 %v2097
        %v2283 = vpop.f32.mrb[0].mxu0
        %v2284 = vadd.f32 0.0, %v2283
        %v2285 = vpop.f32.mrb[0].mxu0
        %v2286 = vpop.f32.mrb[0].mxu0
        %v2287 = vadd.f32 0.0, %v2286
        %v2288 = vpop.f32.mrb[0].mxu0
        %2289 = vdwg.mxu0
        %v2290 = vmul.f32 %v2284, 0.088388346
        %v2291 = vmul.f32 %v2287, 0.088388346
        %v2292 = vadd.f32 %v2290, %v2132
        %v2293 = vadd.f32 %v2291, %v2133
        %v2294 = vsel %vm2179, %v2292, -inf
        %2295 = vmax.xlane.f32.xlu0 %v2294
        %v2296 = vpop.xlane.xlu0 %2295
        %v2297 = vsel %vm2179, %v2293, -inf
        %2298 = vmax.xlane.f32.xlu0 %v2297
        %v2299 = vpop.xlane.xlu0 %2298
        %v2300 = vsub.f32 %v2292, %v2296
        %v2301 = vsub.f32 %v2293, %v2299
        %v2302 = vmul.f32 %v2300, 1.442695
        %v2303 = vpow.pop %v2302
        %v2304 = vmul.f32 %v2301, 1.442695
        %v2305 = vpow.pop %v2304
        %v2306 = vsel %vm2179, %v2303, 0.0
        %2307 = vadd.xlane.f32.xlu0 %v2306
        %v2308 = vpop.xlane.xlu0 %2307
        %v2309 = vsel %vm2179, %v2305, 0.0
        %2310 = vadd.xlane.f32.xlu0 %v2309
        %v2311 = vpop.xlane.xlu0 %2310
        %v2312 = vrcp.pop %v2308
        %v2313 = vrcp.pop %v2311
        %v2314 = vmul.f32 %v2303, %v2312
        %v2315 = vmul.f32 %v2305, %v2313
        %v2316 = vpack.c.bf16 %v2315, %v2314
        %v2318 = vsel %vm2179, %v2316, 0
        %2320 = vmatprep.subr.bf16.mxu0 0
        %2321 = vmatpush1.bf16.msra.mxu0 %v2129
        %2322 = vmatprep.subr.bf16.mxu0 0
        %2323 = vmatpush1.bf16.msra.mxu0 0
        %2324 = vmatprep.subr.bf16.mxu0 0
        %2325 = vmatpush1.bf16.msra.mxu0 0
        %2326 = vmatprep.subr.bf16.mxu0 0
        %2327 = vmatpush1.bf16.msra.mxu0 0
        %2328 = vmatprep.subr.bf16.mxu0 0
        %2329 = vmatpush1.bf16.msra.mxu0 0
        %2330 = vmatprep.subr.bf16.mxu0 0
        %2331 = vmatpush1.bf16.msra.mxu0 0
        %2332 = vmatprep.subr.bf16.mxu0 0
        %2333 = vmatpush1.bf16.msra.mxu0 0
        %2334 = vmatprep.subr.bf16.mxu0 0
        %2335 = vmatpush1.bf16.msra.mxu0 0
        %2336 = vmatprep.subr.bf16.mxu0 0
        %2337 = vmatpush1.bf16.msra.mxu0 0
        %2338 = vmatprep.subr.bf16.mxu0 0
        %2339 = vmatpush1.bf16.msra.mxu0 0
        %2340 = vmatprep.subr.bf16.mxu0 0
        %2341 = vmatpush1.bf16.msra.mxu0 0
        %2342 = vmatprep.subr.bf16.mxu0 0
        %2343 = vmatpush1.bf16.msra.mxu0 0
        %2344 = vmatprep.subr.bf16.mxu0 0
        %2345 = vmatpush1.bf16.msra.mxu0 0
        %2346 = vmatprep.subr.bf16.mxu0 0
        %2347 = vmatpush1.bf16.msra.mxu0 0
        %2348 = vmatprep.subr.bf16.mxu0 0
        %2349 = vmatpush1.bf16.msra.mxu0 0
        %2350 = vmatprep.subr.bf16.mxu0 0
        %2351 = vmatpush1.bf16.msra.mxu0 0
        %2352 = vmatprep.mubr.bf16.mxu0 0
        %2353 = vmatmul.mubr.bf16.gmra.mrb[0].mxu0 %v2318
        %v2354 = vpop.f32.mrb[0].mxu0
        %v2355 = vadd.f32 0.0, %v2354
        %v2356 = vpop.f32.mrb[0].mxu0
        %v2357 = vpop.f32.mrb[0].mxu0
        %v2358 = vadd.f32 0.0, %v2357
        %v2359 = vpop.f32.mrb[0].mxu0
        %2360 = vdwg.mxu0
        %2361 = vst [vmem:[#allocation3 + $0x8] sm:$0xff] %v2355
        %2362 = vst [vmem:[#allocation3 + $0x18] sm:$0xff] %v2358
        %v2363 = vld [vmem:[#allocation4 + $0x10] sm:$0xff]
        %v2364 = vld [vmem:[#allocation4 + $0x18] sm:$0xff]
        %2365 = vmatprep.subr.bf16.mxu0 0
        %2366 = vmatpush1.bf16.xpose.msra.mxu0 %v2126
        %2367 = vmatprep.subr.bf16.mxu0 0
        %2368 = vmatpush1.bf16.xpose.msra.mxu0 0
        %2369 = vmatprep.subr.bf16.mxu0 0
        %2370 = vmatpush1.bf16.xpose.msra.mxu0 0
        %2371 = vmatprep.subr.bf16.mxu0 0
        %2372 = vmatpush1.bf16.xpose.msra.mxu0 0
        %2373 = vmatprep.subr.bf16.mxu0 0
        %2374 = vmatpush1.bf16.xpose.msra.mxu0 0
        %2375 = vmatprep.subr.bf16.mxu0 0
        %2376 = vmatpush1.bf16.xpose.msra.mxu0 0
        %2377 = vmatprep.subr.bf16.mxu0 0
        %2378 = vmatpush1.bf16.xpose.msra.mxu0 0
        %2379 = vmatprep.subr.bf16.mxu0 0
        %2380 = vmatpush1.bf16.xpose.msra.mxu0 0
        %2381 = vmatprep.subr.bf16.mxu0 0
        %2382 = vmatpush1.bf16.xpose.msra.mxu0 0
        %2383 = vmatprep.subr.bf16.mxu0 0
        %2384 = vmatpush1.bf16.xpose.msra.mxu0 0
        %2385 = vmatprep.subr.bf16.mxu0 0
        %2386 = vmatpush1.bf16.xpose.msra.mxu0 0
        %2387 = vmatprep.subr.bf16.mxu0 0
        %2388 = vmatpush1.bf16.xpose.msra.mxu0 0
        %2389 = vmatprep.subr.bf16.mxu0 0
        %2390 = vmatpush1.bf16.xpose.msra.mxu0 0
        %2391 = vmatprep.subr.bf16.mxu0 0
        %2392 = vmatpush1.bf16.xpose.msra.mxu0 0
        %2393 = vmatprep.subr.bf16.mxu0 0
        %2394 = vmatpush1.bf16.xpose.msra.mxu0 0
        %2395 = vmatprep.subr.bf16.mxu0 0
        %2396 = vmatpush1.bf16.xpose.msra.mxu0 0
        %2397 = vmatprep.mubr.bf16.mxu0 0
        %2398 = vmatmul.mubr.bf16.gmra.mrb[0].mxu0 %v2098
        %v2399 = vpop.f32.mrb[0].mxu0
        %v2400 = vadd.f32 0.0, %v2399
        %v2401 = vpop.f32.mrb[0].mxu0
        %v2402 = vpop.f32.mrb[0].mxu0
        %v2403 = vadd.f32 0.0, %v2402
        %v2404 = vpop.f32.mrb[0].mxu0
        %2405 = vdwg.mxu0
        %v2406 = vmul.f32 %v2400, 0.088388346
        %v2407 = vmul.f32 %v2403, 0.088388346
        %v2408 = vadd.f32 %v2406, %v2363
        %v2409 = vadd.f32 %v2407, %v2364
        %v2410 = vsel %vm2179, %v2408, -inf
        %2411 = vmax.xlane.f32.xlu0 %v2410
        %v2412 = vpop.xlane.xlu0 %2411
        %v2413 = vsel %vm2179, %v2409, -inf
        %2414 = vmax.xlane.f32.xlu0 %v2413
        %v2415 = vpop.xlane.xlu0 %2414
        %v2416 = vsub.f32 %v2408, %v2412
        %v2417 = vsub.f32 %v2409, %v2415
        %v2418 = vmul.f32 %v2416, 1.442695
        %v2419 = vpow.pop %v2418
        %v2420 = vmul.f32 %v2417, 1.442695
        %v2421 = vpow.pop %v2420
        %v2422 = vsel %vm2179, %v2419, 0.0
        %2423 = vadd.xlane.f32.xlu0 %v2422
        %v2424 = vpop.xlane.xlu0 %2423
        %v2425 = vsel %vm2179, %v2421, 0.0
        %2426 = vadd.xlane.f32.xlu0 %v2425
        %v2427 = vpop.xlane.xlu0 %2426
        %v2428 = vrcp.pop %v2424
        %v2429 = vrcp.pop %v2427
        %v2430 = vmul.f32 %v2419, %v2428
        %v2431 = vmul.f32 %v2421, %v2429
        %v2432 = vpack.c.bf16 %v2431, %v2430
        %v2434 = vsel %vm2179, %v2432, 0
        %2436 = vmatprep.subr.bf16.mxu0 0
        %2437 = vmatpush1.bf16.msra.mxu0 %v2130
        %2438 = vmatprep.subr.bf16.mxu0 0
        %2439 = vmatpush1.bf16.msra.mxu0 0
        %2440 = vmatprep.subr.bf16.mxu0 0
        %2441 = vmatpush1.bf16.msra.mxu0 0
        %2442 = vmatprep.subr.bf16.mxu0 0
        %2443 = vmatpush1.bf16.msra.mxu0 0
        %2444 = vmatprep.subr.bf16.mxu0 0
        %2445 = vmatpush1.bf16.msra.mxu0 0
        %2446 = vmatprep.subr.bf16.mxu0 0
        %2447 = vmatpush1.bf16.msra.mxu0 0
        %2448 = vmatprep.subr.bf16.mxu0 0
        %2449 = vmatpush1.bf16.msra.mxu0 0
        %2450 = vmatprep.subr.bf16.mxu0 0
        %2451 = vmatpush1.bf16.msra.mxu0 0
        %2452 = vmatprep.subr.bf16.mxu0 0
        %2453 = vmatpush1.bf16.msra.mxu0 0
        %2454 = vmatprep.subr.bf16.mxu0 0
        %2455 = vmatpush1.bf16.msra.mxu0 0
        %2456 = vmatprep.subr.bf16.mxu0 0
        %2457 = vmatpush1.bf16.msra.mxu0 0
        %2458 = vmatprep.subr.bf16.mxu0 0
        %2459 = vmatpush1.bf16.msra.mxu0 0
        %2460 = vmatprep.subr.bf16.mxu0 0
        %2461 = vmatpush1.bf16.msra.mxu0 0
        %2462 = vmatprep.subr.bf16.mxu0 0
        %2463 = vmatpush1.bf16.msra.mxu0 0
        %2464 = vmatprep.subr.bf16.mxu0 0
        %2465 = vmatpush1.bf16.msra.mxu0 0
        %2466 = vmatprep.subr.bf16.mxu0 0
        %2467 = vmatpush1.bf16.msra.mxu0 0
        %2468 = vmatprep.mubr.bf16.mxu0 0
        %2469 = vmatmul.mubr.bf16.gmra.mrb[0].mxu0 %v2434
        %v2470 = vpop.f32.mrb[0].mxu0
        %v2471 = vadd.f32 0.0, %v2470
        %v2472 = vpop.f32.mrb[0].mxu0
        %v2473 = vpop.f32.mrb[0].mxu0
        %v2474 = vadd.f32 0.0, %v2473
        %v2475 = vpop.f32.mrb[0].mxu0
        %2476 = vdwg.mxu0
        %2477 = vst [vmem:[#allocation3 + $0x20] sm:$0xff] %v2471
        %2478 = vst [vmem:[#allocation3 + $0x30] sm:$0xff] %v2474
        %2479 = vmatprep.subr.bf16.mxu0 0
        %2480 = vmatpush1.bf16.xpose.msra.mxu0 %v2127
        %2481 = vmatprep.subr.bf16.mxu0 0
        %2482 = vmatpush1.bf16.xpose.msra.mxu0 0
        %2483 = vmatprep.subr.bf16.mxu0 0
        %2484 = vmatpush1.bf16.xpose.msra.mxu0 0
        %2485 = vmatprep.subr.bf16.mxu0 0
        %2486 = vmatpush1.bf16.xpose.msra.mxu0 0
        %2487 = vmatprep.subr.bf16.mxu0 0
        %2488 = vmatpush1.bf16.xpose.msra.mxu0 0
        %2489 = vmatprep.subr.bf16.mxu0 0
        %2490 = vmatpush1.bf16.xpose.msra.mxu0 0
        %2491 = vmatprep.subr.bf16.mxu0 0
        %2492 = vmatpush1.bf16.xpose.msra.mxu0 0
        %2493 = vmatprep.subr.bf16.mxu0 0
        %2494 = vmatpush1.bf16.xpose.msra.mxu0 0
        %2495 = vmatprep.subr.bf16.mxu0 0
        %2496 = vmatpush1.bf16.xpose.msra.mxu0 0
        %2497 = vmatprep.subr.bf16.mxu0 0
        %2498 = vmatpush1.bf16.xpose.msra.mxu0 0
        %2499 = vmatprep.subr.bf16.mxu0 0
        %2500 = vmatpush1.bf16.xpose.msra.mxu0 0
        %2501 = vmatprep.subr.bf16.mxu0 0
        %2502 = vmatpush1.bf16.xpose.msra.mxu0 0
        %2503 = vmatprep.subr.bf16.mxu0 0
        %2504 = vmatpush1.bf16.xpose.msra.mxu0 0
        %2505 = vmatprep.subr.bf16.mxu0 0
        %2506 = vmatpush1.bf16.xpose.msra.mxu0 0
        %2507 = vmatprep.subr.bf16.mxu0 0
        %2508 = vmatpush1.bf16.xpose.msra.mxu0 0
        %2509 = vmatprep.subr.bf16.mxu0 0
        %2510 = vmatpush1.bf16.xpose.msra.mxu0 0
        %2511 = vmatprep.mubr.bf16.mxu0 0
        %2512 = vmatmul.mubr.bf16.gmra.mrb[0].mxu0 %v2099
        %v2513 = vpop.f32.mrb[0].mxu0
        %v2514 = vadd.f32 0.0, %v2513
        %v2515 = vpop.f32.mrb[0].mxu0
        %v2516 = vpop.f32.mrb[0].mxu0
        %v2517 = vadd.f32 0.0, %v2516
        %v2518 = vpop.f32.mrb[0].mxu0
        %2519 = vdwg.mxu0
        %v2520 = vmul.f32 %v2514, 0.088388346
        %v2521 = vmul.f32 %v2517, 0.088388346
        %v2522 = vadd.f32 %v2520, %v2363
        %v2523 = vadd.f32 %v2521, %v2364
        %v2524 = vsel %vm2179, %v2522, -inf
        %2525 = vmax.xlane.f32.xlu0 %v2524
        %v2526 = vpop.xlane.xlu0 %2525
        %v2527 = vsel %vm2179, %v2523, -inf
        %2528 = vmax.xlane.f32.xlu0 %v2527
        %v2529 = vpop.xlane.xlu0 %2528
        %v2530 = vsub.f32 %v2522, %v2526
        %v2531 = vsub.f32 %v2523, %v2529
        %v2532 = vmul.f32 %v2530, 1.442695
        %v2533 = vpow.pop %v2532
        %v2534 = vmul.f32 %v2531, 1.442695
        %v2535 = vpow.pop %v2534
        %v2536 = vsel %vm2179, %v2533, 0.0
        %2537 = vadd.xlane.f32.xlu0 %v2536
        %v2538 = vpop.xlane.xlu0 %2537
        %v2539 = vsel %vm2179, %v2535, 0.0
        %2540 = vadd.xlane.f32.xlu0 %v2539
        %v2541 = vpop.xlane.xlu0 %2540
        %v2542 = vrcp.pop %v2538
        %v2543 = vrcp.pop %v2541
        %v2544 = vmul.f32 %v2533, %v2542
        %v2545 = vmul.f32 %v2535, %v2543
        %v2546 = vpack.c.bf16 %v2545, %v2544
        %v2548 = vsel %vm2179, %v2546, 0
        %2550 = vmatprep.subr.bf16.mxu0 0
        %2551 = vmatpush1.bf16.msra.mxu0 %v2131
        %2552 = vmatprep.subr.bf16.mxu0 0
        %2553 = vmatpush1.bf16.msra.mxu0 0
        %2554 = vmatprep.subr.bf16.mxu0 0
        %2555 = vmatpush1.bf16.msra.mxu0 0
        %2556 = vmatprep.subr.bf16.mxu0 0
        %2557 = vmatpush1.bf16.msra.mxu0 0
        %2558 = vmatprep.subr.bf16.mxu0 0
        %2559 = vmatpush1.bf16.msra.mxu0 0
        %2560 = vmatprep.subr.bf16.mxu0 0
        %2561 = vmatpush1.bf16.msra.mxu0 0
        %2562 = vmatprep.subr.bf16.mxu0 0
        %2563 = vmatpush1.bf16.msra.mxu0 0
        %2564 = vmatprep.subr.bf16.mxu0 0
        %2565 = vmatpush1.bf16.msra.mxu0 0
        %2566 = vmatprep.subr.bf16.mxu0 0
        %2567 = vmatpush1.bf16.msra.mxu0 0
        %2568 = vmatprep.subr.bf16.mxu0 0
        %2569 = vmatpush1.bf16.msra.mxu0 0
        %2570 = vmatprep.subr.bf16.mxu0 0
        %2571 = vmatpush1.bf16.msra.mxu0 0
        %2572 = vmatprep.subr.bf16.mxu0 0
        %2573 = vmatpush1.bf16.msra.mxu0 0
        %2574 = vmatprep.subr.bf16.mxu0 0
        %2575 = vmatpush1.bf16.msra.mxu0 0
        %2576 = vmatprep.subr.bf16.mxu0 0
        %2577 = vmatpush1.bf16.msra.mxu0 0
        %2578 = vmatprep.subr.bf16.mxu0 0
        %2579 = vmatpush1.bf16.msra.mxu0 0
        %2580 = vmatprep.subr.bf16.mxu0 0
        %2581 = vmatpush1.bf16.msra.mxu0 0
        %2582 = vmatprep.mubr.bf16.mxu0 0
        %2583 = vmatmul.mubr.bf16.gmra.mrb[0].mxu0 %v2548
        %v2584 = vpop.f32.mrb[0].mxu0
        %v2585 = vadd.f32 0.0, %v2584
        %v2586 = vpop.f32.mrb[0].mxu0
        %v2587 = vpop.f32.mrb[0].mxu0
        %v2588 = vadd.f32 0.0, %v2587
        %v2589 = vpop.f32.mrb[0].mxu0
        %2590 = vdwg.mxu0
        %2591 = vst [vmem:[#allocation3 + $0x28] sm:$0xff] %v2585
        %2592 = vst [vmem:[#allocation3 + $0x38] sm:$0xff] %v2588
        %v2593 = vld [vmem:[#allocation3] sm:$0xff]
        %v2594 = vld [vmem:[#allocation3 + $0x8] sm:$0xff]
        %v2595 = vld [vmem:[#allocation3 + $0x10] sm:$0xff]
        %v2596 = vld [vmem:[#allocation3 + $0x18] sm:$0xff]
        %v2597 = vld [vmem:[#allocation3 + $0x20] sm:$0xff]
        %v2598 = vld [vmem:[#allocation3 + $0x28] sm:$0xff]
        %v2599 = vld [vmem:[#allocation3 + $0x30] sm:$0xff]
        %v2600 = vld [vmem:[#allocation3 + $0x38] sm:$0xff]
        %v2601 = vpack.c.bf16 %v2595, %v2593
        %v2602 = vpack.c.bf16 %v2596, %v2594
        %v2603 = vpack.c.bf16 %v2599, %v2597
        %v2604 = vpack.c.bf16 %v2600, %v2598
        %v2605 = vld [vmem:[%s577] sm:$0xff]
        %v2606 = vld [vmem:[%s577 + $0x8] sm:$0xff]
        %v2607 = vld [vmem:[%s577 + $0x10] sm:$0xff]
        %v2608 = vld [vmem:[%s577 + $0x18] sm:$0xff]
        %v2609 = vld [vmem:[%s577 + $0x20] sm:$0xff]
        %v2610 = vld [vmem:[%s577 + $0x28] sm:$0xff]
        %v2611 = vld [vmem:[%s577 + $0x30] sm:$0xff]
        %v2612 = vld [vmem:[%s577 + $0x38] sm:$0xff]
        %v2613 = vld [vmem:[%s577 + $0x40] sm:$0xff]
        %v2614 = vld [vmem:[%s577 + $0x48] sm:$0xff]
        %v2615 = vld [vmem:[%s577 + $0x50] sm:$0xff]
        %v2616 = vld [vmem:[%s577 + $0x58] sm:$0xff]
        %v2617 = vld [vmem:[%s577 + $0x60] sm:$0xff]
        %v2618 = vld [vmem:[%s577 + $0x68] sm:$0xff]
        %v2619 = vld [vmem:[%s577 + $0x70] sm:$0xff]
        %v2620 = vld [vmem:[%s577 + $0x78] sm:$0xff]
        %v2621 = vld [vmem:[%s577 + $0x80] sm:$0xff]
        %v2622 = vld [vmem:[%s577 + $0x88] sm:$0xff]
        %v2623 = vld [vmem:[%s577 + $0x90] sm:$0xff]
        %v2624 = vld [vmem:[%s577 + $0x98] sm:$0xff]
        %v2625 = vld [vmem:[%s577 + $0xa0] sm:$0xff]
        %v2626 = vld [vmem:[%s577 + $0xa8] sm:$0xff]
        %v2627 = vld [vmem:[%s577 + $0xb0] sm:$0xff]
        %v2628 = vld [vmem:[%s577 + $0xb8] sm:$0xff]
        %v2629 = vld [vmem:[%s577 + $0xc0] sm:$0xff]
        %v2630 = vld [vmem:[%s577 + $0xc8] sm:$0xff]
        %v2631 = vld [vmem:[%s577 + $0xd0] sm:$0xff]
        %v2632 = vld [vmem:[%s577 + $0xd8] sm:$0xff]
        %v2633 = vld [vmem:[%s577 + $0xe0] sm:$0xff]
        %v2634 = vld [vmem:[%s577 + $0xe8] sm:$0xff]
        %v2635 = vld [vmem:[%s577 + $0xf0] sm:$0xff]
        %v2636 = vld [vmem:[%s577 + $0xf8] sm:$0xff]
        %v2669 = vunpack.c.l.b16 %v2605
        %v2670 = vunpack.c.h.b16 %v2605
        %v2671 = vunpack.c.l.b16 %v2606
        %v2672 = vunpack.c.h.b16 %v2606
        %v2673 = vunpack.c.l.b16 %v2607
        %v2674 = vunpack.c.h.b16 %v2607
        %v2675 = vunpack.c.l.b16 %v2608
        %v2676 = vunpack.c.h.b16 %v2608
        %v2677 = vunpack.c.l.b16 %v2609
        %v2678 = vunpack.c.h.b16 %v2609
        %v2679 = vunpack.c.l.b16 %v2610
        %v2680 = vunpack.c.h.b16 %v2610
        %v2681 = vunpack.c.l.b16 %v2611
        %v2682 = vunpack.c.h.b16 %v2611
        %v2683 = vunpack.c.l.b16 %v2612
        %v2684 = vunpack.c.h.b16 %v2612
        %v2685 = vunpack.c.l.b16 %v2613
        %v2686 = vunpack.c.h.b16 %v2613
        %v2687 = vunpack.c.l.b16 %v2614
        %v2688 = vunpack.c.h.b16 %v2614
        %v2689 = vunpack.c.l.b16 %v2615
        %v2690 = vunpack.c.h.b16 %v2615
        %v2691 = vunpack.c.l.b16 %v2616
        %v2692 = vunpack.c.h.b16 %v2616
        %v2693 = vunpack.c.l.b16 %v2617
        %v2694 = vunpack.c.h.b16 %v2617
        %v2695 = vunpack.c.l.b16 %v2618
        %v2696 = vunpack.c.h.b16 %v2618
        %v2697 = vunpack.c.l.b16 %v2619
        %v2698 = vunpack.c.h.b16 %v2619
        %v2699 = vunpack.c.l.b16 %v2620
        %v2700 = vunpack.c.h.b16 %v2620
        %v2701 = vunpack.c.l.b16 %v2621
        %v2702 = vunpack.c.h.b16 %v2621
        %v2703 = vunpack.c.l.b16 %v2622
        %v2704 = vunpack.c.h.b16 %v2622
        %v2705 = vunpack.c.l.b16 %v2623
        %v2706 = vunpack.c.h.b16 %v2623
        %v2707 = vunpack.c.l.b16 %v2624
        %v2708 = vunpack.c.h.b16 %v2624
        %v2709 = vunpack.c.l.b16 %v2625
        %v2710 = vunpack.c.h.b16 %v2625
        %v2711 = vunpack.c.l.b16 %v2626
        %v2712 = vunpack.c.h.b16 %v2626
        %v2713 = vunpack.c.l.b16 %v2627
        %v2714 = vunpack.c.h.b16 %v2627
        %v2715 = vunpack.c.l.b16 %v2628
        %v2716 = vunpack.c.h.b16 %v2628
        %v2717 = vunpack.c.l.b16 %v2629
        %v2718 = vunpack.c.h.b16 %v2629
        %v2719 = vunpack.c.l.b16 %v2630
        %v2720 = vunpack.c.h.b16 %v2630
        %v2721 = vunpack.c.l.b16 %v2631
        %v2722 = vunpack.c.h.b16 %v2631
        %v2723 = vunpack.c.l.b16 %v2632
        %v2724 = vunpack.c.h.b16 %v2632
        %v2725 = vunpack.c.l.b16 %v2633
        %v2726 = vunpack.c.h.b16 %v2633
        %v2727 = vunpack.c.l.b16 %v2634
        %v2728 = vunpack.c.h.b16 %v2634
        %v2729 = vunpack.c.l.b16 %v2635
        %v2730 = vunpack.c.h.b16 %v2635
        %v2731 = vunpack.c.l.b16 %v2636
        %v2732 = vunpack.c.h.b16 %v2636
        %v2733 = vpack.c.b16 %v2671, %v2669
        %v2734 = vpack.c.b16 %v2672, %v2670
        %v2735 = vpack.c.b16 %v2675, %v2673
        %v2736 = vpack.c.b16 %v2676, %v2674
        %v2737 = vpack.c.b16 %v2679, %v2677
        %v2738 = vpack.c.b16 %v2680, %v2678
        %v2739 = vpack.c.b16 %v2683, %v2681
        %v2740 = vpack.c.b16 %v2684, %v2682
        %v2741 = vpack.c.b16 %v2687, %v2685
        %v2742 = vpack.c.b16 %v2688, %v2686
        %v2743 = vpack.c.b16 %v2691, %v2689
        %v2744 = vpack.c.b16 %v2692, %v2690
        %v2745 = vpack.c.b16 %v2695, %v2693
        %v2746 = vpack.c.b16 %v2696, %v2694
        %v2747 = vpack.c.b16 %v2699, %v2697
        %v2748 = vpack.c.b16 %v2700, %v2698
        %v2749 = vpack.c.b16 %v2703, %v2701
        %v2750 = vpack.c.b16 %v2704, %v2702
        %v2751 = vpack.c.b16 %v2707, %v2705
        %v2752 = vpack.c.b16 %v2708, %v2706
        %v2753 = vpack.c.b16 %v2711, %v2709
        %v2754 = vpack.c.b16 %v2712, %v2710
        %v2755 = vpack.c.b16 %v2715, %v2713
        %v2756 = vpack.c.b16 %v2716, %v2714
        %v2757 = vpack.c.b16 %v2719, %v2717
        %v2758 = vpack.c.b16 %v2720, %v2718
        %v2759 = vpack.c.b16 %v2723, %v2721
        %v2760 = vpack.c.b16 %v2724, %v2722
        %v2761 = vpack.c.b16 %v2727, %v2725
        %v2762 = vpack.c.b16 %v2728, %v2726
        %v2763 = vpack.c.b16 %v2731, %v2729
        %v2764 = vpack.c.b16 %v2732, %v2730
        %2797 = vmatprep.subr.bf16.mxu0 %v2734
        %2798 = vmatpush1.bf16.msra.mxu0 %v2733
        %2799 = vmatprep.subr.bf16.mxu0 %v2736
        %2800 = vmatpush1.bf16.msra.mxu0 %v2735
        %2801 = vmatprep.subr.bf16.mxu0 %v2738
        %2802 = vmatpush1.bf16.msra.mxu0 %v2737
        %2803 = vmatprep.subr.bf16.mxu0 %v2740
        %2804 = vmatpush1.bf16.msra.mxu0 %v2739
        %2805 = vmatprep.subr.bf16.mxu0 %v2742
        %2806 = vmatpush1.bf16.msra.mxu0 %v2741
        %2807 = vmatprep.subr.bf16.mxu0 %v2744
        %2808 = vmatpush1.bf16.msra.mxu0 %v2743
        %2809 = vmatprep.subr.bf16.mxu0 %v2746
        %2810 = vmatpush1.bf16.msra.mxu0 %v2745
        %2811 = vmatprep.subr.bf16.mxu0 %v2748
        %2812 = vmatpush1.bf16.msra.mxu0 %v2747
        %2813 = vmatprep.subr.bf16.mxu0 %v2750
        %2814 = vmatpush1.bf16.msra.mxu0 %v2749
        %2815 = vmatprep.subr.bf16.mxu0 %v2752
        %2816 = vmatpush1.bf16.msra.mxu0 %v2751
        %2817 = vmatprep.subr.bf16.mxu0 %v2754
        %2818 = vmatpush1.bf16.msra.mxu0 %v2753
        %2819 = vmatprep.subr.bf16.mxu0 %v2756
        %2820 = vmatpush1.bf16.msra.mxu0 %v2755
        %2821 = vmatprep.subr.bf16.mxu0 %v2758
        %2822 = vmatpush1.bf16.msra.mxu0 %v2757
        %2823 = vmatprep.subr.bf16.mxu0 %v2760
        %2824 = vmatpush1.bf16.msra.mxu0 %v2759
        %2825 = vmatprep.subr.bf16.mxu0 %v2762
        %2826 = vmatpush1.bf16.msra.mxu0 %v2761
        %2827 = vmatprep.subr.bf16.mxu0 %v2764
        %2828 = vmatpush1.bf16.msra.mxu0 %v2763
        %2829 = vmatprep.mubr.bf16.mxu0 %v2602
        %2830 = vmatmul.mubr.bf16.gmra.mrb[0].mxu0 %v2601
        %v2831 = vpop.f32.mrb[0].mxu0
        %v2832 = vadd.f32 0.0, %v2831
        %v2833 = vpop.f32.mrb[0].mxu0
        %v2834 = vadd.f32 0.0, %v2833
        %v2835 = vpop.f32.mrb[0].mxu0
        %v2836 = vadd.f32 0.0, %v2835
        %v2837 = vpop.f32.mrb[0].mxu0
        %v2838 = vadd.f32 0.0, %v2837
        %2839 = vmatprep.mubr.bf16.mxu0 %v2604
        %2840 = vmatmul.mubr.bf16.gmra.mrb[0].mxu0 %v2603
        %v2841 = vpop.f32.mrb[0].mxu0
        %v2842 = vadd.f32 0.0, %v2841
        %v2843 = vpop.f32.mrb[0].mxu0
        %v2844 = vadd.f32 0.0, %v2843
        %v2845 = vpop.f32.mrb[0].mxu0
        %v2846 = vadd.f32 0.0, %v2845
        %v2847 = vpop.f32.mrb[0].mxu0
        %v2848 = vadd.f32 0.0, %v2847
        %2849 = vdwg.mxu0
        %v2850 = vadd.f32 %v704, %v2832
        %v2851 = vadd.f32 %v705, %v2834
        %v2852 = vadd.f32 %v706, %v2836
        %v2853 = vadd.f32 %v707, %v2838
        %v2854 = vadd.f32 %v708, %v2842
        %v2855 = vadd.f32 %v709, %v2844
        %v2856 = vadd.f32 %v710, %v2846
        %v2857 = vadd.f32 %v711, %v2848
        %v2858 = vld [vmem:[%s586] sm:$0x3]
        %v2859 = vmul.f32 %v2850, %v2850
        %v2860 = vmul.f32 %v2851, %v2851
        %v2861 = vmul.f32 %v2852, %v2852
        %v2862 = vmul.f32 %v2853, %v2853
        %v2863 = vmul.f32 %v2854, %v2854
        %v2864 = vmul.f32 %v2855, %v2855
        %v2865 = vmul.f32 %v2856, %v2856
        %v2866 = vmul.f32 %v2857, %v2857
        %v2867 = vadd.f32 %v2859, %v2860
        %2868 = vadd.xlane.f32.xlu0 %v2867
        %v2869 = vpop.xlane.xlu0 %2868
        %v2870 = vadd.f32 %v2861, %v2862
        %2871 = vadd.xlane.f32.xlu0 %v2870
        %v2872 = vpop.xlane.xlu0 %2871
        %v2873 = vadd.f32 %v2863, %v2864
        %2874 = vadd.xlane.f32.xlu0 %v2873
        %v2875 = vpop.xlane.xlu0 %2874
        %v2876 = vadd.f32 %v2865, %v2866
        %2877 = vadd.xlane.f32.xlu0 %v2876
        %v2878 = vpop.xlane.xlu0 %2877
        %v2879 = vmul.f32 %v2869, %v749
        %v2880 = vmul.f32 %v2872, %v749
        %v2881 = vmul.f32 %v2875, %v749
        %v2882 = vmul.f32 %v2878, %v749
        %v2883 = vadd.f32 %v2879, 1e-06
        %v2884 = vadd.f32 %v2880, 1e-06
        %v2885 = vadd.f32 %v2881, 1e-06
        %v2886 = vadd.f32 %v2882, 1e-06
        %v2887 = vrsqrt.pop %v2883
        %v2888 = vrsqrt.pop %v2884
        %v2889 = vrsqrt.pop %v2885
        %v2890 = vrsqrt.pop %v2886
        %v2891 = vmul.f32 %v2850, %v2887
        %v2892 = vmul.f32 %v2851, %v2887
        %v2893 = vmul.f32 %v2852, %v2888
        %v2894 = vmul.f32 %v2853, %v2888
        %v2895 = vmul.f32 %v2854, %v2889
        %v2896 = vmul.f32 %v2855, %v2889
        %v2897 = vmul.f32 %v2856, %v2890
        %v2898 = vmul.f32 %v2857, %v2890
        %v2900 = vlaneseq
        %v2901 = vshrl.u32 %v2900, 7
        %v2902 = vsub.s32 0, %v2901
        %v2903 = vrot.slane %v2858, %v2902
        %v2904 = vlaneseq
        %v2905 = vshrl.u32 %v2904, 7
        %v2906 = vsub.s32 1, %v2905
        %v2907 = vrot.slane %v2858, %v2906
        %v2910 = vmul.f32 %v2891, %v2903
        %v2911 = vmul.f32 %v2892, %v2907
        %v2912 = vmul.f32 %v2893, %v2903
        %v2913 = vmul.f32 %v2894, %v2907
        %v2914 = vmul.f32 %v2895, %v2903
        %v2915 = vmul.f32 %v2896, %v2907
        %v2916 = vmul.f32 %v2897, %v2903
        %v2917 = vmul.f32 %v2898, %v2907
        %v2918 = vpack.c.bf16 %v2912, %v2910
        %v2919 = vpack.c.bf16 %v2913, %v2911
        %v2920 = vpack.c.bf16 %v2916, %v2914
        %v2921 = vpack.c.bf16 %v2917, %v2915
        %v2922 = vld [vmem:[%s595] sm:$0xff]
        %v2923 = vld [vmem:[%s595 + $0x8] sm:$0xff]
        %v2924 = vld [vmem:[%s595 + $0x10] sm:$0xff]
        %v2925 = vld [vmem:[%s595 + $0x18] sm:$0xff]
        %v2926 = vld [vmem:[%s595 + $0x20] sm:$0xff]
        %v2927 = vld [vmem:[%s595 + $0x28] sm:$0xff]
        %v2928 = vld [vmem:[%s595 + $0x30] sm:$0xff]
        %v2929 = vld [vmem:[%s595 + $0x38] sm:$0xff]
        %v2930 = vld [vmem:[%s595 + $0x40] sm:$0xff]
        %v2931 = vld [vmem:[%s595 + $0x48] sm:$0xff]
        %v2932 = vld [vmem:[%s595 + $0x50] sm:$0xff]
        %v2933 = vld [vmem:[%s595 + $0x58] sm:$0xff]
        %v2934 = vld [vmem:[%s595 + $0x60] sm:$0xff]
        %v2935 = vld [vmem:[%s595 + $0x68] sm:$0xff]
        %v2936 = vld [vmem:[%s595 + $0x70] sm:$0xff]
        %v2937 = vld [vmem:[%s595 + $0x78] sm:$0xff]
        %v2938 = vld [vmem:[%s595 + $0x80] sm:$0xff]
        %v2939 = vld [vmem:[%s595 + $0x88] sm:$0xff]
        %v2940 = vld [vmem:[%s595 + $0x90] sm:$0xff]
        %v2941 = vld [vmem:[%s595 + $0x98] sm:$0xff]
        %v2942 = vld [vmem:[%s595 + $0xa0] sm:$0xff]
        %v2943 = vld [vmem:[%s595 + $0xa8] sm:$0xff]
        %v2944 = vld [vmem:[%s595 + $0xb0] sm:$0xff]
        %v2945 = vld [vmem:[%s595 + $0xb8] sm:$0xff]
        %v2946 = vld [vmem:[%s595 + $0xc0] sm:$0xff]
        %v2947 = vld [vmem:[%s595 + $0xc8] sm:$0xff]
        %v2948 = vld [vmem:[%s595 + $0xd0] sm:$0xff]
        %v2949 = vld [vmem:[%s595 + $0xd8] sm:$0xff]
        %v2950 = vld [vmem:[%s595 + $0xe0] sm:$0xff]
        %v2951 = vld [vmem:[%s595 + $0xe8] sm:$0xff]
        %v2952 = vld [vmem:[%s595 + $0xf0] sm:$0xff]
        %v2953 = vld [vmem:[%s595 + $0xf8] sm:$0xff]
        %v2954 = vld [vmem:[%s595 + $0x100] sm:$0xff]
        %v2955 = vld [vmem:[%s595 + $0x108] sm:$0xff]
        %v2956 = vld [vmem:[%s595 + $0x110] sm:$0xff]
        %v2957 = vld [vmem:[%s595 + $0x118] sm:$0xff]
        %v2958 = vld [vmem:[%s595 + $0x120] sm:$0xff]
        %v2959 = vld [vmem:[%s595 + $0x128] sm:$0xff]
        %v2960 = vld [vmem:[%s595 + $0x130] sm:$0xff]
        %v2961 = vld [vmem:[%s595 + $0x138] sm:$0xff]
        %v2962 = vld [vmem:[%s595 + $0x140] sm:$0xff]
        %v2963 = vld [vmem:[%s595 + $0x148] sm:$0xff]
        %v2964 = vld [vmem:[%s595 + $0x150] sm:$0xff]
        %v2965 = vld [vmem:[%s595 + $0x158] sm:$0xff]
        %v2966 = vld [vmem:[%s595 + $0x160] sm:$0xff]
        %v2967 = vld [vmem:[%s595 + $0x168] sm:$0xff]
        %v2968 = vld [vmem:[%s595 + $0x170] sm:$0xff]
        %v2969 = vld [vmem:[%s595 + $0x178] sm:$0xff]
        %v2970 = vld [vmem:[%s595 + $0x180] sm:$0xff]
        %v2971 = vld [vmem:[%s595 + $0x188] sm:$0xff]
        %v2972 = vld [vmem:[%s595 + $0x190] sm:$0xff]
        %v2973 = vld [vmem:[%s595 + $0x198] sm:$0xff]
        %v2974 = vld [vmem:[%s595 + $0x1a0] sm:$0xff]
        %v2975 = vld [vmem:[%s595 + $0x1a8] sm:$0xff]
        %v2976 = vld [vmem:[%s595 + $0x1b0] sm:$0xff]
        %v2977 = vld [vmem:[%s595 + $0x1b8] sm:$0xff]
        %v2978 = vld [vmem:[%s595 + $0x1c0] sm:$0xff]
        %v2979 = vld [vmem:[%s595 + $0x1c8] sm:$0xff]
        %v2980 = vld [vmem:[%s595 + $0x1d0] sm:$0xff]
        %v2981 = vld [vmem:[%s595 + $0x1d8] sm:$0xff]
        %v2982 = vld [vmem:[%s595 + $0x1e0] sm:$0xff]
        %v2983 = vld [vmem:[%s595 + $0x1e8] sm:$0xff]
        %v2984 = vld [vmem:[%s595 + $0x1f0] sm:$0xff]
        %v2985 = vld [vmem:[%s595 + $0x1f8] sm:$0xff]
        %v2986 = vld [vmem:[%s595 + $0x200] sm:$0xff]
        %v2987 = vld [vmem:[%s595 + $0x208] sm:$0xff]
        %v2988 = vld [vmem:[%s595 + $0x210] sm:$0xff]
        %v2989 = vld [vmem:[%s595 + $0x218] sm:$0xff]
        %v2990 = vld [vmem:[%s595 + $0x220] sm:$0xff]
        %v2991 = vld [vmem:[%s595 + $0x228] sm:$0xff]
        %v2992 = vld [vmem:[%s595 + $0x230] sm:$0xff]
        %v2993 = vld [vmem:[%s595 + $0x238] sm:$0xff]
        %v2994 = vld [vmem:[%s595 + $0x240] sm:$0xff]
        %v2995 = vld [vmem:[%s595 + $0x248] sm:$0xff]
        %v2996 = vld [vmem:[%s595 + $0x250] sm:$0xff]
        %v2997 = vld [vmem:[%s595 + $0x258] sm:$0xff]
        %v2998 = vld [vmem:[%s595 + $0x260] sm:$0xff]
        %v2999 = vld [vmem:[%s595 + $0x268] sm:$0xff]
        %v3000 = vld [vmem:[%s595 + $0x270] sm:$0xff]
        %v3001 = vld [vmem:[%s595 + $0x278] sm:$0xff]
        %v3002 = vld [vmem:[%s595 + $0x280] sm:$0xff]
        %v3003 = vld [vmem:[%s595 + $0x288] sm:$0xff]
        %v3004 = vld [vmem:[%s595 + $0x290] sm:$0xff]
        %v3005 = vld [vmem:[%s595 + $0x298] sm:$0xff]
        %v3006 = vld [vmem:[%s595 + $0x2a0] sm:$0xff]
        %v3007 = vld [vmem:[%s595 + $0x2a8] sm:$0xff]
        %v3008 = vld [vmem:[%s595 + $0x2b0] sm:$0xff]
        %v3009 = vld [vmem:[%s595 + $0x2b8] sm:$0xff]
        %v3010 = vld [vmem:[%s595 + $0x2c0] sm:$0xff]
        %v3011 = vld [vmem:[%s595 + $0x2c8] sm:$0xff]
        %v3012 = vld [vmem:[%s595 + $0x2d0] sm:$0xff]
        %v3013 = vld [vmem:[%s595 + $0x2d8] sm:$0xff]
        %v3014 = vld [vmem:[%s595 + $0x2e0] sm:$0xff]
        %v3015 = vld [vmem:[%s595 + $0x2e8] sm:$0xff]
        %v3016 = vld [vmem:[%s595 + $0x2f0] sm:$0xff]
        %v3017 = vld [vmem:[%s595 + $0x2f8] sm:$0xff]
        %v3018 = vld [vmem:[%s595 + $0x300] sm:$0xff]
        %v3019 = vld [vmem:[%s595 + $0x308] sm:$0xff]
        %v3020 = vld [vmem:[%s595 + $0x310] sm:$0xff]
        %v3021 = vld [vmem:[%s595 + $0x318] sm:$0xff]
        %v3022 = vld [vmem:[%s595 + $0x320] sm:$0xff]
        %v3023 = vld [vmem:[%s595 + $0x328] sm:$0xff]
        %v3024 = vld [vmem:[%s595 + $0x330] sm:$0xff]
        %v3025 = vld [vmem:[%s595 + $0x338] sm:$0xff]
        %v3026 = vld [vmem:[%s595 + $0x340] sm:$0xff]
        %v3027 = vld [vmem:[%s595 + $0x348] sm:$0xff]
        %v3028 = vld [vmem:[%s595 + $0x350] sm:$0xff]
        %v3029 = vld [vmem:[%s595 + $0x358] sm:$0xff]
        %v3030 = vld [vmem:[%s595 + $0x360] sm:$0xff]
        %v3031 = vld [vmem:[%s595 + $0x368] sm:$0xff]
        %v3032 = vld [vmem:[%s595 + $0x370] sm:$0xff]
        %v3033 = vld [vmem:[%s595 + $0x378] sm:$0xff]
        %v3034 = vld [vmem:[%s595 + $0x380] sm:$0xff]
        %v3035 = vld [vmem:[%s595 + $0x388] sm:$0xff]
        %v3036 = vld [vmem:[%s595 + $0x390] sm:$0xff]
        %v3037 = vld [vmem:[%s595 + $0x398] sm:$0xff]
        %v3038 = vld [vmem:[%s595 + $0x3a0] sm:$0xff]
        %v3039 = vld [vmem:[%s595 + $0x3a8] sm:$0xff]
        %v3040 = vld [vmem:[%s595 + $0x3b0] sm:$0xff]
        %v3041 = vld [vmem:[%s595 + $0x3b8] sm:$0xff]
        %v3042 = vld [vmem:[%s595 + $0x3c0] sm:$0xff]
        %v3043 = vld [vmem:[%s595 + $0x3c8] sm:$0xff]
        %v3044 = vld [vmem:[%s595 + $0x3d0] sm:$0xff]
        %v3045 = vld [vmem:[%s595 + $0x3d8] sm:$0xff]
        %v3046 = vld [vmem:[%s595 + $0x3e0] sm:$0xff]
        %v3047 = vld [vmem:[%s595 + $0x3e8] sm:$0xff]
        %v3048 = vld [vmem:[%s595 + $0x3f0] sm:$0xff]
        %v3049 = vld [vmem:[%s595 + $0x3f8] sm:$0xff]
        %v3178 = vunpack.c.l.b16 %v2922
        %v3179 = vunpack.c.h.b16 %v2922
        %v3180 = vunpack.c.l.b16 %v2923
        %v3181 = vunpack.c.h.b16 %v2923
        %v3182 = vunpack.c.l.b16 %v2924
        %v3183 = vunpack.c.h.b16 %v2924
        %v3184 = vunpack.c.l.b16 %v2925
        %v3185 = vunpack.c.h.b16 %v2925
        %v3186 = vunpack.c.l.b16 %v2926
        %v3187 = vunpack.c.h.b16 %v2926
        %v3188 = vunpack.c.l.b16 %v2927
        %v3189 = vunpack.c.h.b16 %v2927
        %v3190 = vunpack.c.l.b16 %v2928
        %v3191 = vunpack.c.h.b16 %v2928
        %v3192 = vunpack.c.l.b16 %v2929
        %v3193 = vunpack.c.h.b16 %v2929
        %v3194 = vunpack.c.l.b16 %v2930
        %v3195 = vunpack.c.h.b16 %v2930
        %v3196 = vunpack.c.l.b16 %v2931
        %v3197 = vunpack.c.h.b16 %v2931
        %v3198 = vunpack.c.l.b16 %v2932
        %v3199 = vunpack.c.h.b16 %v2932
        %v3200 = vunpack.c.l.b16 %v2933
        %v3201 = vunpack.c.h.b16 %v2933
        %v3202 = vunpack.c.l.b16 %v2934
        %v3203 = vunpack.c.h.b16 %v2934
        %v3204 = vunpack.c.l.b16 %v2935
        %v3205 = vunpack.c.h.b16 %v2935
        %v3206 = vunpack.c.l.b16 %v2936
        %v3207 = vunpack.c.h.b16 %v2936
        %v3208 = vunpack.c.l.b16 %v2937
        %v3209 = vunpack.c.h.b16 %v2937
        %v3210 = vunpack.c.l.b16 %v2938
        %v3211 = vunpack.c.h.b16 %v2938
        %v3212 = vunpack.c.l.b16 %v2939
        %v3213 = vunpack.c.h.b16 %v2939
        %v3214 = vunpack.c.l.b16 %v2940
        %v3215 = vunpack.c.h.b16 %v2940
        %v3216 = vunpack.c.l.b16 %v2941
        %v3217 = vunpack.c.h.b16 %v2941
        %v3218 = vunpack.c.l.b16 %v2942
        %v3219 = vunpack.c.h.b16 %v2942
        %v3220 = vunpack.c.l.b16 %v2943
        %v3221 = vunpack.c.h.b16 %v2943
        %v3222 = vunpack.c.l.b16 %v2944
        %v3223 = vunpack.c.h.b16 %v2944
        %v3224 = vunpack.c.l.b16 %v2945
        %v3225 = vunpack.c.h.b16 %v2945
        %v3226 = vunpack.c.l.b16 %v2946
        %v3227 = vunpack.c.h.b16 %v2946
        %v3228 = vunpack.c.l.b16 %v2947
        %v3229 = vunpack.c.h.b16 %v2947
        %v3230 = vunpack.c.l.b16 %v2948
        %v3231 = vunpack.c.h.b16 %v2948
        %v3232 = vunpack.c.l.b16 %v2949
        %v3233 = vunpack.c.h.b16 %v2949
        %v3234 = vunpack.c.l.b16 %v2950
        %v3235 = vunpack.c.h.b16 %v2950
        %v3236 = vunpack.c.l.b16 %v2951
        %v3237 = vunpack.c.h.b16 %v2951
        %v3238 = vunpack.c.l.b16 %v2952
        %v3239 = vunpack.c.h.b16 %v2952
        %v3240 = vunpack.c.l.b16 %v2953
        %v3241 = vunpack.c.h.b16 %v2953
        %v3242 = vunpack.c.l.b16 %v2954
        %v3243 = vunpack.c.h.b16 %v2954
        %v3244 = vunpack.c.l.b16 %v2955
        %v3245 = vunpack.c.h.b16 %v2955
        %v3246 = vunpack.c.l.b16 %v2956
        %v3247 = vunpack.c.h.b16 %v2956
        %v3248 = vunpack.c.l.b16 %v2957
        %v3249 = vunpack.c.h.b16 %v2957
        %v3250 = vunpack.c.l.b16 %v2958
        %v3251 = vunpack.c.h.b16 %v2958
        %v3252 = vunpack.c.l.b16 %v2959
        %v3253 = vunpack.c.h.b16 %v2959
        %v3254 = vunpack.c.l.b16 %v2960
        %v3255 = vunpack.c.h.b16 %v2960
        %v3256 = vunpack.c.l.b16 %v2961
        %v3257 = vunpack.c.h.b16 %v2961
        %v3258 = vunpack.c.l.b16 %v2962
        %v3259 = vunpack.c.h.b16 %v2962
        %v3260 = vunpack.c.l.b16 %v2963
        %v3261 = vunpack.c.h.b16 %v2963
        %v3262 = vunpack.c.l.b16 %v2964
        %v3263 = vunpack.c.h.b16 %v2964
        %v3264 = vunpack.c.l.b16 %v2965
        %v3265 = vunpack.c.h.b16 %v2965
        %v3266 = vunpack.c.l.b16 %v2966
        %v3267 = vunpack.c.h.b16 %v2966
        %v3268 = vunpack.c.l.b16 %v2967
        %v3269 = vunpack.c.h.b16 %v2967
        %v3270 = vunpack.c.l.b16 %v2968
        %v3271 = vunpack.c.h.b16 %v2968
        %v3272 = vunpack.c.l.b16 %v2969
        %v3273 = vunpack.c.h.b16 %v2969
        %v3274 = vunpack.c.l.b16 %v2970
        %v3275 = vunpack.c.h.b16 %v2970
        %v3276 = vunpack.c.l.b16 %v2971
        %v3277 = vunpack.c.h.b16 %v2971
        %v3278 = vunpack.c.l.b16 %v2972
        %v3279 = vunpack.c.h.b16 %v2972
        %v3280 = vunpack.c.l.b16 %v2973
        %v3281 = vunpack.c.h.b16 %v2973
        %v3282 = vunpack.c.l.b16 %v2974
        %v3283 = vunpack.c.h.b16 %v2974
        %v3284 = vunpack.c.l.b16 %v2975
        %v3285 = vunpack.c.h.b16 %v2975
        %v3286 = vunpack.c.l.b16 %v2976
        %v3287 = vunpack.c.h.b16 %v2976
        %v3288 = vunpack.c.l.b16 %v2977
        %v3289 = vunpack.c.h.b16 %v2977
        %v3290 = vunpack.c.l.b16 %v2978
        %v3291 = vunpack.c.h.b16 %v2978
        %v3292 = vunpack.c.l.b16 %v2979
        %v3293 = vunpack.c.h.b16 %v2979
        %v3294 = vunpack.c.l.b16 %v2980
        %v3295 = vunpack.c.h.b16 %v2980
        %v3296 = vunpack.c.l.b16 %v2981
        %v3297 = vunpack.c.h.b16 %v2981
        %v3298 = vunpack.c.l.b16 %v2982
        %v3299 = vunpack.c.h.b16 %v2982
        %v3300 = vunpack.c.l.b16 %v2983
        %v3301 = vunpack.c.h.b16 %v2983
        %v3302 = vunpack.c.l.b16 %v2984
        %v3303 = vunpack.c.h.b16 %v2984
        %v3304 = vunpack.c.l.b16 %v2985
        %v3305 = vunpack.c.h.b16 %v2985
        %v3306 = vunpack.c.l.b16 %v2986
        %v3307 = vunpack.c.h.b16 %v2986
        %v3308 = vunpack.c.l.b16 %v2987
        %v3309 = vunpack.c.h.b16 %v2987
        %v3310 = vunpack.c.l.b16 %v2988
        %v3311 = vunpack.c.h.b16 %v2988
        %v3312 = vunpack.c.l.b16 %v2989
        %v3313 = vunpack.c.h.b16 %v2989
        %v3314 = vunpack.c.l.b16 %v2990
        %v3315 = vunpack.c.h.b16 %v2990
        %v3316 = vunpack.c.l.b16 %v2991
        %v3317 = vunpack.c.h.b16 %v2991
        %v3318 = vunpack.c.l.b16 %v2992
        %v3319 = vunpack.c.h.b16 %v2992
        %v3320 = vunpack.c.l.b16 %v2993
        %v3321 = vunpack.c.h.b16 %v2993
        %v3322 = vunpack.c.l.b16 %v2994
        %v3323 = vunpack.c.h.b16 %v2994
        %v3324 = vunpack.c.l.b16 %v2995
        %v3325 = vunpack.c.h.b16 %v2995
        %v3326 = vunpack.c.l.b16 %v2996
        %v3327 = vunpack.c.h.b16 %v2996
        %v3328 = vunpack.c.l.b16 %v2997
        %v3329 = vunpack.c.h.b16 %v2997
        %v3330 = vunpack.c.l.b16 %v2998
        %v3331 = vunpack.c.h.b16 %v2998
        %v3332 = vunpack.c.l.b16 %v2999
        %v3333 = vunpack.c.h.b16 %v2999
        %v3334 = vunpack.c.l.b16 %v3000
        %v3335 = vunpack.c.h.b16 %v3000
        %v3336 = vunpack.c.l.b16 %v3001
        %v3337 = vunpack.c.h.b16 %v3001
        %v3338 = vunpack.c.l.b16 %v3002
        %v3339 = vunpack.c.h.b16 %v3002
        %v3340 = vunpack.c.l.b16 %v3003
        %v3341 = vunpack.c.h.b16 %v3003
        %v3342 = vunpack.c.l.b16 %v3004
        %v3343 = vunpack.c.h.b16 %v3004
        %v3344 = vunpack.c.l.b16 %v3005
        %v3345 = vunpack.c.h.b16 %v3005
        %v3346 = vunpack.c.l.b16 %v3006
        %v3347 = vunpack.c.h.b16 %v3006
        %v3348 = vunpack.c.l.b16 %v3007
        %v3349 = vunpack.c.h.b16 %v3007
        %v3350 = vunpack.c.l.b16 %v3008
        %v3351 = vunpack.c.h.b16 %v3008
        %v3352 = vunpack.c.l.b16 %v3009
        %v3353 = vunpack.c.h.b16 %v3009
        %v3354 = vunpack.c.l.b16 %v3010
        %v3355 = vunpack.c.h.b16 %v3010
        %v3356 = vunpack.c.l.b16 %v3011
        %v3357 = vunpack.c.h.b16 %v3011
        %v3358 = vunpack.c.l.b16 %v3012
        %v3359 = vunpack.c.h.b16 %v3012
        %v3360 = vunpack.c.l.b16 %v3013
        %v3361 = vunpack.c.h.b16 %v3013
        %v3362 = vunpack.c.l.b16 %v3014
        %v3363 = vunpack.c.h.b16 %v3014
        %v3364 = vunpack.c.l.b16 %v3015
        %v3365 = vunpack.c.h.b16 %v3015
        %v3366 = vunpack.c.l.b16 %v3016
        %v3367 = vunpack.c.h.b16 %v3016
        %v3368 = vunpack.c.l.b16 %v3017
        %v3369 = vunpack.c.h.b16 %v3017
        %v3370 = vunpack.c.l.b16 %v3018
        %v3371 = vunpack.c.h.b16 %v3018
        %v3372 = vunpack.c.l.b16 %v3019
        %v3373 = vunpack.c.h.b16 %v3019
        %v3374 = vunpack.c.l.b16 %v3020
        %v3375 = vunpack.c.h.b16 %v3020
        %v3376 = vunpack.c.l.b16 %v3021
        %v3377 = vunpack.c.h.b16 %v3021
        %v3378 = vunpack.c.l.b16 %v3022
        %v3379 = vunpack.c.h.b16 %v3022
        %v3380 = vunpack.c.l.b16 %v3023
        %v3381 = vunpack.c.h.b16 %v3023
        %v3382 = vunpack.c.l.b16 %v3024
        %v3383 = vunpack.c.h.b16 %v3024
        %v3384 = vunpack.c.l.b16 %v3025
        %v3385 = vunpack.c.h.b16 %v3025
        %v3386 = vunpack.c.l.b16 %v3026
        %v3387 = vunpack.c.h.b16 %v3026
        %v3388 = vunpack.c.l.b16 %v3027
        %v3389 = vunpack.c.h.b16 %v3027
        %v3390 = vunpack.c.l.b16 %v3028
        %v3391 = vunpack.c.h.b16 %v3028
        %v3392 = vunpack.c.l.b16 %v3029
        %v3393 = vunpack.c.h.b16 %v3029
        %v3394 = vunpack.c.l.b16 %v3030
        %v3395 = vunpack.c.h.b16 %v3030
        %v3396 = vunpack.c.l.b16 %v3031
        %v3397 = vunpack.c.h.b16 %v3031
        %v3398 = vunpack.c.l.b16 %v3032
        %v3399 = vunpack.c.h.b16 %v3032
        %v3400 = vunpack.c.l.b16 %v3033
        %v3401 = vunpack.c.h.b16 %v3033
        %v3402 = vunpack.c.l.b16 %v3034
        %v3403 = vunpack.c.h.b16 %v3034
        %v3404 = vunpack.c.l.b16 %v3035
        %v3405 = vunpack.c.h.b16 %v3035
        %v3406 = vunpack.c.l.b16 %v3036
        %v3407 = vunpack.c.h.b16 %v3036
        %v3408 = vunpack.c.l.b16 %v3037
        %v3409 = vunpack.c.h.b16 %v3037
        %v3410 = vunpack.c.l.b16 %v3038
        %v3411 = vunpack.c.h.b16 %v3038
        %v3412 = vunpack.c.l.b16 %v3039
        %v3413 = vunpack.c.h.b16 %v3039
        %v3414 = vunpack.c.l.b16 %v3040
        %v3415 = vunpack.c.h.b16 %v3040
        %v3416 = vunpack.c.l.b16 %v3041
        %v3417 = vunpack.c.h.b16 %v3041
        %v3418 = vunpack.c.l.b16 %v3042
        %v3419 = vunpack.c.h.b16 %v3042
        %v3420 = vunpack.c.l.b16 %v3043
        %v3421 = vunpack.c.h.b16 %v3043
        %v3422 = vunpack.c.l.b16 %v3044
        %v3423 = vunpack.c.h.b16 %v3044
        %v3424 = vunpack.c.l.b16 %v3045
        %v3425 = vunpack.c.h.b16 %v3045
        %v3426 = vunpack.c.l.b16 %v3046
        %v3427 = vunpack.c.h.b16 %v3046
        %v3428 = vunpack.c.l.b16 %v3047
        %v3429 = vunpack.c.h.b16 %v3047
        %v3430 = vunpack.c.l.b16 %v3048
        %v3431 = vunpack.c.h.b16 %v3048
        %v3432 = vunpack.c.l.b16 %v3049
        %v3433 = vunpack.c.h.b16 %v3049
        %v3434 = vpack.c.b16 %v3186, %v3178
        %v3435 = vpack.c.b16 %v3187, %v3179
        %v3436 = vpack.c.b16 %v3188, %v3180
        %v3437 = vpack.c.b16 %v3189, %v3181
        %v3438 = vpack.c.b16 %v3190, %v3182
        %v3439 = vpack.c.b16 %v3191, %v3183
        %v3440 = vpack.c.b16 %v3192, %v3184
        %v3441 = vpack.c.b16 %v3193, %v3185
        %v3442 = vpack.c.b16 %v3202, %v3194
        %v3443 = vpack.c.b16 %v3203, %v3195
        %v3444 = vpack.c.b16 %v3204, %v3196
        %v3445 = vpack.c.b16 %v3205, %v3197
        %v3446 = vpack.c.b16 %v3206, %v3198
        %v3447 = vpack.c.b16 %v3207, %v3199
        %v3448 = vpack.c.b16 %v3208, %v3200
        %v3449 = vpack.c.b16 %v3209, %v3201
        %v3450 = vpack.c.b16 %v3218, %v3210
        %v3451 = vpack.c.b16 %v3219, %v3211
        %v3452 = vpack.c.b16 %v3220, %v3212
        %v3453 = vpack.c.b16 %v3221, %v3213
        %v3454 = vpack.c.b16 %v3222, %v3214
        %v3455 = vpack.c.b16 %v3223, %v3215
        %v3456 = vpack.c.b16 %v3224, %v3216
        %v3457 = vpack.c.b16 %v3225, %v3217
        %v3458 = vpack.c.b16 %v3234, %v3226
        %v3459 = vpack.c.b16 %v3235, %v3227
        %v3460 = vpack.c.b16 %v3236, %v3228
        %v3461 = vpack.c.b16 %v3237, %v3229
        %v3462 = vpack.c.b16 %v3238, %v3230
        %v3463 = vpack.c.b16 %v3239, %v3231
        %v3464 = vpack.c.b16 %v3240, %v3232
        %v3465 = vpack.c.b16 %v3241, %v3233
        %v3466 = vpack.c.b16 %v3250, %v3242
        %v3467 = vpack.c.b16 %v3251, %v3243
        %v3468 = vpack.c.b16 %v3252, %v3244
        %v3469 = vpack.c.b16 %v3253, %v3245
        %v3470 = vpack.c.b16 %v3254, %v3246
        %v3471 = vpack.c.b16 %v3255, %v3247
        %v3472 = vpack.c.b16 %v3256, %v3248
        %v3473 = vpack.c.b16 %v3257, %v3249
        %v3474 = vpack.c.b16 %v3266, %v3258
        %v3475 = vpack.c.b16 %v3267, %v3259
        %v3476 = vpack.c.b16 %v3268, %v3260
        %v3477 = vpack.c.b16 %v3269, %v3261
        %v3478 = vpack.c.b16 %v3270, %v3262
        %v3479 = vpack.c.b16 %v3271, %v3263
        %v3480 = vpack.c.b16 %v3272, %v3264
        %v3481 = vpack.c.b16 %v3273, %v3265
        %v3482 = vpack.c.b16 %v3282, %v3274
        %v3483 = vpack.c.b16 %v3283, %v3275
        %v3484 = vpack.c.b16 %v3284, %v3276
        %v3485 = vpack.c.b16 %v3285, %v3277
        %v3486 = vpack.c.b16 %v3286, %v3278
        %v3487 = vpack.c.b16 %v3287, %v3279
        %v3488 = vpack.c.b16 %v3288, %v3280
        %v3489 = vpack.c.b16 %v3289, %v3281
        %v3490 = vpack.c.b16 %v3298, %v3290
        %v3491 = vpack.c.b16 %v3299, %v3291
        %v3492 = vpack.c.b16 %v3300, %v3292
        %v3493 = vpack.c.b16 %v3301, %v3293
        %v3494 = vpack.c.b16 %v3302, %v3294
        %v3495 = vpack.c.b16 %v3303, %v3295
        %v3496 = vpack.c.b16 %v3304, %v3296
        %v3497 = vpack.c.b16 %v3305, %v3297
        %v3498 = vpack.c.b16 %v3314, %v3306
        %v3499 = vpack.c.b16 %v3315, %v3307
        %v3500 = vpack.c.b16 %v3316, %v3308
        %v3501 = vpack.c.b16 %v3317, %v3309
        %v3502 = vpack.c.b16 %v3318, %v3310
        %v3503 = vpack.c.b16 %v3319, %v3311
        %v3504 = vpack.c.b16 %v3320, %v3312
        %v3505 = vpack.c.b16 %v3321, %v3313
        %v3506 = vpack.c.b16 %v3330, %v3322
        %v3507 = vpack.c.b16 %v3331, %v3323
        %v3508 = vpack.c.b16 %v3332, %v3324
        %v3509 = vpack.c.b16 %v3333, %v3325
        %v3510 = vpack.c.b16 %v3334, %v3326
        %v3511 = vpack.c.b16 %v3335, %v3327
        %v3512 = vpack.c.b16 %v3336, %v3328
        %v3513 = vpack.c.b16 %v3337, %v3329
        %v3514 = vpack.c.b16 %v3346, %v3338
        %v3515 = vpack.c.b16 %v3347, %v3339
        %v3516 = vpack.c.b16 %v3348, %v3340
        %v3517 = vpack.c.b16 %v3349, %v3341
        %v3518 = vpack.c.b16 %v3350, %v3342
        %v3519 = vpack.c.b16 %v3351, %v3343
        %v3520 = vpack.c.b16 %v3352, %v3344
        %v3521 = vpack.c.b16 %v3353, %v3345
        %v3522 = vpack.c.b16 %v3362, %v3354
        %v3523 = vpack.c.b16 %v3363, %v3355
        %v3524 = vpack.c.b16 %v3364, %v3356
        %v3525 = vpack.c.b16 %v3365, %v3357
        %v3526 = vpack.c.b16 %v3366, %v3358
        %v3527 = vpack.c.b16 %v3367, %v3359
        %v3528 = vpack.c.b16 %v3368, %v3360
        %v3529 = vpack.c.b16 %v3369, %v3361
        %v3530 = vpack.c.b16 %v3378, %v3370
        %v3531 = vpack.c.b16 %v3379, %v3371
        %v3532 = vpack.c.b16 %v3380, %v3372
        %v3533 = vpack.c.b16 %v3381, %v3373
        %v3534 = vpack.c.b16 %v3382, %v3374
        %v3535 = vpack.c.b16 %v3383, %v3375
        %v3536 = vpack.c.b16 %v3384, %v3376
        %v3537 = vpack.c.b16 %v3385, %v3377
        %v3538 = vpack.c.b16 %v3394, %v3386
        %v3539 = vpack.c.b16 %v3395, %v3387
        %v3540 = vpack.c.b16 %v3396, %v3388
        %v3541 = vpack.c.b16 %v3397, %v3389
        %v3542 = vpack.c.b16 %v3398, %v3390
        %v3543 = vpack.c.b16 %v3399, %v3391
        %v3544 = vpack.c.b16 %v3400, %v3392
        %v3545 = vpack.c.b16 %v3401, %v3393
        %v3546 = vpack.c.b16 %v3410, %v3402
        %v3547 = vpack.c.b16 %v3411, %v3403
        %v3548 = vpack.c.b16 %v3412, %v3404
        %v3549 = vpack.c.b16 %v3413, %v3405
        %v3550 = vpack.c.b16 %v3414, %v3406
        %v3551 = vpack.c.b16 %v3415, %v3407
        %v3552 = vpack.c.b16 %v3416, %v3408
        %v3553 = vpack.c.b16 %v3417, %v3409
        %v3554 = vpack.c.b16 %v3426, %v3418
        %v3555 = vpack.c.b16 %v3427, %v3419
        %v3556 = vpack.c.b16 %v3428, %v3420
        %v3557 = vpack.c.b16 %v3429, %v3421
        %v3558 = vpack.c.b16 %v3430, %v3422
        %v3559 = vpack.c.b16 %v3431, %v3423
        %v3560 = vpack.c.b16 %v3432, %v3424
        %v3561 = vpack.c.b16 %v3433, %v3425
        %3690 = vmatprep.subr.bf16.mxu0 %v3435
        %3691 = vmatpush1.bf16.msra.mxu0 %v3434
        %3692 = vmatprep.subr.bf16.mxu0 %v3443
        %3693 = vmatpush1.bf16.msra.mxu0 %v3442
        %3694 = vmatprep.subr.bf16.mxu0 %v3451
        %3695 = vmatpush1.bf16.msra.mxu0 %v3450
        %3696 = vmatprep.subr.bf16.mxu0 %v3459
        %3697 = vmatpush1.bf16.msra.mxu0 %v3458
        %3698 = vmatprep.subr.bf16.mxu0 %v3467
        %3699 = vmatpush1.bf16.msra.mxu0 %v3466
        %3700 = vmatprep.subr.bf16.mxu0 %v3475
        %3701 = vmatpush1.bf16.msra.mxu0 %v3474
        %3702 = vmatprep.subr.bf16.mxu0 %v3483
        %3703 = vmatpush1.bf16.msra.mxu0 %v3482
        %3704 = vmatprep.subr.bf16.mxu0 %v3491
        %3705 = vmatpush1.bf16.msra.mxu0 %v3490
        %3706 = vmatprep.subr.bf16.mxu0 %v3499
        %3707 = vmatpush1.bf16.msra.mxu0 %v3498
        %3708 = vmatprep.subr.bf16.mxu0 %v3507
        %3709 = vmatpush1.bf16.msra.mxu0 %v3506
        %3710 = vmatprep.subr.bf16.mxu0 %v3515
        %3711 = vmatpush1.bf16.msra.mxu0 %v3514
        %3712 = vmatprep.subr.bf16.mxu0 %v3523
        %3713 = vmatpush1.bf16.msra.mxu0 %v3522
        %3714 = vmatprep.subr.bf16.mxu0 %v3531
        %3715 = vmatpush1.bf16.msra.mxu0 %v3530
        %3716 = vmatprep.subr.bf16.mxu0 %v3539
        %3717 = vmatpush1.bf16.msra.mxu0 %v3538
        %3718 = vmatprep.subr.bf16.mxu0 %v3547
        %3719 = vmatpush1.bf16.msra.mxu0 %v3546
        %3720 = vmatprep.subr.bf16.mxu0 %v3555
        %3721 = vmatpush1.bf16.msra.mxu0 %v3554
        %3722 = vmatprep.mubr.bf16.mxu0 %v2919
        %3723 = vmatmul.mubr.bf16.gmra.mrb[0].mxu0 %v2918
        %v3724 = vpop.f32.mrb[0].mxu0
        %v3725 = vadd.f32 0.0, %v3724
        %v3726 = vpop.f32.mrb[0].mxu0
        %v3727 = vadd.f32 0.0, %v3726
        %v3728 = vpop.f32.mrb[0].mxu0
        %v3729 = vadd.f32 0.0, %v3728
        %v3730 = vpop.f32.mrb[0].mxu0
        %v3731 = vadd.f32 0.0, %v3730
        %3732 = vmatprep.mubr.bf16.mxu0 %v2921
        %3733 = vmatmul.mubr.bf16.gmra.mrb[0].mxu0 %v2920
        %v3734 = vpop.f32.mrb[0].mxu0
        %v3735 = vadd.f32 0.0, %v3734
        %v3736 = vpop.f32.mrb[0].mxu0
        %v3737 = vadd.f32 0.0, %v3736
        %v3738 = vpop.f32.mrb[0].mxu0
        %v3739 = vadd.f32 0.0, %v3738
        %v3740 = vpop.f32.mrb[0].mxu0
        %v3741 = vadd.f32 0.0, %v3740
        %3742 = vdwg.mxu0
        %3743 = vmatprep.subr.bf16.mxu0 %v3437
        %3744 = vmatpush1.bf16.msra.mxu0 %v3436
        %3745 = vmatprep.subr.bf16.mxu0 %v3445
        %3746 = vmatpush1.bf16.msra.mxu0 %v3444
        %3747 = vmatprep.subr.bf16.mxu0 %v3453
        %3748 = vmatpush1.bf16.msra.mxu0 %v3452
        %3749 = vmatprep.subr.bf16.mxu0 %v3461
        %3750 = vmatpush1.bf16.msra.mxu0 %v3460
        %3751 = vmatprep.subr.bf16.mxu0 %v3469
        %3752 = vmatpush1.bf16.msra.mxu0 %v3468
        %3753 = vmatprep.subr.bf16.mxu0 %v3477
        %3754 = vmatpush1.bf16.msra.mxu0 %v3476
        %3755 = vmatprep.subr.bf16.mxu0 %v3485
        %3756 = vmatpush1.bf16.msra.mxu0 %v3484
        %3757 = vmatprep.subr.bf16.mxu0 %v3493
        %3758 = vmatpush1.bf16.msra.mxu0 %v3492
        %3759 = vmatprep.subr.bf16.mxu0 %v3501
        %3760 = vmatpush1.bf16.msra.mxu0 %v3500
        %3761 = vmatprep.subr.bf16.mxu0 %v3509
        %3762 = vmatpush1.bf16.msra.mxu0 %v3508
        %3763 = vmatprep.subr.bf16.mxu0 %v3517
        %3764 = vmatpush1.bf16.msra.mxu0 %v3516
        %3765 = vmatprep.subr.bf16.mxu0 %v3525
        %3766 = vmatpush1.bf16.msra.mxu0 %v3524
        %3767 = vmatprep.subr.bf16.mxu0 %v3533
        %3768 = vmatpush1.bf16.msra.mxu0 %v3532
        %3769 = vmatprep.subr.bf16.mxu0 %v3541
        %3770 = vmatpush1.bf16.msra.mxu0 %v3540
        %3771 = vmatprep.subr.bf16.mxu0 %v3549
        %3772 = vmatpush1.bf16.msra.mxu0 %v3548
        %3773 = vmatprep.subr.bf16.mxu0 %v3557
        %3774 = vmatpush1.bf16.msra.mxu0 %v3556
        %3775 = vmatprep.mubr.bf16.mxu0 %v2919
        %3776 = vmatmul.mubr.bf16.gmra.mrb[0].mxu0 %v2918
        %v3777 = vpop.f32.mrb[0].mxu0
        %v3778 = vadd.f32 0.0, %v3777
        %v3779 = vpop.f32.mrb[0].mxu0
        %v3780 = vadd.f32 0.0, %v3779
        %v3781 = vpop.f32.mrb[0].mxu0
        %v3782 = vadd.f32 0.0, %v3781
        %v3783 = vpop.f32.mrb[0].mxu0
        %v3784 = vadd.f32 0.0, %v3783
        %3785 = vmatprep.mubr.bf16.mxu0 %v2921
        %3786 = vmatmul.mubr.bf16.gmra.mrb[0].mxu0 %v2920
        %v3787 = vpop.f32.mrb[0].mxu0
        %v3788 = vadd.f32 0.0, %v3787
        %v3789 = vpop.f32.mrb[0].mxu0
        %v3790 = vadd.f32 0.0, %v3789
        %v3791 = vpop.f32.mrb[0].mxu0
        %v3792 = vadd.f32 0.0, %v3791
        %v3793 = vpop.f32.mrb[0].mxu0
        %v3794 = vadd.f32 0.0, %v3793
        %3795 = vdwg.mxu0
        %3796 = vmatprep.subr.bf16.mxu0 %v3439
        %3797 = vmatpush1.bf16.msra.mxu0 %v3438
        %3798 = vmatprep.subr.bf16.mxu0 %v3447
        %3799 = vmatpush1.bf16.msra.mxu0 %v3446
        %3800 = vmatprep.subr.bf16.mxu0 %v3455
        %3801 = vmatpush1.bf16.msra.mxu0 %v3454
        %3802 = vmatprep.subr.bf16.mxu0 %v3463
        %3803 = vmatpush1.bf16.msra.mxu0 %v3462
        %3804 = vmatprep.subr.bf16.mxu0 %v3471
        %3805 = vmatpush1.bf16.msra.mxu0 %v3470
        %3806 = vmatprep.subr.bf16.mxu0 %v3479
        %3807 = vmatpush1.bf16.msra.mxu0 %v3478
        %3808 = vmatprep.subr.bf16.mxu0 %v3487
        %3809 = vmatpush1.bf16.msra.mxu0 %v3486
        %3810 = vmatprep.subr.bf16.mxu0 %v3495
        %3811 = vmatpush1.bf16.msra.mxu0 %v3494
        %3812 = vmatprep.subr.bf16.mxu0 %v3503
        %3813 = vmatpush1.bf16.msra.mxu0 %v3502
        %3814 = vmatprep.subr.bf16.mxu0 %v3511
        %3815 = vmatpush1.bf16.msra.mxu0 %v3510
        %3816 = vmatprep.subr.bf16.mxu0 %v3519
        %3817 = vmatpush1.bf16.msra.mxu0 %v3518
        %3818 = vmatprep.subr.bf16.mxu0 %v3527
        %3819 = vmatpush1.bf16.msra.mxu0 %v3526
        %3820 = vmatprep.subr.bf16.mxu0 %v3535
        %3821 = vmatpush1.bf16.msra.mxu0 %v3534
        %3822 = vmatprep.subr.bf16.mxu0 %v3543
        %3823 = vmatpush1.bf16.msra.mxu0 %v3542
        %3824 = vmatprep.subr.bf16.mxu0 %v3551
        %3825 = vmatpush1.bf16.msra.mxu0 %v3550
        %3826 = vmatprep.subr.bf16.mxu0 %v3559
        %3827 = vmatpush1.bf16.msra.mxu0 %v3558
        %3828 = vmatprep.mubr.bf16.mxu0 %v2919
        %3829 = vmatmul.mubr.bf16.gmra.mrb[0].mxu0 %v2918
        %v3830 = vpop.f32.mrb[0].mxu0
        %v3831 = vadd.f32 0.0, %v3830
        %v3832 = vpop.f32.mrb[0].mxu0
        %v3833 = vadd.f32 0.0, %v3832
        %v3834 = vpop.f32.mrb[0].mxu0
        %v3835 = vadd.f32 0.0, %v3834
        %v3836 = vpop.f32.mrb[0].mxu0
        %v3837 = vadd.f32 0.0, %v3836
        %3838 = vmatprep.mubr.bf16.mxu0 %v2921
        %3839 = vmatmul.mubr.bf16.gmra.mrb[0].mxu0 %v2920
        %v3840 = vpop.f32.mrb[0].mxu0
        %v3841 = vadd.f32 0.0, %v3840
        %v3842 = vpop.f32.mrb[0].mxu0
        %v3843 = vadd.f32 0.0, %v3842
        %v3844 = vpop.f32.mrb[0].mxu0
        %v3845 = vadd.f32 0.0, %v3844
        %v3846 = vpop.f32.mrb[0].mxu0
        %v3847 = vadd.f32 0.0, %v3846
        %3848 = vdwg.mxu0
        %3849 = vmatprep.subr.bf16.mxu0 %v3441
        %3850 = vmatpush1.bf16.msra.mxu0 %v3440
        %3851 = vmatprep.subr.bf16.mxu0 %v3449
        %3852 = vmatpush1.bf16.msra.mxu0 %v3448
        %3853 = vmatprep.subr.bf16.mxu0 %v3457
        %3854 = vmatpush1.bf16.msra.mxu0 %v3456
        %3855 = vmatprep.subr.bf16.mxu0 %v3465
        %3856 = vmatpush1.bf16.msra.mxu0 %v3464
        %3857 = vmatprep.subr.bf16.mxu0 %v3473
        %3858 = vmatpush1.bf16.msra.mxu0 %v3472
        %3859 = vmatprep.subr.bf16.mxu0 %v3481
        %3860 = vmatpush1.bf16.msra.mxu0 %v3480
        %3861 = vmatprep.subr.bf16.mxu0 %v3489
        %3862 = vmatpush1.bf16.msra.mxu0 %v3488
        %3863 = vmatprep.subr.bf16.mxu0 %v3497
        %3864 = vmatpush1.bf16.msra.mxu0 %v3496
        %3865 = vmatprep.subr.bf16.mxu0 %v3505
        %3866 = vmatpush1.bf16.msra.mxu0 %v3504
        %3867 = vmatprep.subr.bf16.mxu0 %v3513
        %3868 = vmatpush1.bf16.msra.mxu0 %v3512
        %3869 = vmatprep.subr.bf16.mxu0 %v3521
        %3870 = vmatpush1.bf16.msra.mxu0 %v3520
        %3871 = vmatprep.subr.bf16.mxu0 %v3529
        %3872 = vmatpush1.bf16.msra.mxu0 %v3528
        %3873 = vmatprep.subr.bf16.mxu0 %v3537
        %3874 = vmatpush1.bf16.msra.mxu0 %v3536
        %3875 = vmatprep.subr.bf16.mxu0 %v3545
        %3876 = vmatpush1.bf16.msra.mxu0 %v3544
        %3877 = vmatprep.subr.bf16.mxu0 %v3553
        %3878 = vmatpush1.bf16.msra.mxu0 %v3552
        %3879 = vmatprep.subr.bf16.mxu0 %v3561
        %3880 = vmatpush1.bf16.msra.mxu0 %v3560
        %3881 = vmatprep.mubr.bf16.mxu0 %v2919
        %3882 = vmatmul.mubr.bf16.gmra.mrb[0].mxu0 %v2918
        %v3883 = vpop.f32.mrb[0].mxu0
        %v3884 = vadd.f32 0.0, %v3883
        %v3885 = vpop.f32.mrb[0].mxu0
        %v3886 = vadd.f32 0.0, %v3885
        %v3887 = vpop.f32.mrb[0].mxu0
        %v3888 = vadd.f32 0.0, %v3887
        %v3889 = vpop.f32.mrb[0].mxu0
        %v3890 = vadd.f32 0.0, %v3889
        %3891 = vmatprep.mubr.bf16.mxu0 %v2921
        %3892 = vmatmul.mubr.bf16.gmra.mrb[0].mxu0 %v2920
        %v3893 = vpop.f32.mrb[0].mxu0
        %v3894 = vadd.f32 0.0, %v3893
        %v3895 = vpop.f32.mrb[0].mxu0
        %v3896 = vadd.f32 0.0, %v3895
        %v3897 = vpop.f32.mrb[0].mxu0
        %v3898 = vadd.f32 0.0, %v3897
        %v3899 = vpop.f32.mrb[0].mxu0
        %v3900 = vadd.f32 0.0, %v3899
        %3901 = vdwg.mxu0
        %v3902 = vxor.u32 %v3725, 2147483648
        %v3903 = vxor.u32 %v3727, 2147483648
        %v3904 = vxor.u32 %v3778, 2147483648
        %v3905 = vxor.u32 %v3780, 2147483648
        %v3906 = vxor.u32 %v3729, 2147483648
        %v3907 = vxor.u32 %v3731, 2147483648
        %v3908 = vxor.u32 %v3782, 2147483648
        %v3909 = vxor.u32 %v3784, 2147483648
        %v3910 = vxor.u32 %v3735, 2147483648
        %v3911 = vxor.u32 %v3737, 2147483648
        %v3912 = vxor.u32 %v3788, 2147483648
        %v3913 = vxor.u32 %v3790, 2147483648
        %v3914 = vxor.u32 %v3739, 2147483648
        %v3915 = vxor.u32 %v3741, 2147483648
        %v3916 = vxor.u32 %v3792, 2147483648
        %v3917 = vxor.u32 %v3794, 2147483648
        %v3918 = vmul.f32 %v3902, 1.442695
        %v3919 = vpow.pop %v3918
        %v3920 = vmul.f32 %v3903, 1.442695
        %v3921 = vpow.pop %v3920
        %v3922 = vmul.f32 %v3904, 1.442695
        %v3923 = vpow.pop %v3922
        %v3924 = vmul.f32 %v3905, 1.442695
        %v3925 = vpow.pop %v3924
        %v3926 = vmul.f32 %v3906, 1.442695
        %v3927 = vpow.pop %v3926
        %v3928 = vmul.f32 %v3907, 1.442695
        %v3929 = vpow.pop %v3928
        %v3930 = vmul.f32 %v3908, 1.442695
        %v3931 = vpow.pop %v3930
        %v3932 = vmul.f32 %v3909, 1.442695
        %v3933 = vpow.pop %v3932
        %v3934 = vmul.f32 %v3910, 1.442695
        %v3935 = vpow.pop %v3934
        %v3936 = vmul.f32 %v3911, 1.442695
        %v3937 = vpow.pop %v3936
        %v3938 = vmul.f32 %v3912, 1.442695
        %v3939 = vpow.pop %v3938
        %v3940 = vmul.f32 %v3913, 1.442695
        %v3941 = vpow.pop %v3940
        %v3942 = vmul.f32 %v3914, 1.442695
        %v3943 = vpow.pop %v3942
        %v3944 = vmul.f32 %v3915, 1.442695
        %v3945 = vpow.pop %v3944
        %v3946 = vmul.f32 %v3916, 1.442695
        %v3947 = vpow.pop %v3946
        %v3948 = vmul.f32 %v3917, 1.442695
        %v3949 = vpow.pop %v3948
        %v3950 = vadd.f32 %v3919, 1.0
        %v3951 = vadd.f32 %v3921, 1.0
        %v3952 = vadd.f32 %v3923, 1.0
        %v3953 = vadd.f32 %v3925, 1.0
        %v3954 = vadd.f32 %v3927, 1.0
        %v3955 = vadd.f32 %v3929, 1.0
        %v3956 = vadd.f32 %v3931, 1.0
        %v3957 = vadd.f32 %v3933, 1.0
        %v3958 = vadd.f32 %v3935, 1.0
        %v3959 = vadd.f32 %v3937, 1.0
        %v3960 = vadd.f32 %v3939, 1.0
        %v3961 = vadd.f32 %v3941, 1.0
        %v3962 = vadd.f32 %v3943, 1.0
        %v3963 = vadd.f32 %v3945, 1.0
        %v3964 = vadd.f32 %v3947, 1.0
        %v3965 = vadd.f32 %v3949, 1.0
        %v3966 = vrcp.pop %v3950
        %v3967 = vmul.f32 1.0, %v3966
        %v3968 = vrcp.pop %v3951
        %v3969 = vmul.f32 1.0, %v3968
        %v3970 = vrcp.pop %v3952
        %v3971 = vmul.f32 1.0, %v3970
        %v3972 = vrcp.pop %v3953
        %v3973 = vmul.f32 1.0, %v3972
        %v3974 = vrcp.pop %v3954
        %v3975 = vmul.f32 1.0, %v3974
        %v3976 = vrcp.pop %v3955
        %v3977 = vmul.f32 1.0, %v3976
        %v3978 = vrcp.pop %v3956
        %v3979 = vmul.f32 1.0, %v3978
        %v3980 = vrcp.pop %v3957
        %v3981 = vmul.f32 1.0, %v3980
        %v3982 = vrcp.pop %v3958
        %v3983 = vmul.f32 1.0, %v3982
        %v3984 = vrcp.pop %v3959
        %v3985 = vmul.f32 1.0, %v3984
        %v3986 = vrcp.pop %v3960
        %v3987 = vmul.f32 1.0, %v3986
        %v3988 = vrcp.pop %v3961
        %v3989 = vmul.f32 1.0, %v3988
        %v3990 = vrcp.pop %v3962
        %v3991 = vmul.f32 1.0, %v3990
        %v3992 = vrcp.pop %v3963
        %v3993 = vmul.f32 1.0, %v3992
        %v3994 = vrcp.pop %v3964
        %v3995 = vmul.f32 1.0, %v3994
        %v3996 = vrcp.pop %v3965
        %v3997 = vmul.f32 1.0, %v3996
        %v3998 = vmul.f32 %v3725, %v3967
        %v3999 = vmul.f32 %v3727, %v3969
        %v4000 = vmul.f32 %v3778, %v3971
        %v4001 = vmul.f32 %v3780, %v3973
        %v4002 = vmul.f32 %v3729, %v3975
        %v4003 = vmul.f32 %v3731, %v3977
        %v4004 = vmul.f32 %v3782, %v3979
        %v4005 = vmul.f32 %v3784, %v3981
        %v4006 = vmul.f32 %v3735, %v3983
        %v4007 = vmul.f32 %v3737, %v3985
        %v4008 = vmul.f32 %v3788, %v3987
        %v4009 = vmul.f32 %v3790, %v3989
        %v4010 = vmul.f32 %v3739, %v3991
        %v4011 = vmul.f32 %v3741, %v3993
        %v4012 = vmul.f32 %v3792, %v3995
        %v4013 = vmul.f32 %v3794, %v3997
        %v4014 = vmul.f32 %v3998, %v3831
        %v4015 = vmul.f32 %v3999, %v3833
        %v4016 = vmul.f32 %v4000, %v3884
        %v4017 = vmul.f32 %v4001, %v3886
        %v4018 = vmul.f32 %v4002, %v3835
        %v4019 = vmul.f32 %v4003, %v3837
        %v4020 = vmul.f32 %v4004, %v3888
        %v4021 = vmul.f32 %v4005, %v3890
        %v4022 = vmul.f32 %v4006, %v3841
        %v4023 = vmul.f32 %v4007, %v3843
        %v4024 = vmul.f32 %v4008, %v3894
        %v4025 = vmul.f32 %v4009, %v3896
        %v4026 = vmul.f32 %v4010, %v3845
        %v4027 = vmul.f32 %v4011, %v3847
        %v4028 = vmul.f32 %v4012, %v3898
        %v4029 = vmul.f32 %v4013, %v3900
        %v4030 = vpack.c.bf16 %v4018, %v4014
        %v4031 = vpack.c.bf16 %v4019, %v4015
        %v4032 = vpack.c.bf16 %v4020, %v4016
        %v4033 = vpack.c.bf16 %v4021, %v4017
        %v4034 = vpack.c.bf16 %v4026, %v4022
        %v4035 = vpack.c.bf16 %v4027, %v4023
        %v4036 = vpack.c.bf16 %v4028, %v4024
        %v4037 = vpack.c.bf16 %v4029, %v4025
        %v4038 = vld [vmem:[%s604] sm:$0xff]
        %v4039 = vld [vmem:[%s604 + $0x8] sm:$0xff]
        %v4040 = vld [vmem:[%s604 + $0x10] sm:$0xff]
        %v4041 = vld [vmem:[%s604 + $0x18] sm:$0xff]
        %v4042 = vld [vmem:[%s604 + $0x20] sm:$0xff]
        %v4043 = vld [vmem:[%s604 + $0x28] sm:$0xff]
        %v4044 = vld [vmem:[%s604 + $0x30] sm:$0xff]
        %v4045 = vld [vmem:[%s604 + $0x38] sm:$0xff]
        %v4046 = vld [vmem:[%s604 + $0x40] sm:$0xff]
        %v4047 = vld [vmem:[%s604 + $0x48] sm:$0xff]
        %v4048 = vld [vmem:[%s604 + $0x50] sm:$0xff]
        %v4049 = vld [vmem:[%s604 + $0x58] sm:$0xff]
        %v4050 = vld [vmem:[%s604 + $0x60] sm:$0xff]
        %v4051 = vld [vmem:[%s604 + $0x68] sm:$0xff]
        %v4052 = vld [vmem:[%s604 + $0x70] sm:$0xff]
        %v4053 = vld [vmem:[%s604 + $0x78] sm:$0xff]
        %v4054 = vld [vmem:[%s604 + $0x80] sm:$0xff]
        %v4055 = vld [vmem:[%s604 + $0x88] sm:$0xff]
        %v4056 = vld [vmem:[%s604 + $0x90] sm:$0xff]
        %v4057 = vld [vmem:[%s604 + $0x98] sm:$0xff]
        %v4058 = vld [vmem:[%s604 + $0xa0] sm:$0xff]
        %v4059 = vld [vmem:[%s604 + $0xa8] sm:$0xff]
        %v4060 = vld [vmem:[%s604 + $0xb0] sm:$0xff]
        %v4061 = vld [vmem:[%s604 + $0xb8] sm:$0xff]
        %v4062 = vld [vmem:[%s604 + $0xc0] sm:$0xff]
        %v4063 = vld [vmem:[%s604 + $0xc8] sm:$0xff]
        %v4064 = vld [vmem:[%s604 + $0xd0] sm:$0xff]
        %v4065 = vld [vmem:[%s604 + $0xd8] sm:$0xff]
        %v4066 = vld [vmem:[%s604 + $0xe0] sm:$0xff]
        %v4067 = vld [vmem:[%s604 + $0xe8] sm:$0xff]
        %v4068 = vld [vmem:[%s604 + $0xf0] sm:$0xff]
        %v4069 = vld [vmem:[%s604 + $0xf8] sm:$0xff]
        %v4070 = vld [vmem:[%s604 + $0x100] sm:$0xff]
        %v4071 = vld [vmem:[%s604 + $0x108] sm:$0xff]
        %v4072 = vld [vmem:[%s604 + $0x110] sm:$0xff]
        %v4073 = vld [vmem:[%s604 + $0x118] sm:$0xff]
        %v4074 = vld [vmem:[%s604 + $0x120] sm:$0xff]
        %v4075 = vld [vmem:[%s604 + $0x128] sm:$0xff]
        %v4076 = vld [vmem:[%s604 + $0x130] sm:$0xff]
        %v4077 = vld [vmem:[%s604 + $0x138] sm:$0xff]
        %v4078 = vld [vmem:[%s604 + $0x140] sm:$0xff]
        %v4079 = vld [vmem:[%s604 + $0x148] sm:$0xff]
        %v4080 = vld [vmem:[%s604 + $0x150] sm:$0xff]
        %v4081 = vld [vmem:[%s604 + $0x158] sm:$0xff]
        %v4082 = vld [vmem:[%s604 + $0x160] sm:$0xff]
        %v4083 = vld [vmem:[%s604 + $0x168] sm:$0xff]
        %v4084 = vld [vmem:[%s604 + $0x170] sm:$0xff]
        %v4085 = vld [vmem:[%s604 + $0x178] sm:$0xff]
        %v4086 = vld [vmem:[%s604 + $0x180] sm:$0xff]
        %v4087 = vld [vmem:[%s604 + $0x188] sm:$0xff]
        %v4088 = vld [vmem:[%s604 + $0x190] sm:$0xff]
        %v4089 = vld [vmem:[%s604 + $0x198] sm:$0xff]
        %v4090 = vld [vmem:[%s604 + $0x1a0] sm:$0xff]
        %v4091 = vld [vmem:[%s604 + $0x1a8] sm:$0xff]
        %v4092 = vld [vmem:[%s604 + $0x1b0] sm:$0xff]
        %v4093 = vld [vmem:[%s604 + $0x1b8] sm:$0xff]
        %v4094 = vld [vmem:[%s604 + $0x1c0] sm:$0xff]
        %v4095 = vld [vmem:[%s604 + $0x1c8] sm:$0xff]
        %v4096 = vld [vmem:[%s604 + $0x1d0] sm:$0xff]
        %v4097 = vld [vmem:[%s604 + $0x1d8] sm:$0xff]
        %v4098 = vld [vmem:[%s604 + $0x1e0] sm:$0xff]
        %v4099 = vld [vmem:[%s604 + $0x1e8] sm:$0xff]
        %v4100 = vld [vmem:[%s604 + $0x1f0] sm:$0xff]
        %v4101 = vld [vmem:[%s604 + $0x1f8] sm:$0xff]
        %v4166 = vunpack.c.l.b16 %v4038
        %v4167 = vunpack.c.h.b16 %v4038
        %v4168 = vunpack.c.l.b16 %v4039
        %v4169 = vunpack.c.h.b16 %v4039
        %v4170 = vunpack.c.l.b16 %v4040
        %v4171 = vunpack.c.h.b16 %v4040
        %v4172 = vunpack.c.l.b16 %v4041
        %v4173 = vunpack.c.h.b16 %v4041
        %v4174 = vunpack.c.l.b16 %v4042
        %v4175 = vunpack.c.h.b16 %v4042
        %v4176 = vunpack.c.l.b16 %v4043
        %v4177 = vunpack.c.h.b16 %v4043
        %v4178 = vunpack.c.l.b16 %v4044
        %v4179 = vunpack.c.h.b16 %v4044
        %v4180 = vunpack.c.l.b16 %v4045
        %v4181 = vunpack.c.h.b16 %v4045
        %v4182 = vunpack.c.l.b16 %v4046
        %v4183 = vunpack.c.h.b16 %v4046
        %v4184 = vunpack.c.l.b16 %v4047
        %v4185 = vunpack.c.h.b16 %v4047
        %v4186 = vunpack.c.l.b16 %v4048
        %v4187 = vunpack.c.h.b16 %v4048
        %v4188 = vunpack.c.l.b16 %v4049
        %v4189 = vunpack.c.h.b16 %v4049
        %v4190 = vunpack.c.l.b16 %v4050
        %v4191 = vunpack.c.h.b16 %v4050
        %v4192 = vunpack.c.l.b16 %v4051
        %v4193 = vunpack.c.h.b16 %v4051
        %v4194 = vunpack.c.l.b16 %v4052
        %v4195 = vunpack.c.h.b16 %v4052
        %v4196 = vunpack.c.l.b16 %v4053
        %v4197 = vunpack.c.h.b16 %v4053
        %v4198 = vunpack.c.l.b16 %v4054
        %v4199 = vunpack.c.h.b16 %v4054
        %v4200 = vunpack.c.l.b16 %v4055
        %v4201 = vunpack.c.h.b16 %v4055
        %v4202 = vunpack.c.l.b16 %v4056
        %v4203 = vunpack.c.h.b16 %v4056
        %v4204 = vunpack.c.l.b16 %v4057
        %v4205 = vunpack.c.h.b16 %v4057
        %v4206 = vunpack.c.l.b16 %v4058
        %v4207 = vunpack.c.h.b16 %v4058
        %v4208 = vunpack.c.l.b16 %v4059
        %v4209 = vunpack.c.h.b16 %v4059
        %v4210 = vunpack.c.l.b16 %v4060
        %v4211 = vunpack.c.h.b16 %v4060
        %v4212 = vunpack.c.l.b16 %v4061
        %v4213 = vunpack.c.h.b16 %v4061
        %v4214 = vunpack.c.l.b16 %v4062
        %v4215 = vunpack.c.h.b16 %v4062
        %v4216 = vunpack.c.l.b16 %v4063
        %v4217 = vunpack.c.h.b16 %v4063
        %v4218 = vunpack.c.l.b16 %v4064
        %v4219 = vunpack.c.h.b16 %v4064
        %v4220 = vunpack.c.l.b16 %v4065
        %v4221 = vunpack.c.h.b16 %v4065
        %v4222 = vunpack.c.l.b16 %v4066
        %v4223 = vunpack.c.h.b16 %v4066
        %v4224 = vunpack.c.l.b16 %v4067
        %v4225 = vunpack.c.h.b16 %v4067
        %v4226 = vunpack.c.l.b16 %v4068
        %v4227 = vunpack.c.h.b16 %v4068
        %v4228 = vunpack.c.l.b16 %v4069
        %v4229 = vunpack.c.h.b16 %v4069
        %v4230 = vunpack.c.l.b16 %v4070
        %v4231 = vunpack.c.h.b16 %v4070
        %v4232 = vunpack.c.l.b16 %v4071
        %v4233 = vunpack.c.h.b16 %v4071
        %v4234 = vunpack.c.l.b16 %v4072
        %v4235 = vunpack.c.h.b16 %v4072
        %v4236 = vunpack.c.l.b16 %v4073
        %v4237 = vunpack.c.h.b16 %v4073
        %v4238 = vunpack.c.l.b16 %v4074
        %v4239 = vunpack.c.h.b16 %v4074
        %v4240 = vunpack.c.l.b16 %v4075
        %v4241 = vunpack.c.h.b16 %v4075
        %v4242 = vunpack.c.l.b16 %v4076
        %v4243 = vunpack.c.h.b16 %v4076
        %v4244 = vunpack.c.l.b16 %v4077
        %v4245 = vunpack.c.h.b16 %v4077
        %v4246 = vunpack.c.l.b16 %v4078
        %v4247 = vunpack.c.h.b16 %v4078
        %v4248 = vunpack.c.l.b16 %v4079
        %v4249 = vunpack.c.h.b16 %v4079
        %v4250 = vunpack.c.l.b16 %v4080
        %v4251 = vunpack.c.h.b16 %v4080
        %v4252 = vunpack.c.l.b16 %v4081
        %v4253 = vunpack.c.h.b16 %v4081
        %v4254 = vunpack.c.l.b16 %v4082
        %v4255 = vunpack.c.h.b16 %v4082
        %v4256 = vunpack.c.l.b16 %v4083
        %v4257 = vunpack.c.h.b16 %v4083
        %v4258 = vunpack.c.l.b16 %v4084
        %v4259 = vunpack.c.h.b16 %v4084
        %v4260 = vunpack.c.l.b16 %v4085
        %v4261 = vunpack.c.h.b16 %v4085
        %v4262 = vunpack.c.l.b16 %v4086
        %v4263 = vunpack.c.h.b16 %v4086
        %v4264 = vunpack.c.l.b16 %v4087
        %v4265 = vunpack.c.h.b16 %v4087
        %v4266 = vunpack.c.l.b16 %v4088
        %v4267 = vunpack.c.h.b16 %v4088
        %v4268 = vunpack.c.l.b16 %v4089
        %v4269 = vunpack.c.h.b16 %v4089
        %v4270 = vunpack.c.l.b16 %v4090
        %v4271 = vunpack.c.h.b16 %v4090
        %v4272 = vunpack.c.l.b16 %v4091
        %v4273 = vunpack.c.h.b16 %v4091
        %v4274 = vunpack.c.l.b16 %v4092
        %v4275 = vunpack.c.h.b16 %v4092
        %v4276 = vunpack.c.l.b16 %v4093
        %v4277 = vunpack.c.h.b16 %v4093
        %v4278 = vunpack.c.l.b16 %v4094
        %v4279 = vunpack.c.h.b16 %v4094
        %v4280 = vunpack.c.l.b16 %v4095
        %v4281 = vunpack.c.h.b16 %v4095
        %v4282 = vunpack.c.l.b16 %v4096
        %v4283 = vunpack.c.h.b16 %v4096
        %v4284 = vunpack.c.l.b16 %v4097
        %v4285 = vunpack.c.h.b16 %v4097
        %v4286 = vunpack.c.l.b16 %v4098
        %v4287 = vunpack.c.h.b16 %v4098
        %v4288 = vunpack.c.l.b16 %v4099
        %v4289 = vunpack.c.h.b16 %v4099
        %v4290 = vunpack.c.l.b16 %v4100
        %v4291 = vunpack.c.h.b16 %v4100
        %v4292 = vunpack.c.l.b16 %v4101
        %v4293 = vunpack.c.h.b16 %v4101
        %v4294 = vpack.c.b16 %v4168, %v4166
        %v4295 = vpack.c.b16 %v4169, %v4167
        %v4296 = vpack.c.b16 %v4172, %v4170
        %v4297 = vpack.c.b16 %v4173, %v4171
        %v4298 = vpack.c.b16 %v4176, %v4174
        %v4299 = vpack.c.b16 %v4177, %v4175
        %v4300 = vpack.c.b16 %v4180, %v4178
        %v4301 = vpack.c.b16 %v4181, %v4179
        %v4302 = vpack.c.b16 %v4184, %v4182
        %v4303 = vpack.c.b16 %v4185, %v4183
        %v4304 = vpack.c.b16 %v4188, %v4186
        %v4305 = vpack.c.b16 %v4189, %v4187
        %v4306 = vpack.c.b16 %v4192, %v4190
        %v4307 = vpack.c.b16 %v4193, %v4191
        %v4308 = vpack.c.b16 %v4196, %v4194
        %v4309 = vpack.c.b16 %v4197, %v4195
        %v4310 = vpack.c.b16 %v4200, %v4198
        %v4311 = vpack.c.b16 %v4201, %v4199
        %v4312 = vpack.c.b16 %v4204, %v4202
        %v4313 = vpack.c.b16 %v4205, %v4203
        %v4314 = vpack.c.b16 %v4208, %v4206
        %v4315 = vpack.c.b16 %v4209, %v4207
        %v4316 = vpack.c.b16 %v4212, %v4210
        %v4317 = vpack.c.b16 %v4213, %v4211
        %v4318 = vpack.c.b16 %v4216, %v4214
        %v4319 = vpack.c.b16 %v4217, %v4215
        %v4320 = vpack.c.b16 %v4220, %v4218
        %v4321 = vpack.c.b16 %v4221, %v4219
        %v4322 = vpack.c.b16 %v4224, %v4222
        %v4323 = vpack.c.b16 %v4225, %v4223
        %v4324 = vpack.c.b16 %v4228, %v4226
        %v4325 = vpack.c.b16 %v4229, %v4227
        %v4326 = vpack.c.b16 %v4232, %v4230
        %v4327 = vpack.c.b16 %v4233, %v4231
        %v4328 = vpack.c.b16 %v4236, %v4234
        %v4329 = vpack.c.b16 %v4237, %v4235
        %v4330 = vpack.c.b16 %v4240, %v4238
        %v4331 = vpack.c.b16 %v4241, %v4239
        %v4332 = vpack.c.b16 %v4244, %v4242
        %v4333 = vpack.c.b16 %v4245, %v4243
        %v4334 = vpack.c.b16 %v4248, %v4246
        %v4335 = vpack.c.b16 %v4249, %v4247
        %v4336 = vpack.c.b16 %v4252, %v4250
        %v4337 = vpack.c.b16 %v4253, %v4251
        %v4338 = vpack.c.b16 %v4256, %v4254
        %v4339 = vpack.c.b16 %v4257, %v4255
        %v4340 = vpack.c.b16 %v4260, %v4258
        %v4341 = vpack.c.b16 %v4261, %v4259
        %v4342 = vpack.c.b16 %v4264, %v4262
        %v4343 = vpack.c.b16 %v4265, %v4263
        %v4344 = vpack.c.b16 %v4268, %v4266
        %v4345 = vpack.c.b16 %v4269, %v4267
        %v4346 = vpack.c.b16 %v4272, %v4270
        %v4347 = vpack.c.b16 %v4273, %v4271
        %v4348 = vpack.c.b16 %v4276, %v4274
        %v4349 = vpack.c.b16 %v4277, %v4275
        %v4350 = vpack.c.b16 %v4280, %v4278
        %v4351 = vpack.c.b16 %v4281, %v4279
        %v4352 = vpack.c.b16 %v4284, %v4282
        %v4353 = vpack.c.b16 %v4285, %v4283
        %v4354 = vpack.c.b16 %v4288, %v4286
        %v4355 = vpack.c.b16 %v4289, %v4287
        %v4356 = vpack.c.b16 %v4292, %v4290
        %v4357 = vpack.c.b16 %v4293, %v4291
        %4422 = vmatprep.subr.bf16.mxu0 %v4295
        %4423 = vmatpush1.bf16.msra.mxu0 %v4294
        %4424 = vmatprep.subr.bf16.mxu0 %v4297
        %4425 = vmatpush1.bf16.msra.mxu0 %v4296
        %4426 = vmatprep.subr.bf16.mxu0 %v4299
        %4427 = vmatpush1.bf16.msra.mxu0 %v4298
        %4428 = vmatprep.subr.bf16.mxu0 %v4301
        %4429 = vmatpush1.bf16.msra.mxu0 %v4300
        %4430 = vmatprep.subr.bf16.mxu0 %v4303
        %4431 = vmatpush1.bf16.msra.mxu0 %v4302
        %4432 = vmatprep.subr.bf16.mxu0 %v4305
        %4433 = vmatpush1.bf16.msra.mxu0 %v4304
        %4434 = vmatprep.subr.bf16.mxu0 %v4307
        %4435 = vmatpush1.bf16.msra.mxu0 %v4306
        %4436 = vmatprep.subr.bf16.mxu0 %v4309
        %4437 = vmatpush1.bf16.msra.mxu0 %v4308
        %4438 = vmatprep.subr.bf16.mxu0 %v4311
        %4439 = vmatpush1.bf16.msra.mxu0 %v4310
        %4440 = vmatprep.subr.bf16.mxu0 %v4313
        %4441 = vmatpush1.bf16.msra.mxu0 %v4312
        %4442 = vmatprep.subr.bf16.mxu0 %v4315
        %4443 = vmatpush1.bf16.msra.mxu0 %v4314
        %4444 = vmatprep.subr.bf16.mxu0 %v4317
        %4445 = vmatpush1.bf16.msra.mxu0 %v4316
        %4446 = vmatprep.subr.bf16.mxu0 %v4319
        %4447 = vmatpush1.bf16.msra.mxu0 %v4318
        %4448 = vmatprep.subr.bf16.mxu0 %v4321
        %4449 = vmatpush1.bf16.msra.mxu0 %v4320
        %4450 = vmatprep.subr.bf16.mxu0 %v4323
        %4451 = vmatpush1.bf16.msra.mxu0 %v4322
        %4452 = vmatprep.subr.bf16.mxu0 %v4325
        %4453 = vmatpush1.bf16.msra.mxu0 %v4324
        %4454 = vmatprep.mubr.bf16.mxu0 %v4031
        %4455 = vmatmul.mubr.bf16.gmra.mrb[0].mxu0 %v4030
        %v4456 = vpop.f32.mrb[0].mxu0
        %v4457 = vadd.f32 0.0, %v4456
        %v4458 = vpop.f32.mrb[0].mxu0
        %v4459 = vadd.f32 0.0, %v4458
        %v4460 = vpop.f32.mrb[0].mxu0
        %v4461 = vadd.f32 0.0, %v4460
        %v4462 = vpop.f32.mrb[0].mxu0
        %v4463 = vadd.f32 0.0, %v4462
        %4464 = vmatprep.mubr.bf16.mxu0 %v4035
        %4465 = vmatmul.mubr.bf16.gmra.mrb[0].mxu0 %v4034
        %v4466 = vpop.f32.mrb[0].mxu0
        %v4467 = vadd.f32 0.0, %v4466
        %v4468 = vpop.f32.mrb[0].mxu0
        %v4469 = vadd.f32 0.0, %v4468
        %v4470 = vpop.f32.mrb[0].mxu0
        %v4471 = vadd.f32 0.0, %v4470
        %v4472 = vpop.f32.mrb[0].mxu0
        %v4473 = vadd.f32 0.0, %v4472
        %4474 = vdwg.mxu0
        %4475 = vmatprep.subr.bf16.mxu0 %v4327
        %4476 = vmatpush1.bf16.msra.mxu0 %v4326
        %4477 = vmatprep.subr.bf16.mxu0 %v4329
        %4478 = vmatpush1.bf16.msra.mxu0 %v4328
        %4479 = vmatprep.subr.bf16.mxu0 %v4331
        %4480 = vmatpush1.bf16.msra.mxu0 %v4330
        %4481 = vmatprep.subr.bf16.mxu0 %v4333
        %4482 = vmatpush1.bf16.msra.mxu0 %v4332
        %4483 = vmatprep.subr.bf16.mxu0 %v4335
        %4484 = vmatpush1.bf16.msra.mxu0 %v4334
        %4485 = vmatprep.subr.bf16.mxu0 %v4337
        %4486 = vmatpush1.bf16.msra.mxu0 %v4336
        %4487 = vmatprep.subr.bf16.mxu0 %v4339
        %4488 = vmatpush1.bf16.msra.mxu0 %v4338
        %4489 = vmatprep.subr.bf16.mxu0 %v4341
        %4490 = vmatpush1.bf16.msra.mxu0 %v4340
        %4491 = vmatprep.subr.bf16.mxu0 %v4343
        %4492 = vmatpush1.bf16.msra.mxu0 %v4342
        %4493 = vmatprep.subr.bf16.mxu0 %v4345
        %4494 = vmatpush1.bf16.msra.mxu0 %v4344
        %4495 = vmatprep.subr.bf16.mxu0 %v4347
        %4496 = vmatpush1.bf16.msra.mxu0 %v4346
        %4497 = vmatprep.subr.bf16.mxu0 %v4349
        %4498 = vmatpush1.bf16.msra.mxu0 %v4348
        %4499 = vmatprep.subr.bf16.mxu0 %v4351
        %4500 = vmatpush1.bf16.msra.mxu0 %v4350
        %4501 = vmatprep.subr.bf16.mxu0 %v4353
        %4502 = vmatpush1.bf16.msra.mxu0 %v4352
        %4503 = vmatprep.subr.bf16.mxu0 %v4355
        %4504 = vmatpush1.bf16.msra.mxu0 %v4354
        %4505 = vmatprep.subr.bf16.mxu0 %v4357
        %4506 = vmatpush1.bf16.msra.mxu0 %v4356
        %4507 = vmatprep.mubr.bf16.mxu0 %v4033
        %4508 = vmatmul.mubr.bf16.gmra.mrb[0].mxu0 %v4032
        %v4509 = vpop.f32.mrb[0].mxu0
        %v4510 = vadd.f32 %v4457, %v4509
        %v4511 = vpop.f32.mrb[0].mxu0
        %v4512 = vadd.f32 %v4459, %v4511
        %v4513 = vpop.f32.mrb[0].mxu0
        %v4514 = vadd.f32 %v4461, %v4513
        %v4515 = vpop.f32.mrb[0].mxu0
        %v4516 = vadd.f32 %v4463, %v4515
        %4517 = vmatprep.mubr.bf16.mxu0 %v4037
        %4518 = vmatmul.mubr.bf16.gmra.mrb[0].mxu0 %v4036
        %v4519 = vpop.f32.mrb[0].mxu0
        %v4520 = vadd.f32 %v4467, %v4519
        %v4521 = vpop.f32.mrb[0].mxu0
        %v4522 = vadd.f32 %v4469, %v4521
        %v4523 = vpop.f32.mrb[0].mxu0
        %v4524 = vadd.f32 %v4471, %v4523
        %v4525 = vpop.f32.mrb[0].mxu0
        %v4526 = vadd.f32 %v4473, %v4525
        %4527 = vdwg.mxu0
        %v4528 = vadd.f32 %v2850, %v4510
        %v4529 = vadd.f32 %v2851, %v4512
        %v4530 = vadd.f32 %v2852, %v4514
        %v4531 = vadd.f32 %v2853, %v4516
        %v4532 = vadd.f32 %v2854, %v4520
        %v4533 = vadd.f32 %v2855, %v4522
        %v4534 = vadd.f32 %v2856, %v4524
        %v4535 = vadd.f32 %v2857, %v4526
        %4536 = vst [vmem:[#allocation2] sm:$0xff] %v4528
        %4537 = vst [vmem:[#allocation2 + $0x8] sm:$0xff] %v4529
        %4538 = vst [vmem:[#allocation2 + $0x10] sm:$0xff] %v4530
        %4539 = vst [vmem:[#allocation2 + $0x18] sm:$0xff] %v4531
        %4540 = vst [vmem:[#allocation2 + $0x20] sm:$0xff] %v4532
        %4541 = vst [vmem:[#allocation2 + $0x28] sm:$0xff] %v4533
        %4542 = vst [vmem:[#allocation2 + $0x30] sm:$0xff] %v4534
        %4543 = vst [vmem:[#allocation2 + $0x38] sm:$0xff] %v4535
        %p4544 = scmp.eq.s32.totalorder %s31, 1
        // Predicated region
        $region113: #{tpu_custom_call.1} parent=63 // pred_check
          %p4545 = pneg %p4544
        $region114: #{tpu_custom_call.1} parent=63 // pred_check_branch
          %4547 = sbr.rel (%p4545) target = $region116
        $region115: #{tpu_custom_call.1} parent=63 // pred_region
          %v4548 = vld [vmem:[#allocation13] sm:$0x3]
          %s4549 = sld [smem:[#allocation6]]
          %s4550 = ssub.s32 %s4549, 1
          %s4551 = sshra.s32 %s4550, 3
          %s4552 = sand.u32 %s4550, 7
          %s4553 = sshra.s32 %s4550, 3
          %s4554 = sand.u32 %s4550, 7
          %s4555 = smul.u32 %s4551, 2
          %s4556 = smul.u32 %s4555, 8
          %s4557 = sadd.s32 %s4556, %s4554
          %s4558 = scalar_lea.vmem [#allocation2], %s4557
          %v4559 = vld [vmem:[%s4558] ss:$8 sm:$0x3]
          %v4560 = vmul.f32 %v4559, %v4559
          %v4562 = vlaneseq
          %v4563 = vshrl.u32 %v4562, 7
          %v4564 = vsub.s32 0, %v4563
          %v4565 = vrot.slane %v4560, %v4564
          %v4566 = vlaneseq
          %v4567 = vshrl.u32 %v4566, 7
          %v4568 = vsub.s32 1, %v4567
          %v4569 = vrot.slane %v4560, %v4568
          %vm4572 = vcmask 1040384
          %v4573 = vsel %vm4572, %v4565, 0.0
          %v4574 = vsel %vm4572, %v4569, 0.0
          %v4575 = vadd.f32 %v4573, %v4574
          %4576 = vadd.xlane.f32.xlu0 %v4575
          %v4577 = vpop.xlane.xlu0 %4576
          %v4578 = vmul.f32 %v4577, %v749
          %v4579 = vadd.f32 %v4578, 1e-06
          %v4580 = vrsqrt.pop %v4579
          %v4582 = vlaneseq
          %v4583 = vshrl.u32 %v4582, 7
          %v4584 = vsub.s32 0, %v4583
          %v4585 = vrot.slane %v4580, %v4584
          %v4587 = vmul.f32 %v4559, %v4585
          %v4588 = vmul.f32 %v4587, %v4548
          %v4589 = vmul.f32 %v4588, %v4588
          %v4591 = vlaneseq
          %v4592 = vshrl.u32 %v4591, 7
          %v4593 = vsub.s32 0, %v4592
          %v4594 = vrot.slane %v4589, %v4593
          %v4595 = vlaneseq
          %v4596 = vshrl.u32 %v4595, 7
          %v4597 = vsub.s32 1, %v4596
          %v4598 = vrot.slane %v4589, %v4597
          %v4601 = vsel %vm4572, %v4594, 0.0
          %v4602 = vsel %vm4572, %v4598, 0.0
          %v4603 = vadd.f32 %v4601, %v4602
          %4604 = vadd.xlane.f32.xlu0 %v4603
          %v4605 = vpop.xlane.xlu0 %4604
          %v4606 = vmax.f32 %v4605, 1e-24
          %v4607 = vrsqrt.pop %v4606
          %v4609 = vlaneseq
          %v4610 = vshrl.u32 %v4609, 7
          %v4611 = vsub.s32 0, %v4610
          %v4612 = vrot.slane %v4607, %v4611
          %v4614 = vmul.f32 %v4588, %v4612
          %v4615 = vlaneseq
          %vm4616 = vcmp.ge.s32.totalorder %v4615, 0
          %vm4617 = vcmp.lt.s32.totalorder %v4615, 256
          %vm4618 = vmand %vm4616, %vm4617
          %4619 = vst.msk [vmem:[#allocation22] ss:$2 sm:$0x3] %vm4618, %v4614
          %s4620 = sld [smem:[#allocation6 + $0x1]]
          %s4621 = sadd.s32 %s4620, 15
          %s4622 = sshra.s32 %s4621, 3
          %s4623 = sand.u32 %s4621, 7
          %s4624 = sshra.s32 %s4621, 3
          %s4625 = sand.u32 %s4621, 7
          %s4626 = smul.u32 %s4622, 2
          %s4627 = smul.u32 %s4626, 8
          %s4628 = sadd.s32 %s4627, %s4625
          %s4629 = scalar_lea.vmem [#allocation2], %s4628
          %v4630 = vld [vmem:[%s4629] ss:$8 sm:$0x3]
          %v4631 = vmul.f32 %v4630, %v4630
          %v4633 = vlaneseq
          %v4634 = vshrl.u32 %v4633, 7
          %v4635 = vsub.s32 0, %v4634
          %v4636 = vrot.slane %v4631, %v4635
          %v4637 = vlaneseq
          %v4638 = vshrl.u32 %v4637, 7
          %v4639 = vsub.s32 1, %v4638
          %v4640 = vrot.slane %v4631, %v4639
          %v4643 = vsel %vm4572, %v4636, 0.0
          %v4644 = vsel %vm4572, %v4640, 0.0
          %v4645 = vadd.f32 %v4643, %v4644
          %4646 = vadd.xlane.f32.xlu0 %v4645
          %v4647 = vpop.xlane.xlu0 %4646
          %v4648 = vmul.f32 %v4647, %v749
          %v4649 = vadd.f32 %v4648, 1e-06
          %v4650 = vrsqrt.pop %v4649
          %v4652 = vlaneseq
          %v4653 = vshrl.u32 %v4652, 7
          %v4654 = vsub.s32 0, %v4653
          %v4655 = vrot.slane %v4650, %v4654
          %v4657 = vmul.f32 %v4630, %v4655
          %v4658 = vmul.f32 %v4657, %v4548
          %v4659 = vmul.f32 %v4658, %v4658
          %v4661 = vlaneseq
          %v4662 = vshrl.u32 %v4661, 7
          %v4663 = vsub.s32 0, %v4662
          %v4664 = vrot.slane %v4659, %v4663
          %v4665 = vlaneseq
          %v4666 = vshrl.u32 %v4665, 7
          %v4667 = vsub.s32 1, %v4666
          %v4668 = vrot.slane %v4659, %v4667
          %v4671 = vsel %vm4572, %v4664, 0.0
          %v4672 = vsel %vm4572, %v4668, 0.0
          %v4673 = vadd.f32 %v4671, %v4672
          %4674 = vadd.xlane.f32.xlu0 %v4673
          %v4675 = vpop.xlane.xlu0 %4674
          %v4676 = vmax.f32 %v4675, 1e-24
          %v4677 = vrsqrt.pop %v4676
          %v4679 = vlaneseq
          %v4680 = vshrl.u32 %v4679, 7
          %v4681 = vsub.s32 0, %v4680
          %v4682 = vrot.slane %v4677, %v4681
          %v4684 = vmul.f32 %v4658, %v4682
          %s4685 = scalar_lea.vmem [#allocation22], 1
          %4686 = vst.msk [vmem:[%s4685] ss:$2 sm:$0x3] %vm4618, %v4684
        $region116: #{tpu_custom_call.1} parent=63 // pred_fallthru
          _
        // Predicated region
        $region117: #{tpu_custom_call.1} parent=63 // pred_check
          %p4687 = pneg %p310
        $region118: #{tpu_custom_call.1} parent=63 // pred_check_branch
          %4689 = sbr.rel (%p4687) target = $region120
        $region119: #{tpu_custom_call.1} parent=63 // pred_region
          %s4691 = ssub.s32 64, 64
          %4692 = vsyncadd [#allocation9], %s4691
          %s4694 = sshll.u32 [#allocation22], 4
          %s4695 = int_to_ptr.vmem [resolvable:$true] %s4694
          %4697 = dma.vmem_to_hbm [thread:$0]  %s4695, 64, %s12, [#allocation9]
        $region120: #{tpu_custom_call.1} parent=63 // pred_fallthru
          _
        // Predicated region
        $region121: #{tpu_custom_call.1} parent=63 // pred_check
          %p4698 = pneg %p310
        $region122: #{tpu_custom_call.1} parent=63 // pred_check_branch
          %4700 = sbr.rel (%p4698) target = $region124
        $region123: #{tpu_custom_call.1} parent=63 // pred_region
          %4701 = dma.done [#allocation9], 64
        $region124: #{tpu_custom_call.1} parent=63 // pred_fallthru
          _
      $region64: #{tpu_custom_call.1} parent=5 // pred_fallthru
        _
      %p4702 = scmp.le.s32.totalorder 2, %s26
      // Predicated region
      $region125: #{tpu_custom_call.1} parent=5 // pred_check
        %p4703 = pneg %p4702
      $region126: #{tpu_custom_call.1} parent=5 // pred_check_branch
        %4705 = sbr.rel (%p4703) target = $region128
      $region127: #{tpu_custom_call.1} parent=5 // pred_region
        %s4706 = ssub.s32 %s26, 2
      $region128: #{tpu_custom_call.1} parent=5 // pred_fallthru
        _
    $region6: #{tpu_custom_call.1} parent=1 // loop_footer
      %s30 = sadd.s32 1, %s26
    $region7: #{tpu_custom_call.1} parent=1 // loop_footer_branch
      %25 = sbr.rel target = $region3
    $region8: #{tpu_custom_call.1} parent=1 // loop_exit
      _
    %4707 = vsyncpa [#allocation8], 1
    %s4708 = scalar_lea.sflag [#allocation8], 1
    %4709 = vsyncpa %s4708, 1
    %4710 = vsyncpa [#allocation11], 1
    %4711 = vsyncpa [#allocation14], 1
    %4712 = vsyncpa [#allocation9], 1
    %s4713 = scalar_lea.sflag [#allocation9], 1
    %4714 = vsyncpa %s4713, 1

</llo_original>
